<compile_context>
chip_gen: v7x
topology: tpu7x:2x2x1
jax: 0.10.0
libtpu: 0.0.40
codegen_flags: <defaults>
</compile_context>

<pallas_src>
import functools

import jax
import jax.numpy as jnp
from jax import lax
from jax.experimental import pallas as pl
from jax.experimental.pallas import tpu as pltpu


def _rk4_odeint_kernel(dts_ref,            # scalar-prefetch: [>=T-1] f32 in SMEM
                       y0_ref,             # [rb, F]
                       w1_ref, b1_ref,     # [F, H], [1, H]
                       w2_ref, b2_ref,     # [H, F], [1, F]
                       out_ref,            # [T, rb, F]  (full time axis, resident in VMEM)
                       *, matmul_dtype):
    rb = y0_ref.shape[0]
    H = w1_ref.shape[1]
    F = w2_ref.shape[1]
    T = out_ref.shape[0]

    # Hoist weight loads / bias broadcasts out of all RK4 stages (done once per kernel).
    w1 = w1_ref[...].astype(matmul_dtype)
    w2 = w2_ref[...].astype(matmul_dtype)
    b1 = jnp.broadcast_to(b1_ref[...].astype(jnp.float32), (rb, H))
    b2 = jnp.broadcast_to(b2_ref[...].astype(jnp.float32), (rb, F))

    def ode_f(y):
        # f(t, y) = tanh(y @ W1 + b1) @ W2 + b2   (autonomous MLP ODE func)
        h = jnp.tanh(
            jnp.dot(y.astype(matmul_dtype), w1, preferred_element_type=jnp.float32) + b1)
        return (jnp.dot(h.astype(matmul_dtype), w2, preferred_element_type=jnp.float32)
                + b2)

    # odeint returns y0 at the first time point.
    y0 = y0_ref[...].astype(jnp.float32)
    out_ref[0] = y0.astype(out_ref.dtype)

    def step(t, y):
        dt = dts_ref[t - 1]
        half_dt = 0.5 * dt
        k1 = ode_f(y)
        k2 = ode_f(y + half_dt * k1)
        k3 = ode_f(y + half_dt * k2)
        k4 = ode_f(y + dt * k3)
        y = y + (dt / 6.0) * (k1 + 2.0 * k2 + 2.0 * k3 + k4)
        out_ref[t] = y.astype(out_ref.dtype)
        return y

    # Full time loop inside the kernel; unroll short loops for scheduler visibility.
    lax.fori_loop(1, T, step, y0, unroll=(T <= 64))


def rk4_odeint_pallas(dts, y0, w1, b1, w2, b2, *, T,
                      row_block=None, matmul_dtype=jnp.float32):
    """Integrate the MLP ODE with fixed-step RK4 at every requested time point.

    dts: [>=max(T-1,1)] f32 step sizes, y0: [N, F] f32.  Returns [T, N, F] f32.
    """
    N, F = y0.shape
    H = w1.shape[1]

    if row_block is None:
        row_block = N                       # single kernel invocation at small N
    assert N % row_block == 0, "row_block must divide N"
    assert row_block == N or row_block % 8 == 0, "row_block must be a multiple of 8"
    grid_n = N // row_block

    grid_spec = pltpu.PrefetchScalarGridSpec(
        num_scalar_prefetch=1,
        grid=(grid_n,),
        in_specs=[
            pl.BlockSpec((row_block, F), lambda i, dts: (i, 0)),   # y0 row tile
            pl.BlockSpec((F, H), lambda i, dts: (0, 0)),           # W1
            pl.BlockSpec((1, H), lambda i, dts: (0, 0)),           # b1
            pl.BlockSpec((H, F), lambda i, dts: (0, 0)),           # W2
            pl.BlockSpec((1, F), lambda i, dts: (0, 0)),           # b2
        ],
        out_specs=pl.BlockSpec((T, row_block, F), lambda i, dts: (0, i, 0)),
    )

    return pl.pallas_call(
        functools.partial(_rk4_odeint_kernel, matmul_dtype=matmul_dtype),
        out_shape=jax.ShapeDtypeStruct((T, N, F), jnp.float32),
        grid_spec=grid_spec,
        compiler_params=pltpu.CompilerParams(
            # Row blocks are independent (time is sequential *inside* the kernel), so this
            # axis is safe to shard across v7x TensorCores when grid_n > 1.
            dimension_semantics=("parallel",),
        ),
    )(dts, y0, w1, b1, w2, b2)


def diffeq_solver_forward(first_point, time_steps_to_predict, params,
                          n_balls, augment_dim, row_block=None,
                          matmul_dtype=jnp.float32):
    """Mirrors DiffeqSolver.forward (graph=None path, times[0] == 0)."""
    n_traj_samples, n_traj, d = first_point.shape
    feature = d

    # first_point.view(-1, num_atoms, feature)
    fp_aug = first_point.reshape(-1, n_balls, feature)

    if augment_dim > 0:
        aug = jnp.zeros((fp_aug.shape[0], n_balls, augment_dim), fp_aug.dtype)
        fp_aug = jnp.concatenate([fp_aug, aug], axis=2)
        feature = feature + augment_dim

    # Flatten (batch, atoms) rows for the kernel:  y0 [N, F]
    N = fp_aug.shape[0] * n_balls
    y0 = fp_aug.reshape(N, feature).astype(jnp.float32)

    times = time_steps_to_predict.astype(jnp.float32)
    T = times.shape[0]
    dts = times[1:] - times[:-1]
    if T == 1:
        dts = jnp.zeros((1,), jnp.float32)   # unused; keeps the prefetch array non-empty

    w1, b1, w2, b2 = params
    pred = rk4_odeint_pallas(dts, y0, w1, b1, w2, b2, T=T,
                             row_block=row_block,
                             matmul_dtype=matmul_dtype)    # [T, N, F]

    # pred_y.view(T, -1, feature).permute(1,0,2).view(n_traj_samples, n_traj, -1, feature)
    pred_y = jnp.transpose(pred, (1, 0, 2))                # [N, T, F]
    pred_y = pred_y.reshape(n_traj_samples, n_traj, -1, feature)

    if augment_dim > 0:
        pred_y = pred_y[:, :, :, :-augment_dim]
    return pred_y


def _reference_forward(first_point, times, params, n_balls, augment_dim):
    """Pure-JAX RK4 reference (same math, no Pallas)."""
    n_s, n_t, d = first_point.shape
    fp = first_point.reshape(-1, n_balls, d)
    if augment_dim > 0:
        fp = jnp.concatenate(
            [fp, jnp.zeros((fp.shape[0], n_balls, augment_dim), fp.dtype)], axis=2)
    feature = d + augment_dim
    y0 = fp.reshape(-1, feature).astype(jnp.float32)
    w1, b1, w2, b2 = params

    def f(y):
        return jnp.tanh(y @ w1 + b1) @ w2 + b2

    def step(y, dt):
        k1 = f(y)
        k2 = f(y + 0.5 * dt * k1)
        k3 = f(y + 0.5 * dt * k2)
        k4 = f(y + dt * k3)
        y_new = y + (dt / 6.0) * (k1 + 2 * k2 + 2 * k3 + k4)
        return y_new, y_new

    dts = times[1:] - times[:-1]
    _, ys = jax.lax.scan(step, y0, dts)
    pred = jnp.concatenate([y0[None], ys], axis=0)         # [T, N, F]
    pred_y = jnp.transpose(pred, (1, 0, 2)).reshape(n_s, n_t, -1, feature)
    if augment_dim > 0:
        pred_y = pred_y[:, :, :, :-augment_dim]
    return pred_y


if __name__ == "__main__":
    # Small shapes consistent with the module:
    #   first_point: [n_sample, b*n_balls, d]
    n_sample, b, n_balls = 2, 2, 4
    d, augment_dim = 12, 4                   # feature after augment = 16
    feature = d + augment_dim
    hidden = 32
    T = 8

    key = jax.random.PRNGKey(0)
    k1, k2, k3, k4, k5 = jax.random.split(key, 5)

    first_point = jax.random.normal(k1, (n_sample, b * n_balls, d), jnp.float32)
    time_steps = jnp.linspace(0.0, 1.0, T, dtype=jnp.float32)   # times[0] == 0

    # Deterministic synthetic ode_func parameters (stand-in for the GNN).
    w1 = 0.1 * jax.random.normal(k2, (feature, hidden), jnp.float32)
    b1 = 0.1 * jax.random.normal(k3, (1, hidden), jnp.float32)
    w2 = 0.1 * jax.random.normal(k4, (hidden, feature), jnp.float32)
    b2 = 0.1 * jax.random.normal(k5, (1, feature), jnp.float32)
    params = (w1, b1, w2, b2)

    fwd = jax.jit(functools.partial(diffeq_solver_forward,
                                    n_balls=n_balls, augment_dim=augment_dim))
    out = fwd(first_point, time_steps, params)
    out = jax.block_until_ready(out)

    ref = _reference_forward(first_point, time_steps, params, n_balls, augment_dim)
    assert out.shape == (n_sample, b * n_balls, T, d), out.shape
    assert jnp.allclose(out, ref, rtol=1e-5, atol=1e-5), "mismatch vs JAX reference"

    print("KERNEL_OK")
</pallas_src>

<mosaic_0001>
module attributes {stable_mosaic.version = 11 : i64} {
  func.func @_rk4_odeint_kernel(%arg0: i32, %arg1: memref<7xf32, #tpu.memory_space<smem>>, %arg2: memref<16x16xf32, #tpu.memory_space<vmem>>, %arg3: memref<16x32xf32, #tpu.memory_space<vmem>>, %arg4: memref<1x32xf32, #tpu.memory_space<vmem>>, %arg5: memref<32x16xf32, #tpu.memory_space<vmem>>, %arg6: memref<1x16xf32, #tpu.memory_space<vmem>>, %arg7: memref<8x16x16xf32, #tpu.memory_space<vmem>>) attributes {dimension_semantics = [#tpu.dimension_semantics<parallel>], iteration_bounds = array<i64: 1>, scalar_prefetch = 1 : i64, scratch_operands = 0 : i64, tpu.core_type = #tpu.core_type<tc>, window_params = [{transform_indices = @transform_0, window_bounds = array<i64: 16, 16>}, {pipeline_mode = #tpu.pipeline_mode<synchronous>, transform_indices = @transform_1, window_bounds = array<i64: 16, 32>}, {pipeline_mode = #tpu.pipeline_mode<synchronous>, transform_indices = @transform_2, window_bounds = array<i64: 1, 32>}, {pipeline_mode = #tpu.pipeline_mode<synchronous>, transform_indices = @transform_3, window_bounds = array<i64: 32, 16>}, {pipeline_mode = #tpu.pipeline_mode<synchronous>, transform_indices = @transform_4, window_bounds = array<i64: 1, 16>}, {transform_indices = @transform_5, window_bounds = array<i64: 8, 16, 16>}]} {
    %c0 = arith.constant 0 : index
    %c0_0 = arith.constant 0 : index
    %0 = vector.load %arg3[%c0, %c0_0] : memref<16x32xf32, #tpu.memory_space<vmem>>, vector<16x32xf32>
    %c0_1 = arith.constant 0 : index
    %c0_2 = arith.constant 0 : index
    %1 = vector.load %arg5[%c0_1, %c0_2] : memref<32x16xf32, #tpu.memory_space<vmem>>, vector<32x16xf32>
    %c0_3 = arith.constant 0 : index
    %c0_4 = arith.constant 0 : index
    %2 = vector.load %arg4[%c0_3, %c0_4] : memref<1x32xf32, #tpu.memory_space<vmem>>, vector<1x32xf32>
    %3 = vector.shape_cast %2 : vector<1x32xf32> to vector<1x32xf32>
    %4 = vector.broadcast %3 : vector<1x32xf32> to vector<16x32xf32>
    %c0_5 = arith.constant 0 : index
    %c0_6 = arith.constant 0 : index
    %5 = vector.load %arg6[%c0_5, %c0_6] : memref<1x16xf32, #tpu.memory_space<vmem>>, vector<1x16xf32>
    %6 = vector.shape_cast %5 : vector<1x16xf32> to vector<1x16xf32>
    %7 = vector.broadcast %6 : vector<1x16xf32> to vector<16x16xf32>
    %c0_7 = arith.constant 0 : index
    %c0_8 = arith.constant 0 : index
    %8 = vector.load %arg2[%c0_7, %c0_8] : memref<16x16xf32, #tpu.memory_space<vmem>>, vector<16x16xf32>
    %c0_9 = arith.constant 0 : index
    %c0_10 = arith.constant 0 : index
    %c0_11 = arith.constant 0 : index
    %9 = vector.load %arg7[%c0_9, %c0_10, %c0_11] : memref<8x16x16xf32, #tpu.memory_space<vmem>>, vector<1x16x16xf32>
    %10 = vector.shape_cast %9 : vector<1x16x16xf32> to vector<16x16xf32>
    %11 = vector.shape_cast %8 : vector<16x16xf32> to vector<1x16x16xf32>
    tpu.vector_store %arg7[%c0_9, %c0_10, %c0_11], %11 {strides = array<i32>} : memref<8x16x16xf32, #tpu.memory_space<vmem>>, vector<1x16x16xf32>,
    %c1_i32 = arith.constant 1 : i32
    %c1_i32_12 = arith.constant 1 : i32
    %12 = arith.subi %c1_i32, %c1_i32_12 : i32
    %13 = arith.index_cast %12 : i32 to index
    %14 = memref.load %arg1[%13] : memref<7xf32, #tpu.memory_space<smem>>
    %cst = arith.constant 5.000000e-01 : f32
    %15 = arith.mulf %cst, %14 : f32
    %cst_13 = arith.constant dense<0.000000e+00> : vector<16x32xf32>
    %16 = tpu.matmul %8, %0, %cst_13 {dimension_numbers = #tpu.dot_dimension_numbers<[1], [0], [0], [1], [0, 0, 1, 1], [], []>} : vector<16x16xf32>, vector<16x32xf32>, vector<16x32xf32> -> vector<16x32xf32>
    %17 = arith.addf %16, %4 : vector<16x32xf32>
    %18 = math.tanh %17 : vector<16x32xf32>
    %cst_14 = arith.constant dense<0.000000e+00> : vector<16x16xf32>
    %19 = tpu.matmul %18, %1, %cst_14 {dimension_numbers = #tpu.dot_dimension_numbers<[1], [0], [0], [1], [0, 0, 1, 1], [], []>} : vector<16x32xf32>, vector<32x16xf32>, vector<16x16xf32> -> vector<16x16xf32>
    %20 = arith.addf %19, %7 : vector<16x16xf32>
    %21 = vector.broadcast %15 : f32 to vector<16x16xf32>
    %22 = arith.mulf %21, %20 : vector<16x16xf32>
    %23 = arith.addf %8, %22 : vector<16x16xf32>
    %cst_15 = arith.constant dense<0.000000e+00> : vector<16x32xf32>
    %24 = tpu.matmul %23, %0, %cst_15 {dimension_numbers = #tpu.dot_dimension_numbers<[1], [0], [0], [1], [0, 0, 1, 1], [], []>} : vector<16x16xf32>, vector<16x32xf32>, vector<16x32xf32> -> vector<16x32xf32>
    %25 = arith.addf %24, %4 : vector<16x32xf32>
    %26 = math.tanh %25 : vector<16x32xf32>
    %cst_16 = arith.constant dense<0.000000e+00> : vector<16x16xf32>
    %27 = tpu.matmul %26, %1, %cst_16 {dimension_numbers = #tpu.dot_dimension_numbers<[1], [0], [0], [1], [0, 0, 1, 1], [], []>} : vector<16x32xf32>, vector<32x16xf32>, vector<16x16xf32> -> vector<16x16xf32>
    %28 = arith.addf %27, %7 : vector<16x16xf32>
    %29 = vector.broadcast %15 : f32 to vector<16x16xf32>
    %30 = arith.mulf %29, %28 : vector<16x16xf32>
    %31 = arith.addf %8, %30 : vector<16x16xf32>
    %cst_17 = arith.constant dense<0.000000e+00> : vector<16x32xf32>
    %32 = tpu.matmul %31, %0, %cst_17 {dimension_numbers = #tpu.dot_dimension_numbers<[1], [0], [0], [1], [0, 0, 1, 1], [], []>} : vector<16x16xf32>, vector<16x32xf32>, vector<16x32xf32> -> vector<16x32xf32>
    %33 = arith.addf %32, %4 : vector<16x32xf32>
    %34 = math.tanh %33 : vector<16x32xf32>
    %cst_18 = arith.constant dense<0.000000e+00> : vector<16x16xf32>
    %35 = tpu.matmul %34, %1, %cst_18 {dimension_numbers = #tpu.dot_dimension_numbers<[1], [0], [0], [1], [0, 0, 1, 1], [], []>} : vector<16x32xf32>, vector<32x16xf32>, vector<16x16xf32> -> vector<16x16xf32>
    %36 = arith.addf %35, %7 : vector<16x16xf32>
    %37 = vector.broadcast %14 : f32 to vector<16x16xf32>
    %38 = arith.mulf %37, %36 : vector<16x16xf32>
    %39 = arith.addf %8, %38 : vector<16x16xf32>
    %cst_19 = arith.constant dense<0.000000e+00> : vector<16x32xf32>
    %40 = tpu.matmul %39, %0, %cst_19 {dimension_numbers = #tpu.dot_dimension_numbers<[1], [0], [0], [1], [0, 0, 1, 1], [], []>} : vector<16x16xf32>, vector<16x32xf32>, vector<16x32xf32> -> vector<16x32xf32>
    %41 = arith.addf %40, %4 : vector<16x32xf32>
    %42 = math.tanh %41 : vector<16x32xf32>
    %cst_20 = arith.constant dense<0.000000e+00> : vector<16x16xf32>
    %43 = tpu.matmul %42, %1, %cst_20 {dimension_numbers = #tpu.dot_dimension_numbers<[1], [0], [0], [1], [0, 0, 1, 1], [], []>} : vector<16x32xf32>, vector<32x16xf32>, vector<16x16xf32> -> vector<16x16xf32>
    %44 = arith.addf %43, %7 : vector<16x16xf32>
    %cst_21 = arith.constant 6.000000e+00 : f32
    %45 = arith.divf %14, %cst_21 : f32
    %cst_22 = arith.constant 2.000000e+00 : f32
    %46 = vector.broadcast %cst_22 : f32 to vector<16x16xf32>
    %47 = arith.mulf %46, %28 : vector<16x16xf32>
    %48 = arith.addf %20, %47 : vector<16x16xf32>
    %cst_23 = arith.constant 2.000000e+00 : f32
    %49 = vector.broadcast %cst_23 : f32 to vector<16x16xf32>
    %50 = arith.mulf %49, %36 : vector<16x16xf32>
    %51 = arith.addf %48, %50 : vector<16x16xf32>
    %52 = arith.addf %51, %44 : vector<16x16xf32>
    %53 = vector.broadcast %45 : f32 to vector<16x16xf32>
    %54 = arith.mulf %53, %52 : vector<16x16xf32>
    %55 = arith.addf %8, %54 : vector<16x16xf32>
    %56 = arith.index_cast %c1_i32 : i32 to index
    %c0_24 = arith.constant 0 : index
    %c0_25 = arith.constant 0 : index
    %57 = vector.load %arg7[%56, %c0_24, %c0_25] : memref<8x16x16xf32, #tpu.memory_space<vmem>>, vector<1x16x16xf32>
    %58 = vector.shape_cast %57 : vector<1x16x16xf32> to vector<16x16xf32>
    %59 = vector.shape_cast %55 : vector<16x16xf32> to vector<1x16x16xf32>
    tpu.vector_store %arg7[%56, %c0_24, %c0_25], %59 {strides = array<i32>} : memref<8x16x16xf32, #tpu.memory_space<vmem>>, vector<1x16x16xf32>,
    %c2_i32 = arith.constant 2 : i32
    %c1_i32_26 = arith.constant 1 : i32
    %60 = arith.subi %c2_i32, %c1_i32_26 : i32
    %61 = arith.index_cast %60 : i32 to index
    %62 = memref.load %arg1[%61] : memref<7xf32, #tpu.memory_space<smem>>
    %cst_27 = arith.constant 5.000000e-01 : f32
    %63 = arith.mulf %cst_27, %62 : f32
    %cst_28 = arith.constant dense<0.000000e+00> : vector<16x32xf32>
    %64 = tpu.matmul %55, %0, %cst_28 {dimension_numbers = #tpu.dot_dimension_numbers<[1], [0], [0], [1], [0, 0, 1, 1], [], []>} : vector<16x16xf32>, vector<16x32xf32>, vector<16x32xf32> -> vector<16x32xf32>
    %65 = arith.addf %64, %4 : vector<16x32xf32>
    %66 = math.tanh %65 : vector<16x32xf32>
    %cst_29 = arith.constant dense<0.000000e+00> : vector<16x16xf32>
    %67 = tpu.matmul %66, %1, %cst_29 {dimension_numbers = #tpu.dot_dimension_numbers<[1], [0], [0], [1], [0, 0, 1, 1], [], []>} : vector<16x32xf32>, vector<32x16xf32>, vector<16x16xf32> -> vector<16x16xf32>
    %68 = arith.addf %67, %7 : vector<16x16xf32>
    %69 = vector.broadcast %63 : f32 to vector<16x16xf32>
    %70 = arith.mulf %69, %68 : vector<16x16xf32>
    %71 = arith.addf %55, %70 : vector<16x16xf32>
    %cst_30 = arith.constant dense<0.000000e+00> : vector<16x32xf32>
    %72 = tpu.matmul %71, %0, %cst_30 {dimension_numbers = #tpu.dot_dimension_numbers<[1], [0], [0], [1], [0, 0, 1, 1], [], []>} : vector<16x16xf32>, vector<16x32xf32>, vector<16x32xf32> -> vector<16x32xf32>
    %73 = arith.addf %72, %4 : vector<16x32xf32>
    %74 = math.tanh %73 : vector<16x32xf32>
    %cst_31 = arith.constant dense<0.000000e+00> : vector<16x16xf32>
    %75 = tpu.matmul %74, %1, %cst_31 {dimension_numbers = #tpu.dot_dimension_numbers<[1], [0], [0], [1], [0, 0, 1, 1], [], []>} : vector<16x32xf32>, vector<32x16xf32>, vector<16x16xf32> -> vector<16x16xf32>
    %76 = arith.addf %75, %7 : vector<16x16xf32>
    %77 = vector.broadcast %63 : f32 to vector<16x16xf32>
    %78 = arith.mulf %77, %76 : vector<16x16xf32>
    %79 = arith.addf %55, %78 : vector<16x16xf32>
    %cst_32 = arith.constant dense<0.000000e+00> : vector<16x32xf32>
    %80 = tpu.matmul %79, %0, %cst_32 {dimension_numbers = #tpu.dot_dimension_numbers<[1], [0], [0], [1], [0, 0, 1, 1], [], []>} : vector<16x16xf32>, vector<16x32xf32>, vector<16x32xf32> -> vector<16x32xf32>
    %81 = arith.addf %80, %4 : vector<16x32xf32>
    %82 = math.tanh %81 : vector<16x32xf32>
    %cst_33 = arith.constant dense<0.000000e+00> : vector<16x16xf32>
    %83 = tpu.matmul %82, %1, %cst_33 {dimension_numbers = #tpu.dot_dimension_numbers<[1], [0], [0], [1], [0, 0, 1, 1], [], []>} : vector<16x32xf32>, vector<32x16xf32>, vector<16x16xf32> -> vector<16x16xf32>
    %84 = arith.addf %83, %7 : vector<16x16xf32>
    %85 = vector.broadcast %62 : f32 to vector<16x16xf32>
    %86 = arith.mulf %85, %84 : vector<16x16xf32>
    %87 = arith.addf %55, %86 : vector<16x16xf32>
    %cst_34 = arith.constant dense<0.000000e+00> : vector<16x32xf32>
    %88 = tpu.matmul %87, %0, %cst_34 {dimension_numbers = #tpu.dot_dimension_numbers<[1], [0], [0], [1], [0, 0, 1, 1], [], []>} : vector<16x16xf32>, vector<16x32xf32>, vector<16x32xf32> -> vector<16x32xf32>
    %89 = arith.addf %88, %4 : vector<16x32xf32>
    %90 = math.tanh %89 : vector<16x32xf32>
    %cst_35 = arith.constant dense<0.000000e+00> : vector<16x16xf32>
    %91 = tpu.matmul %90, %1, %cst_35 {dimension_numbers = #tpu.dot_dimension_numbers<[1], [0], [0], [1], [0, 0, 1, 1], [], []>} : vector<16x32xf32>, vector<32x16xf32>, vector<16x16xf32> -> vector<16x16xf32>
    %92 = arith.addf %91, %7 : vector<16x16xf32>
    %cst_36 = arith.constant 6.000000e+00 : f32
    %93 = arith.divf %62, %cst_36 : f32
    %cst_37 = arith.constant 2.000000e+00 : f32
    %94 = vector.broadcast %cst_37 : f32 to vector<16x16xf32>
    %95 = arith.mulf %94, %76 : vector<16x16xf32>
    %96 = arith.addf %68, %95 : vector<16x16xf32>
    %cst_38 = arith.constant 2.000000e+00 : f32
    %97 = vector.broadcast %cst_38 : f32 to vector<16x16xf32>
    %98 = arith.mulf %97, %84 : vector<16x16xf32>
    %99 = arith.addf %96, %98 : vector<16x16xf32>
    %100 = arith.addf %99, %92 : vector<16x16xf32>
    %101 = vector.broadcast %93 : f32 to vector<16x16xf32>
    %102 = arith.mulf %101, %100 : vector<16x16xf32>
    %103 = arith.addf %55, %102 : vector<16x16xf32>
    %104 = arith.index_cast %c2_i32 : i32 to index
    %c0_39 = arith.constant 0 : index
    %c0_40 = arith.constant 0 : index
    %105 = vector.load %arg7[%104, %c0_39, %c0_40] : memref<8x16x16xf32, #tpu.memory_space<vmem>>, vector<1x16x16xf32>
    %106 = vector.shape_cast %105 : vector<1x16x16xf32> to vector<16x16xf32>
    %107 = vector.shape_cast %103 : vector<16x16xf32> to vector<1x16x16xf32>
    tpu.vector_store %arg7[%104, %c0_39, %c0_40], %107 {strides = array<i32>} : memref<8x16x16xf32, #tpu.memory_space<vmem>>, vector<1x16x16xf32>,
    %c3_i32 = arith.constant 3 : i32
    %c1_i32_41 = arith.constant 1 : i32
    %108 = arith.subi %c3_i32, %c1_i32_41 : i32
    %109 = arith.index_cast %108 : i32 to index
    %110 = memref.load %arg1[%109] : memref<7xf32, #tpu.memory_space<smem>>
    %cst_42 = arith.constant 5.000000e-01 : f32
    %111 = arith.mulf %cst_42, %110 : f32
    %cst_43 = arith.constant dense<0.000000e+00> : vector<16x32xf32>
    %112 = tpu.matmul %103, %0, %cst_43 {dimension_numbers = #tpu.dot_dimension_numbers<[1], [0], [0], [1], [0, 0, 1, 1], [], []>} : vector<16x16xf32>, vector<16x32xf32>, vector<16x32xf32> -> vector<16x32xf32>
    %113 = arith.addf %112, %4 : vector<16x32xf32>
    %114 = math.tanh %113 : vector<16x32xf32>
    %cst_44 = arith.constant dense<0.000000e+00> : vector<16x16xf32>
    %115 = tpu.matmul %114, %1, %cst_44 {dimension_numbers = #tpu.dot_dimension_numbers<[1], [0], [0], [1], [0, 0, 1, 1], [], []>} : vector<16x32xf32>, vector<32x16xf32>, vector<16x16xf32> -> vector<16x16xf32>
    %116 = arith.addf %115, %7 : vector<16x16xf32>
    %117 = vector.broadcast %111 : f32 to vector<16x16xf32>
    %118 = arith.mulf %117, %116 : vector<16x16xf32>
    %119 = arith.addf %103, %118 : vector<16x16xf32>
    %cst_45 = arith.constant dense<0.000000e+00> : vector<16x32xf32>
    %120 = tpu.matmul %119, %0, %cst_45 {dimension_numbers = #tpu.dot_dimension_numbers<[1], [0], [0], [1], [0, 0, 1, 1], [], []>} : vector<16x16xf32>, vector<16x32xf32>, vector<16x32xf32> -> vector<16x32xf32>
    %121 = arith.addf %120, %4 : vector<16x32xf32>
    %122 = math.tanh %121 : vector<16x32xf32>
    %cst_46 = arith.constant dense<0.000000e+00> : vector<16x16xf32>
    %123 = tpu.matmul %122, %1, %cst_46 {dimension_numbers = #tpu.dot_dimension_numbers<[1], [0], [0], [1], [0, 0, 1, 1], [], []>} : vector<16x32xf32>, vector<32x16xf32>, vector<16x16xf32> -> vector<16x16xf32>
    %124 = arith.addf %123, %7 : vector<16x16xf32>
    %125 = vector.broadcast %111 : f32 to vector<16x16xf32>
    %126 = arith.mulf %125, %124 : vector<16x16xf32>
    %127 = arith.addf %103, %126 : vector<16x16xf32>
    %cst_47 = arith.constant dense<0.000000e+00> : vector<16x32xf32>
    %128 = tpu.matmul %127, %0, %cst_47 {dimension_numbers = #tpu.dot_dimension_numbers<[1], [0], [0], [1], [0, 0, 1, 1], [], []>} : vector<16x16xf32>, vector<16x32xf32>, vector<16x32xf32> -> vector<16x32xf32>
    %129 = arith.addf %128, %4 : vector<16x32xf32>
    %130 = math.tanh %129 : vector<16x32xf32>
    %cst_48 = arith.constant dense<0.000000e+00> : vector<16x16xf32>
    %131 = tpu.matmul %130, %1, %cst_48 {dimension_numbers = #tpu.dot_dimension_numbers<[1], [0], [0], [1], [0, 0, 1, 1], [], []>} : vector<16x32xf32>, vector<32x16xf32>, vector<16x16xf32> -> vector<16x16xf32>
    %132 = arith.addf %131, %7 : vector<16x16xf32>
    %133 = vector.broadcast %110 : f32 to vector<16x16xf32>
    %134 = arith.mulf %133, %132 : vector<16x16xf32>
    %135 = arith.addf %103, %134 : vector<16x16xf32>
    %cst_49 = arith.constant dense<0.000000e+00> : vector<16x32xf32>
    %136 = tpu.matmul %135, %0, %cst_49 {dimension_numbers = #tpu.dot_dimension_numbers<[1], [0], [0], [1], [0, 0, 1, 1], [], []>} : vector<16x16xf32>, vector<16x32xf32>, vector<16x32xf32> -> vector<16x32xf32>
    %137 = arith.addf %136, %4 : vector<16x32xf32>
    %138 = math.tanh %137 : vector<16x32xf32>
    %cst_50 = arith.constant dense<0.000000e+00> : vector<16x16xf32>
    %139 = tpu.matmul %138, %1, %cst_50 {dimension_numbers = #tpu.dot_dimension_numbers<[1], [0], [0], [1], [0, 0, 1, 1], [], []>} : vector<16x32xf32>, vector<32x16xf32>, vector<16x16xf32> -> vector<16x16xf32>
    %140 = arith.addf %139, %7 : vector<16x16xf32>
    %cst_51 = arith.constant 6.000000e+00 : f32
    %141 = arith.divf %110, %cst_51 : f32
    %cst_52 = arith.constant 2.000000e+00 : f32
    %142 = vector.broadcast %cst_52 : f32 to vector<16x16xf32>
    %143 = arith.mulf %142, %124 : vector<16x16xf32>
    %144 = arith.addf %116, %143 : vector<16x16xf32>
    %cst_53 = arith.constant 2.000000e+00 : f32
    %145 = vector.broadcast %cst_53 : f32 to vector<16x16xf32>
    %146 = arith.mulf %145, %132 : vector<16x16xf32>
    %147 = arith.addf %144, %146 : vector<16x16xf32>
    %148 = arith.addf %147, %140 : vector<16x16xf32>
    %149 = vector.broadcast %141 : f32 to vector<16x16xf32>
    %150 = arith.mulf %149, %148 : vector<16x16xf32>
    %151 = arith.addf %103, %150 : vector<16x16xf32>
    %152 = arith.index_cast %c3_i32 : i32 to index
    %c0_54 = arith.constant 0 : index
    %c0_55 = arith.constant 0 : index
    %153 = vector.load %arg7[%152, %c0_54, %c0_55] : memref<8x16x16xf32, #tpu.memory_space<vmem>>, vector<1x16x16xf32>
    %154 = vector.shape_cast %153 : vector<1x16x16xf32> to vector<16x16xf32>
    %155 = vector.shape_cast %151 : vector<16x16xf32> to vector<1x16x16xf32>
    tpu.vector_store %arg7[%152, %c0_54, %c0_55], %155 {strides = array<i32>} : memref<8x16x16xf32, #tpu.memory_space<vmem>>, vector<1x16x16xf32>,
    %c4_i32 = arith.constant 4 : i32
    %c1_i32_56 = arith.constant 1 : i32
    %156 = arith.subi %c4_i32, %c1_i32_56 : i32
    %157 = arith.index_cast %156 : i32 to index
    %158 = memref.load %arg1[%157] : memref<7xf32, #tpu.memory_space<smem>>
    %cst_57 = arith.constant 5.000000e-01 : f32
    %159 = arith.mulf %cst_57, %158 : f32
    %cst_58 = arith.constant dense<0.000000e+00> : vector<16x32xf32>
    %160 = tpu.matmul %151, %0, %cst_58 {dimension_numbers = #tpu.dot_dimension_numbers<[1], [0], [0], [1], [0, 0, 1, 1], [], []>} : vector<16x16xf32>, vector<16x32xf32>, vector<16x32xf32> -> vector<16x32xf32>
    %161 = arith.addf %160, %4 : vector<16x32xf32>
    %162 = math.tanh %161 : vector<16x32xf32>
    %cst_59 = arith.constant dense<0.000000e+00> : vector<16x16xf32>
    %163 = tpu.matmul %162, %1, %cst_59 {dimension_numbers = #tpu.dot_dimension_numbers<[1], [0], [0], [1], [0, 0, 1, 1], [], []>} : vector<16x32xf32>, vector<32x16xf32>, vector<16x16xf32> -> vector<16x16xf32>
    %164 = arith.addf %163, %7 : vector<16x16xf32>
    %165 = vector.broadcast %159 : f32 to vector<16x16xf32>
    %166 = arith.mulf %165, %164 : vector<16x16xf32>
    %167 = arith.addf %151, %166 : vector<16x16xf32>
    %cst_60 = arith.constant dense<0.000000e+00> : vector<16x32xf32>
    %168 = tpu.matmul %167, %0, %cst_60 {dimension_numbers = #tpu.dot_dimension_numbers<[1], [0], [0], [1], [0, 0, 1, 1], [], []>} : vector<16x16xf32>, vector<16x32xf32>, vector<16x32xf32> -> vector<16x32xf32>
    %169 = arith.addf %168, %4 : vector<16x32xf32>
    %170 = math.tanh %169 : vector<16x32xf32>
    %cst_61 = arith.constant dense<0.000000e+00> : vector<16x16xf32>
    %171 = tpu.matmul %170, %1, %cst_61 {dimension_numbers = #tpu.dot_dimension_numbers<[1], [0], [0], [1], [0, 0, 1, 1], [], []>} : vector<16x32xf32>, vector<32x16xf32>, vector<16x16xf32> -> vector<16x16xf32>
    %172 = arith.addf %171, %7 : vector<16x16xf32>
    %173 = vector.broadcast %159 : f32 to vector<16x16xf32>
    %174 = arith.mulf %173, %172 : vector<16x16xf32>
    %175 = arith.addf %151, %174 : vector<16x16xf32>
    %cst_62 = arith.constant dense<0.000000e+00> : vector<16x32xf32>
    %176 = tpu.matmul %175, %0, %cst_62 {dimension_numbers = #tpu.dot_dimension_numbers<[1], [0], [0], [1], [0, 0, 1, 1], [], []>} : vector<16x16xf32>, vector<16x32xf32>, vector<16x32xf32> -> vector<16x32xf32>
    %177 = arith.addf %176, %4 : vector<16x32xf32>
    %178 = math.tanh %177 : vector<16x32xf32>
    %cst_63 = arith.constant dense<0.000000e+00> : vector<16x16xf32>
    %179 = tpu.matmul %178, %1, %cst_63 {dimension_numbers = #tpu.dot_dimension_numbers<[1], [0], [0], [1], [0, 0, 1, 1], [], []>} : vector<16x32xf32>, vector<32x16xf32>, vector<16x16xf32> -> vector<16x16xf32>
    %180 = arith.addf %179, %7 : vector<16x16xf32>
    %181 = vector.broadcast %158 : f32 to vector<16x16xf32>
    %182 = arith.mulf %181, %180 : vector<16x16xf32>
    %183 = arith.addf %151, %182 : vector<16x16xf32>
    %cst_64 = arith.constant dense<0.000000e+00> : vector<16x32xf32>
    %184 = tpu.matmul %183, %0, %cst_64 {dimension_numbers = #tpu.dot_dimension_numbers<[1], [0], [0], [1], [0, 0, 1, 1], [], []>} : vector<16x16xf32>, vector<16x32xf32>, vector<16x32xf32> -> vector<16x32xf32>
    %185 = arith.addf %184, %4 : vector<16x32xf32>
    %186 = math.tanh %185 : vector<16x32xf32>
    %cst_65 = arith.constant dense<0.000000e+00> : vector<16x16xf32>
    %187 = tpu.matmul %186, %1, %cst_65 {dimension_numbers = #tpu.dot_dimension_numbers<[1], [0], [0], [1], [0, 0, 1, 1], [], []>} : vector<16x32xf32>, vector<32x16xf32>, vector<16x16xf32> -> vector<16x16xf32>
    %188 = arith.addf %187, %7 : vector<16x16xf32>
    %cst_66 = arith.constant 6.000000e+00 : f32
    %189 = arith.divf %158, %cst_66 : f32
    %cst_67 = arith.constant 2.000000e+00 : f32
    %190 = vector.broadcast %cst_67 : f32 to vector<16x16xf32>
    %191 = arith.mulf %190, %172 : vector<16x16xf32>
    %192 = arith.addf %164, %191 : vector<16x16xf32>
    %cst_68 = arith.constant 2.000000e+00 : f32
    %193 = vector.broadcast %cst_68 : f32 to vector<16x16xf32>
    %194 = arith.mulf %193, %180 : vector<16x16xf32>
    %195 = arith.addf %192, %194 : vector<16x16xf32>
    %196 = arith.addf %195, %188 : vector<16x16xf32>
    %197 = vector.broadcast %189 : f32 to vector<16x16xf32>
    %198 = arith.mulf %197, %196 : vector<16x16xf32>
    %199 = arith.addf %151, %198 : vector<16x16xf32>
    %200 = arith.index_cast %c4_i32 : i32 to index
    %c0_69 = arith.constant 0 : index
    %c0_70 = arith.constant 0 : index
    %201 = vector.load %arg7[%200, %c0_69, %c0_70] : memref<8x16x16xf32, #tpu.memory_space<vmem>>, vector<1x16x16xf32>
    %202 = vector.shape_cast %201 : vector<1x16x16xf32> to vector<16x16xf32>
    %203 = vector.shape_cast %199 : vector<16x16xf32> to vector<1x16x16xf32>
    tpu.vector_store %arg7[%200, %c0_69, %c0_70], %203 {strides = array<i32>} : memref<8x16x16xf32, #tpu.memory_space<vmem>>, vector<1x16x16xf32>,
    %c5_i32 = arith.constant 5 : i32
    %c1_i32_71 = arith.constant 1 : i32
    %204 = arith.subi %c5_i32, %c1_i32_71 : i32
    %205 = arith.index_cast %204 : i32 to index
    %206 = memref.load %arg1[%205] : memref<7xf32, #tpu.memory_space<smem>>
    %cst_72 = arith.constant 5.000000e-01 : f32
    %207 = arith.mulf %cst_72, %206 : f32
    %cst_73 = arith.constant dense<0.000000e+00> : vector<16x32xf32>
    %208 = tpu.matmul %199, %0, %cst_73 {dimension_numbers = #tpu.dot_dimension_numbers<[1], [0], [0], [1], [0, 0, 1, 1], [], []>} : vector<16x16xf32>, vector<16x32xf32>, vector<16x32xf32> -> vector<16x32xf32>
    %209 = arith.addf %208, %4 : vector<16x32xf32>
    %210 = math.tanh %209 : vector<16x32xf32>
    %cst_74 = arith.constant dense<0.000000e+00> : vector<16x16xf32>
    %211 = tpu.matmul %210, %1, %cst_74 {dimension_numbers = #tpu.dot_dimension_numbers<[1], [0], [0], [1], [0, 0, 1, 1], [], []>} : vector<16x32xf32>, vector<32x16xf32>, vector<16x16xf32> -> vector<16x16xf32>
    %212 = arith.addf %211, %7 : vector<16x16xf32>
    %213 = vector.broadcast %207 : f32 to vector<16x16xf32>
    %214 = arith.mulf %213, %212 : vector<16x16xf32>
    %215 = arith.addf %199, %214 : vector<16x16xf32>
    %cst_75 = arith.constant dense<0.000000e+00> : vector<16x32xf32>
    %216 = tpu.matmul %215, %0, %cst_75 {dimension_numbers = #tpu.dot_dimension_numbers<[1], [0], [0], [1], [0, 0, 1, 1], [], []>} : vector<16x16xf32>, vector<16x32xf32>, vector<16x32xf32> -> vector<16x32xf32>
    %217 = arith.addf %216, %4 : vector<16x32xf32>
    %218 = math.tanh %217 : vector<16x32xf32>
    %cst_76 = arith.constant dense<0.000000e+00> : vector<16x16xf32>
    %219 = tpu.matmul %218, %1, %cst_76 {dimension_numbers = #tpu.dot_dimension_numbers<[1], [0], [0], [1], [0, 0, 1, 1], [], []>} : vector<16x32xf32>, vector<32x16xf32>, vector<16x16xf32> -> vector<16x16xf32>
    %220 = arith.addf %219, %7 : vector<16x16xf32>
    %221 = vector.broadcast %207 : f32 to vector<16x16xf32>
    %222 = arith.mulf %221, %220 : vector<16x16xf32>
    %223 = arith.addf %199, %222 : vector<16x16xf32>
    %cst_77 = arith.constant dense<0.000000e+00> : vector<16x32xf32>
    %224 = tpu.matmul %223, %0, %cst_77 {dimension_numbers = #tpu.dot_dimension_numbers<[1], [0], [0], [1], [0, 0, 1, 1], [], []>} : vector<16x16xf32>, vector<16x32xf32>, vector<16x32xf32> -> vector<16x32xf32>
    %225 = arith.addf %224, %4 : vector<16x32xf32>
    %226 = math.tanh %225 : vector<16x32xf32>
    %cst_78 = arith.constant dense<0.000000e+00> : vector<16x16xf32>
    %227 = tpu.matmul %226, %1, %cst_78 {dimension_numbers = #tpu.dot_dimension_numbers<[1], [0], [0], [1], [0, 0, 1, 1], [], []>} : vector<16x32xf32>, vector<32x16xf32>, vector<16x16xf32> -> vector<16x16xf32>
    %228 = arith.addf %227, %7 : vector<16x16xf32>
    %229 = vector.broadcast %206 : f32 to vector<16x16xf32>
    %230 = arith.mulf %229, %228 : vector<16x16xf32>
    %231 = arith.addf %199, %230 : vector<16x16xf32>
    %cst_79 = arith.constant dense<0.000000e+00> : vector<16x32xf32>
    %232 = tpu.matmul %231, %0, %cst_79 {dimension_numbers = #tpu.dot_dimension_numbers<[1], [0], [0], [1], [0, 0, 1, 1], [], []>} : vector<16x16xf32>, vector<16x32xf32>, vector<16x32xf32> -> vector<16x32xf32>
    %233 = arith.addf %232, %4 : vector<16x32xf32>
    %234 = math.tanh %233 : vector<16x32xf32>
    %cst_80 = arith.constant dense<0.000000e+00> : vector<16x16xf32>
    %235 = tpu.matmul %234, %1, %cst_80 {dimension_numbers = #tpu.dot_dimension_numbers<[1], [0], [0], [1], [0, 0, 1, 1], [], []>} : vector<16x32xf32>, vector<32x16xf32>, vector<16x16xf32> -> vector<16x16xf32>
    %236 = arith.addf %235, %7 : vector<16x16xf32>
    %cst_81 = arith.constant 6.000000e+00 : f32
    %237 = arith.divf %206, %cst_81 : f32
    %cst_82 = arith.constant 2.000000e+00 : f32
    %238 = vector.broadcast %cst_82 : f32 to vector<16x16xf32>
    %239 = arith.mulf %238, %220 : vector<16x16xf32>
    %240 = arith.addf %212, %239 : vector<16x16xf32>
    %cst_83 = arith.constant 2.000000e+00 : f32
    %241 = vector.broadcast %cst_83 : f32 to vector<16x16xf32>
    %242 = arith.mulf %241, %228 : vector<16x16xf32>
    %243 = arith.addf %240, %242 : vector<16x16xf32>
    %244 = arith.addf %243, %236 : vector<16x16xf32>
    %245 = vector.broadcast %237 : f32 to vector<16x16xf32>
    %246 = arith.mulf %245, %244 : vector<16x16xf32>
    %247 = arith.addf %199, %246 : vector<16x16xf32>
    %248 = arith.index_cast %c5_i32 : i32 to index
    %c0_84 = arith.constant 0 : index
    %c0_85 = arith.constant 0 : index
    %249 = vector.load %arg7[%248, %c0_84, %c0_85] : memref<8x16x16xf32, #tpu.memory_space<vmem>>, vector<1x16x16xf32>
    %250 = vector.shape_cast %249 : vector<1x16x16xf32> to vector<16x16xf32>
    %251 = vector.shape_cast %247 : vector<16x16xf32> to vector<1x16x16xf32>
    tpu.vector_store %arg7[%248, %c0_84, %c0_85], %251 {strides = array<i32>} : memref<8x16x16xf32, #tpu.memory_space<vmem>>, vector<1x16x16xf32>,
    %c6_i32 = arith.constant 6 : i32
    %c1_i32_86 = arith.constant 1 : i32
    %252 = arith.subi %c6_i32, %c1_i32_86 : i32
    %253 = arith.index_cast %252 : i32 to index
    %254 = memref.load %arg1[%253] : memref<7xf32, #tpu.memory_space<smem>>
    %cst_87 = arith.constant 5.000000e-01 : f32
    %255 = arith.mulf %cst_87, %254 : f32
    %cst_88 = arith.constant dense<0.000000e+00> : vector<16x32xf32>
    %256 = tpu.matmul %247, %0, %cst_88 {dimension_numbers = #tpu.dot_dimension_numbers<[1], [0], [0], [1], [0, 0, 1, 1], [], []>} : vector<16x16xf32>, vector<16x32xf32>, vector<16x32xf32> -> vector<16x32xf32>
    %257 = arith.addf %256, %4 : vector<16x32xf32>
    %258 = math.tanh %257 : vector<16x32xf32>
    %cst_89 = arith.constant dense<0.000000e+00> : vector<16x16xf32>
    %259 = tpu.matmul %258, %1, %cst_89 {dimension_numbers = #tpu.dot_dimension_numbers<[1], [0], [0], [1], [0, 0, 1, 1], [], []>} : vector<16x32xf32>, vector<32x16xf32>, vector<16x16xf32> -> vector<16x16xf32>
    %260 = arith.addf %259, %7 : vector<16x16xf32>
    %261 = vector.broadcast %255 : f32 to vector<16x16xf32>
    %262 = arith.mulf %261, %260 : vector<16x16xf32>
    %263 = arith.addf %247, %262 : vector<16x16xf32>
    %cst_90 = arith.constant dense<0.000000e+00> : vector<16x32xf32>
    %264 = tpu.matmul %263, %0, %cst_90 {dimension_numbers = #tpu.dot_dimension_numbers<[1], [0], [0], [1], [0, 0, 1, 1], [], []>} : vector<16x16xf32>, vector<16x32xf32>, vector<16x32xf32> -> vector<16x32xf32>
    %265 = arith.addf %264, %4 : vector<16x32xf32>
    %266 = math.tanh %265 : vector<16x32xf32>
    %cst_91 = arith.constant dense<0.000000e+00> : vector<16x16xf32>
    %267 = tpu.matmul %266, %1, %cst_91 {dimension_numbers = #tpu.dot_dimension_numbers<[1], [0], [0], [1], [0, 0, 1, 1], [], []>} : vector<16x32xf32>, vector<32x16xf32>, vector<16x16xf32> -> vector<16x16xf32>
    %268 = arith.addf %267, %7 : vector<16x16xf32>
    %269 = vector.broadcast %255 : f32 to vector<16x16xf32>
    %270 = arith.mulf %269, %268 : vector<16x16xf32>
    %271 = arith.addf %247, %270 : vector<16x16xf32>
    %cst_92 = arith.constant dense<0.000000e+00> : vector<16x32xf32>
    %272 = tpu.matmul %271, %0, %cst_92 {dimension_numbers = #tpu.dot_dimension_numbers<[1], [0], [0], [1], [0, 0, 1, 1], [], []>} : vector<16x16xf32>, vector<16x32xf32>, vector<16x32xf32> -> vector<16x32xf32>
    %273 = arith.addf %272, %4 : vector<16x32xf32>
    %274 = math.tanh %273 : vector<16x32xf32>
    %cst_93 = arith.constant dense<0.000000e+00> : vector<16x16xf32>
    %275 = tpu.matmul %274, %1, %cst_93 {dimension_numbers = #tpu.dot_dimension_numbers<[1], [0], [0], [1], [0, 0, 1, 1], [], []>} : vector<16x32xf32>, vector<32x16xf32>, vector<16x16xf32> -> vector<16x16xf32>
    %276 = arith.addf %275, %7 : vector<16x16xf32>
    %277 = vector.broadcast %254 : f32 to vector<16x16xf32>
    %278 = arith.mulf %277, %276 : vector<16x16xf32>
    %279 = arith.addf %247, %278 : vector<16x16xf32>
    %cst_94 = arith.constant dense<0.000000e+00> : vector<16x32xf32>
    %280 = tpu.matmul %279, %0, %cst_94 {dimension_numbers = #tpu.dot_dimension_numbers<[1], [0], [0], [1], [0, 0, 1, 1], [], []>} : vector<16x16xf32>, vector<16x32xf32>, vector<16x32xf32> -> vector<16x32xf32>
    %281 = arith.addf %280, %4 : vector<16x32xf32>
    %282 = math.tanh %281 : vector<16x32xf32>
    %cst_95 = arith.constant dense<0.000000e+00> : vector<16x16xf32>
    %283 = tpu.matmul %282, %1, %cst_95 {dimension_numbers = #tpu.dot_dimension_numbers<[1], [0], [0], [1], [0, 0, 1, 1], [], []>} : vector<16x32xf32>, vector<32x16xf32>, vector<16x16xf32> -> vector<16x16xf32>
    %284 = arith.addf %283, %7 : vector<16x16xf32>
    %cst_96 = arith.constant 6.000000e+00 : f32
    %285 = arith.divf %254, %cst_96 : f32
    %cst_97 = arith.constant 2.000000e+00 : f32
    %286 = vector.broadcast %cst_97 : f32 to vector<16x16xf32>
    %287 = arith.mulf %286, %268 : vector<16x16xf32>
    %288 = arith.addf %260, %287 : vector<16x16xf32>
    %cst_98 = arith.constant 2.000000e+00 : f32
    %289 = vector.broadcast %cst_98 : f32 to vector<16x16xf32>
    %290 = arith.mulf %289, %276 : vector<16x16xf32>
    %291 = arith.addf %288, %290 : vector<16x16xf32>
    %292 = arith.addf %291, %284 : vector<16x16xf32>
    %293 = vector.broadcast %285 : f32 to vector<16x16xf32>
    %294 = arith.mulf %293, %292 : vector<16x16xf32>
    %295 = arith.addf %247, %294 : vector<16x16xf32>
    %296 = arith.index_cast %c6_i32 : i32 to index
    %c0_99 = arith.constant 0 : index
    %c0_100 = arith.constant 0 : index
    %297 = vector.load %arg7[%296, %c0_99, %c0_100] : memref<8x16x16xf32, #tpu.memory_space<vmem>>, vector<1x16x16xf32>
    %298 = vector.shape_cast %297 : vector<1x16x16xf32> to vector<16x16xf32>
    %299 = vector.shape_cast %295 : vector<16x16xf32> to vector<1x16x16xf32>
    tpu.vector_store %arg7[%296, %c0_99, %c0_100], %299 {strides = array<i32>} : memref<8x16x16xf32, #tpu.memory_space<vmem>>, vector<1x16x16xf32>,
    %c7_i32 = arith.constant 7 : i32
    %c1_i32_101 = arith.constant 1 : i32
    %300 = arith.subi %c7_i32, %c1_i32_101 : i32
    %301 = arith.index_cast %300 : i32 to index
    %302 = memref.load %arg1[%301] : memref<7xf32, #tpu.memory_space<smem>>
    %cst_102 = arith.constant 5.000000e-01 : f32
    %303 = arith.mulf %cst_102, %302 : f32
    %cst_103 = arith.constant dense<0.000000e+00> : vector<16x32xf32>
    %304 = tpu.matmul %295, %0, %cst_103 {dimension_numbers = #tpu.dot_dimension_numbers<[1], [0], [0], [1], [0, 0, 1, 1], [], []>} : vector<16x16xf32>, vector<16x32xf32>, vector<16x32xf32> -> vector<16x32xf32>
    %305 = arith.addf %304, %4 : vector<16x32xf32>
    %306 = math.tanh %305 : vector<16x32xf32>
    %cst_104 = arith.constant dense<0.000000e+00> : vector<16x16xf32>
    %307 = tpu.matmul %306, %1, %cst_104 {dimension_numbers = #tpu.dot_dimension_numbers<[1], [0], [0], [1], [0, 0, 1, 1], [], []>} : vector<16x32xf32>, vector<32x16xf32>, vector<16x16xf32> -> vector<16x16xf32>
    %308 = arith.addf %307, %7 : vector<16x16xf32>
    %309 = vector.broadcast %303 : f32 to vector<16x16xf32>
    %310 = arith.mulf %309, %308 : vector<16x16xf32>
    %311 = arith.addf %295, %310 : vector<16x16xf32>
    %cst_105 = arith.constant dense<0.000000e+00> : vector<16x32xf32>
    %312 = tpu.matmul %311, %0, %cst_105 {dimension_numbers = #tpu.dot_dimension_numbers<[1], [0], [0], [1], [0, 0, 1, 1], [], []>} : vector<16x16xf32>, vector<16x32xf32>, vector<16x32xf32> -> vector<16x32xf32>
    %313 = arith.addf %312, %4 : vector<16x32xf32>
    %314 = math.tanh %313 : vector<16x32xf32>
    %cst_106 = arith.constant dense<0.000000e+00> : vector<16x16xf32>
    %315 = tpu.matmul %314, %1, %cst_106 {dimension_numbers = #tpu.dot_dimension_numbers<[1], [0], [0], [1], [0, 0, 1, 1], [], []>} : vector<16x32xf32>, vector<32x16xf32>, vector<16x16xf32> -> vector<16x16xf32>
    %316 = arith.addf %315, %7 : vector<16x16xf32>
    %317 = vector.broadcast %303 : f32 to vector<16x16xf32>
    %318 = arith.mulf %317, %316 : vector<16x16xf32>
    %319 = arith.addf %295, %318 : vector<16x16xf32>
    %cst_107 = arith.constant dense<0.000000e+00> : vector<16x32xf32>
    %320 = tpu.matmul %319, %0, %cst_107 {dimension_numbers = #tpu.dot_dimension_numbers<[1], [0], [0], [1], [0, 0, 1, 1], [], []>} : vector<16x16xf32>, vector<16x32xf32>, vector<16x32xf32> -> vector<16x32xf32>
    %321 = arith.addf %320, %4 : vector<16x32xf32>
    %322 = math.tanh %321 : vector<16x32xf32>
    %cst_108 = arith.constant dense<0.000000e+00> : vector<16x16xf32>
    %323 = tpu.matmul %322, %1, %cst_108 {dimension_numbers = #tpu.dot_dimension_numbers<[1], [0], [0], [1], [0, 0, 1, 1], [], []>} : vector<16x32xf32>, vector<32x16xf32>, vector<16x16xf32> -> vector<16x16xf32>
    %324 = arith.addf %323, %7 : vector<16x16xf32>
    %325 = vector.broadcast %302 : f32 to vector<16x16xf32>
    %326 = arith.mulf %325, %324 : vector<16x16xf32>
    %327 = arith.addf %295, %326 : vector<16x16xf32>
    %cst_109 = arith.constant dense<0.000000e+00> : vector<16x32xf32>
    %328 = tpu.matmul %327, %0, %cst_109 {dimension_numbers = #tpu.dot_dimension_numbers<[1], [0], [0], [1], [0, 0, 1, 1], [], []>} : vector<16x16xf32>, vector<16x32xf32>, vector<16x32xf32> -> vector<16x32xf32>
    %329 = arith.addf %328, %4 : vector<16x32xf32>
    %330 = math.tanh %329 : vector<16x32xf32>
    %cst_110 = arith.constant dense<0.000000e+00> : vector<16x16xf32>
    %331 = tpu.matmul %330, %1, %cst_110 {dimension_numbers = #tpu.dot_dimension_numbers<[1], [0], [0], [1], [0, 0, 1, 1], [], []>} : vector<16x32xf32>, vector<32x16xf32>, vector<16x16xf32> -> vector<16x16xf32>
    %332 = arith.addf %331, %7 : vector<16x16xf32>
    %cst_111 = arith.constant 6.000000e+00 : f32
    %333 = arith.divf %302, %cst_111 : f32
    %cst_112 = arith.constant 2.000000e+00 : f32
    %334 = vector.broadcast %cst_112 : f32 to vector<16x16xf32>
    %335 = arith.mulf %334, %316 : vector<16x16xf32>
    %336 = arith.addf %308, %335 : vector<16x16xf32>
    %cst_113 = arith.constant 2.000000e+00 : f32
    %337 = vector.broadcast %cst_113 : f32 to vector<16x16xf32>
    %338 = arith.mulf %337, %324 : vector<16x16xf32>
    %339 = arith.addf %336, %338 : vector<16x16xf32>
    %340 = arith.addf %339, %332 : vector<16x16xf32>
    %341 = vector.broadcast %333 : f32 to vector<16x16xf32>
    %342 = arith.mulf %341, %340 : vector<16x16xf32>
    %343 = arith.addf %295, %342 : vector<16x16xf32>
    %344 = arith.index_cast %c7_i32 : i32 to index
    %c0_114 = arith.constant 0 : index
    %c0_115 = arith.constant 0 : index
    %345 = vector.load %arg7[%344, %c0_114, %c0_115] : memref<8x16x16xf32, #tpu.memory_space<vmem>>, vector<1x16x16xf32>
    %346 = vector.shape_cast %345 : vector<1x16x16xf32> to vector<16x16xf32>
    %347 = vector.shape_cast %343 : vector<16x16xf32> to vector<1x16x16xf32>
    tpu.vector_store %arg7[%344, %c0_114, %c0_115], %347 {strides = array<i32>} : memref<8x16x16xf32, #tpu.memory_space<vmem>>, vector<1x16x16xf32>,
    %c7_i32_116 = arith.constant 7 : i32
    return
  }
  func.func @transform_0(%arg0: i32, %arg1: memref<7xf32, #tpu.memory_space<smem>>) -> (i32, i32) {
    %c0_i32 = arith.constant 0 : i32
    %c0_i32_0 = arith.constant 0 : i32
    return %arg0, %c0_i32 : i32, i32
  }
  func.func @transform_1(%arg0: i32, %arg1: memref<7xf32, #tpu.memory_space<smem>>) -> (i32, i32) {
    %c0_i32 = arith.constant 0 : i32
    %c0_i32_0 = arith.constant 0 : i32
    %c0_i32_1 = arith.constant 0 : i32
    return %c0_i32, %c0_i32_0 : i32, i32
  }
  func.func @transform_2(%arg0: i32, %arg1: memref<7xf32, #tpu.memory_space<smem>>) -> (i32, i32) {
    %c0_i32 = arith.constant 0 : i32
    %c0_i32_0 = arith.constant 0 : i32
    %c0_i32_1 = arith.constant 0 : i32
    return %c0_i32, %c0_i32_0 : i32, i32
  }
  func.func @transform_3(%arg0: i32, %arg1: memref<7xf32, #tpu.memory_space<smem>>) -> (i32, i32) {
    %c0_i32 = arith.constant 0 : i32
    %c0_i32_0 = arith.constant 0 : i32
    %c0_i32_1 = arith.constant 0 : i32
    return %c0_i32, %c0_i32_0 : i32, i32
  }
  func.func @transform_4(%arg0: i32, %arg1: memref<7xf32, #tpu.memory_space<smem>>) -> (i32, i32) {
    %c0_i32 = arith.constant 0 : i32
    %c0_i32_0 = arith.constant 0 : i32
    %c0_i32_1 = arith.constant 0 : i32
    return %c0_i32, %c0_i32_0 : i32, i32
  }
  func.func @transform_5(%arg0: i32, %arg1: memref<7xf32, #tpu.memory_space<smem>>) -> (i32, i32, i32) {
    %c0_i32 = arith.constant 0 : i32
    %c0_i32_0 = arith.constant 0 : i32
    %c0_i32_1 = arith.constant 0 : i32
    return %c0_i32, %arg0, %c0_i32_0 : i32, i32, i32
  }
}

</mosaic_0001>

<llo_original>
// kernel: diffeq_solver_forward.1
$region0: #{diffeq_solver_forward.1}
  #allocation0 [shape = 'u32[]', space=smem, size = 0x4, offset = 0x4, fixed_abs, tag = 'smem constant byte address 0x4 - core index']
  #allocation1 [shape = 'u32[144,128]{1,0:T(1,128)}', space=vmem, size = 0x12000, scoped, tag = 'internal scratch']
  #allocation2 [shape = 's32[1]{0}', space=sflag, size = 0x4, scoped, tag = 'scoped memory for diffeq_solver_forward.1']
  #allocation3 [shape = 'u8[512]{0}', space=smem, size = 0x200, scoped, tag = 'prefetched SMEM operand 0']
  %s0 = inlined_call_operand.vmem [shape: f32[7], index: 0, kind: input, shape index: {}]
  %s1 = inlined_call_operand.vmem [shape: f32[16,16], index: 1, kind: input, shape index: {}]
  %s2 = inlined_call_operand.vmem [shape: f32[16,32], index: 2, kind: input, shape index: {}]
  %s3 = inlined_call_operand.vmem [shape: f32[1,32], index: 3, kind: input, shape index: {}]
  %s4 = inlined_call_operand.vmem [shape: f32[32,16], index: 4, kind: input, shape index: {}]
  %s5 = inlined_call_operand.vmem [shape: f32[1,16], index: 5, kind: input, shape index: {}]
  %s6 = inlined_call_operand.vmem [shape: f32[8,16,16], index: 6, kind: output, shape index: {}]
  %s7 = sld [smem:[#allocation0]]
  $region30: #{diffeq_solver_forward.1} parent=0
    _
  %s9 = ssub.s32 1, %s7
  %s10 = scalar_select 0, %s9, %s7
  %s11 = sshll.u32 %s0, 4
  %s12 = int_to_ptr.vmem [resolvable:$true] %s11
  %14 = dma.vmem_to_smem %s12, 16, [#allocation3], [#allocation2]
  %15 = dma.done [#allocation2], 16
  %16 = sfence
  // Predicated region
  $region2: #{diffeq_solver_forward.1} parent=0 // pred_check
    _
  $region3: #{diffeq_solver_forward.1} parent=0 // pred_check_branch
    %18 = sbr.rel (0) target = $region5
  $region4: #{diffeq_solver_forward.1} parent=0 // pred_region
    _
  $region5: #{diffeq_solver_forward.1} parent=0 // pred_fallthru
    _
  // Predicated region
  $region6: #{diffeq_solver_forward.1} parent=0 // pred_check
    _
  $region7: #{diffeq_solver_forward.1} parent=0 // pred_check_branch
    %20 = sbr.rel (0) target = $region9
  $region8: #{diffeq_solver_forward.1} parent=0 // pred_region
    _
  $region9: #{diffeq_solver_forward.1} parent=0 // pred_fallthru
    _
  // Predicated region
  $region10: #{diffeq_solver_forward.1} parent=0 // pred_check
    _
  $region11: #{diffeq_solver_forward.1} parent=0 // pred_check_branch
    %22 = sbr.rel (0) target = $region13
  $region12: #{diffeq_solver_forward.1} parent=0 // pred_region
    _
  $region13: #{diffeq_solver_forward.1} parent=0 // pred_fallthru
    _
  // Predicated region
  $region14: #{diffeq_solver_forward.1} parent=0 // pred_check
    _
  $region15: #{diffeq_solver_forward.1} parent=0 // pred_check_branch
    %24 = sbr.rel (0) target = $region17
  $region16: #{diffeq_solver_forward.1} parent=0 // pred_region
    _
  $region17: #{diffeq_solver_forward.1} parent=0 // pred_fallthru
    _
  // Predicated region
  $region18: #{diffeq_solver_forward.1} parent=0 // pred_check
    _
  $region19: #{diffeq_solver_forward.1} parent=0 // pred_check_branch
    %26 = sbr.rel (0) target = $region21
  $region20: #{diffeq_solver_forward.1} parent=0 // pred_region
    _
  $region21: #{diffeq_solver_forward.1} parent=0 // pred_fallthru
    _
  %v27 = vld [vmem:[%s2] sm:$0xff]
  %v28 = vld [vmem:[%s2 + $0x8] sm:$0xff]
  %v29 = vld [vmem:[%s4] sm:$0xff]
  %v30 = vld [vmem:[%s4 + $0x8] sm:$0xff]
  %v31 = vld [vmem:[%s4 + $0x10] sm:$0xff]
  %v32 = vld [vmem:[%s4 + $0x18] sm:$0xff]
  %v33 = vld [vmem:[%s3] sm:$0x1]
  %v35 = vlaneseq
  %v36 = vshrl.u32 %v35, 7
  %v37 = vsub.s32 0, %v36
  %v38 = vrot.slane %v33, %v37
  %v40 = vld [vmem:[%s5] sm:$0x1]
  %v42 = vlaneseq
  %v43 = vshrl.u32 %v42, 7
  %v44 = vsub.s32 0, %v43
  %v45 = vrot.slane %v40, %v44
  %v47 = vld [vmem:[%s1] sm:$0xff]
  %v48 = vld [vmem:[%s1 + $0x8] sm:$0xff]
  %vm49 = vcmask 130048
  %50 = vst.msk [vmem:[%s6] sm:$0xff] %vm49, %v47
  %51 = vst.msk [vmem:[%s6 + $0x8] sm:$0xff] %vm49, %v48
  %s52 = sld [smem:[#allocation3]]
  %s53 = smul.f32 %s52, 0.5
  %v55 = vsel %vm49, %v47, 0
  %v58 = vsel %vm49, %v48, 0
  %60 = vmatprep.subr.mxu0 0.0
  %61 = vmatpush1.msra.mxu0 %v27
  %62 = vmatprep.subr.mxu0 0.0
  %63 = vmatpush1.msra.mxu0 %v28
  %64 = vmatprep.subr.mxu0 0.0
  %65 = vmatpush1.msra.mxu0 0.0
  %66 = vmatprep.subr.mxu0 0.0
  %67 = vmatpush1.msra.mxu0 0.0
  %68 = vmatprep.subr.mxu0 0.0
  %69 = vmatpush1.msra.mxu0 0.0
  %70 = vmatprep.subr.mxu0 0.0
  %71 = vmatpush1.msra.mxu0 0.0
  %72 = vmatprep.subr.mxu0 0.0
  %73 = vmatpush1.msra.mxu0 0.0
  %74 = vmatprep.subr.mxu0 0.0
  %75 = vmatpush1.msra.mxu0 0.0
  %76 = vmatprep.subr.mxu0 0.0
  %77 = vmatpush1.msra.mxu0 0.0
  %78 = vmatprep.subr.mxu0 0.0
  %79 = vmatpush1.msra.mxu0 0.0
  %80 = vmatprep.subr.mxu0 0.0
  %81 = vmatpush1.msra.mxu0 0.0
  %82 = vmatprep.subr.mxu0 0.0
  %83 = vmatpush1.msra.mxu0 0.0
  %84 = vmatprep.subr.mxu0 0.0
  %85 = vmatpush1.msra.mxu0 0.0
  %86 = vmatprep.subr.mxu0 0.0
  %87 = vmatpush1.msra.mxu0 0.0
  %88 = vmatprep.subr.mxu0 0.0
  %89 = vmatpush1.msra.mxu0 0.0
  %90 = vmatprep.subr.mxu0 0.0
  %91 = vmatpush1.msra.mxu0 0.0
  %92 = vmatprep.subr.mxu0 0.0
  %93 = vmatpush1.msra.mxu0 0.0
  %94 = vmatprep.subr.mxu0 0.0
  %95 = vmatpush1.msra.mxu0 0.0
  %96 = vmatprep.subr.mxu0 0.0
  %97 = vmatpush1.msra.mxu0 0.0
  %98 = vmatprep.subr.mxu0 0.0
  %99 = vmatpush1.msra.mxu0 0.0
  %100 = vmatprep.subr.mxu0 0.0
  %101 = vmatpush1.msra.mxu0 0.0
  %102 = vmatprep.subr.mxu0 0.0
  %103 = vmatpush1.msra.mxu0 0.0
  %104 = vmatprep.subr.mxu0 0.0
  %105 = vmatpush1.msra.mxu0 0.0
  %106 = vmatprep.subr.mxu0 0.0
  %107 = vmatpush1.msra.mxu0 0.0
  %108 = vmatprep.subr.mxu0 0.0
  %109 = vmatpush1.msra.mxu0 0.0
  %110 = vmatprep.subr.mxu0 0.0
  %111 = vmatpush1.msra.mxu0 0.0
  %112 = vmatprep.subr.mxu0 0.0
  %113 = vmatpush1.msra.mxu0 0.0
  %114 = vmatprep.subr.mxu0 0.0
  %115 = vmatpush1.msra.mxu0 0.0
  %116 = vmatprep.subr.mxu0 0.0
  %117 = vmatpush1.msra.mxu0 0.0
  %118 = vmatprep.subr.mxu0 0.0
  %119 = vmatpush1.msra.mxu0 0.0
  %120 = vmatprep.subr.mxu0 0.0
  %121 = vmatpush1.msra.mxu0 0.0
  %122 = vmatprep.subr.mxu0 0.0
  %123 = vmatpush1.msra.mxu0 0.0
  %124 = vmatprep.mubr.f32.mxu0 0.0
  %125 = vmatmul.mubr.f32.gmra.mrb[0].mxu0 %v55
  %v126 = vpop.f32.mrb[0].mxu0
  %v127 = vadd.f32 %v38, %v126
  %v128 = vpop.f32.mrb[0].mxu0
  %129 = vmatprep.mubr.f32.mxu0 0.0
  %130 = vmatmul.mubr.f32.gmra.mrb[0].mxu0 %v58
  %v131 = vpop.f32.mrb[0].mxu0
  %v132 = vadd.f32 %v38, %v131
  %v133 = vpop.f32.mrb[0].mxu0
  %134 = vdwg.mxu0
  %v135 = vtanh.pop %v127
  %v136 = vtanh.pop %v132
  %vm137 = vcmask 261120
  %v139 = vsel %vm137, %v135, 0
  %v142 = vsel %vm137, %v136, 0
  %144 = vmatprep.subr.mxu0 0.0
  %145 = vmatpush1.msra.mxu0 %v29
  %146 = vmatprep.subr.mxu0 0.0
  %147 = vmatpush1.msra.mxu0 %v30
  %148 = vmatprep.subr.mxu0 0.0
  %149 = vmatpush1.msra.mxu0 %v31
  %150 = vmatprep.subr.mxu0 0.0
  %151 = vmatpush1.msra.mxu0 %v32
  %152 = vmatprep.subr.mxu0 0.0
  %153 = vmatpush1.msra.mxu0 0.0
  %154 = vmatprep.subr.mxu0 0.0
  %155 = vmatpush1.msra.mxu0 0.0
  %156 = vmatprep.subr.mxu0 0.0
  %157 = vmatpush1.msra.mxu0 0.0
  %158 = vmatprep.subr.mxu0 0.0
  %159 = vmatpush1.msra.mxu0 0.0
  %160 = vmatprep.subr.mxu0 0.0
  %161 = vmatpush1.msra.mxu0 0.0
  %162 = vmatprep.subr.mxu0 0.0
  %163 = vmatpush1.msra.mxu0 0.0
  %164 = vmatprep.subr.mxu0 0.0
  %165 = vmatpush1.msra.mxu0 0.0
  %166 = vmatprep.subr.mxu0 0.0
  %167 = vmatpush1.msra.mxu0 0.0
  %168 = vmatprep.subr.mxu0 0.0
  %169 = vmatpush1.msra.mxu0 0.0
  %170 = vmatprep.subr.mxu0 0.0
  %171 = vmatpush1.msra.mxu0 0.0
  %172 = vmatprep.subr.mxu0 0.0
  %173 = vmatpush1.msra.mxu0 0.0
  %174 = vmatprep.subr.mxu0 0.0
  %175 = vmatpush1.msra.mxu0 0.0
  %176 = vmatprep.subr.mxu0 0.0
  %177 = vmatpush1.msra.mxu0 0.0
  %178 = vmatprep.subr.mxu0 0.0
  %179 = vmatpush1.msra.mxu0 0.0
  %180 = vmatprep.subr.mxu0 0.0
  %181 = vmatpush1.msra.mxu0 0.0
  %182 = vmatprep.subr.mxu0 0.0
  %183 = vmatpush1.msra.mxu0 0.0
  %184 = vmatprep.subr.mxu0 0.0
  %185 = vmatpush1.msra.mxu0 0.0
  %186 = vmatprep.subr.mxu0 0.0
  %187 = vmatpush1.msra.mxu0 0.0
  %188 = vmatprep.subr.mxu0 0.0
  %189 = vmatpush1.msra.mxu0 0.0
  %190 = vmatprep.subr.mxu0 0.0
  %191 = vmatpush1.msra.mxu0 0.0
  %192 = vmatprep.subr.mxu0 0.0
  %193 = vmatpush1.msra.mxu0 0.0
  %194 = vmatprep.subr.mxu0 0.0
  %195 = vmatpush1.msra.mxu0 0.0
  %196 = vmatprep.subr.mxu0 0.0
  %197 = vmatpush1.msra.mxu0 0.0
  %198 = vmatprep.subr.mxu0 0.0
  %199 = vmatpush1.msra.mxu0 0.0
  %200 = vmatprep.subr.mxu0 0.0
  %201 = vmatpush1.msra.mxu0 0.0
  %202 = vmatprep.subr.mxu0 0.0
  %203 = vmatpush1.msra.mxu0 0.0
  %204 = vmatprep.subr.mxu0 0.0
  %205 = vmatpush1.msra.mxu0 0.0
  %206 = vmatprep.subr.mxu0 0.0
  %207 = vmatpush1.msra.mxu0 0.0
  %208 = vmatprep.mubr.f32.mxu0 0.0
  %209 = vmatmul.mubr.f32.gmra.mrb[0].mxu0 %v139
  %v210 = vpop.f32.mrb[0].mxu0
  %v211 = vadd.f32 %v45, %v210
  %v212 = vpop.f32.mrb[0].mxu0
  %213 = vmatprep.mubr.f32.mxu0 0.0
  %214 = vmatmul.mubr.f32.gmra.mrb[0].mxu0 %v142
  %v215 = vpop.f32.mrb[0].mxu0
  %v216 = vadd.f32 %v45, %v215
  %v217 = vpop.f32.mrb[0].mxu0
  %218 = vdwg.mxu0
  %v219 = vstv %s53
  %v220 = vmul.f32 %v219, %v211
  %v221 = vmul.f32 %v219, %v216
  %v222 = vadd.f32 %v47, %v220
  %v223 = vadd.f32 %v48, %v221
  %v225 = vsel %vm49, %v222, 0
  %v228 = vsel %vm49, %v223, 0
  %230 = vmatprep.subr.mxu0 0.0
  %231 = vmatpush1.msra.mxu0 %v27
  %232 = vmatprep.subr.mxu0 0.0
  %233 = vmatpush1.msra.mxu0 %v28
  %234 = vmatprep.subr.mxu0 0.0
  %235 = vmatpush1.msra.mxu0 0.0
  %236 = vmatprep.subr.mxu0 0.0
  %237 = vmatpush1.msra.mxu0 0.0
  %238 = vmatprep.subr.mxu0 0.0
  %239 = vmatpush1.msra.mxu0 0.0
  %240 = vmatprep.subr.mxu0 0.0
  %241 = vmatpush1.msra.mxu0 0.0
  %242 = vmatprep.subr.mxu0 0.0
  %243 = vmatpush1.msra.mxu0 0.0
  %244 = vmatprep.subr.mxu0 0.0
  %245 = vmatpush1.msra.mxu0 0.0
  %246 = vmatprep.subr.mxu0 0.0
  %247 = vmatpush1.msra.mxu0 0.0
  %248 = vmatprep.subr.mxu0 0.0
  %249 = vmatpush1.msra.mxu0 0.0
  %250 = vmatprep.subr.mxu0 0.0
  %251 = vmatpush1.msra.mxu0 0.0
  %252 = vmatprep.subr.mxu0 0.0
  %253 = vmatpush1.msra.mxu0 0.0
  %254 = vmatprep.subr.mxu0 0.0
  %255 = vmatpush1.msra.mxu0 0.0
  %256 = vmatprep.subr.mxu0 0.0
  %257 = vmatpush1.msra.mxu0 0.0
  %258 = vmatprep.subr.mxu0 0.0
  %259 = vmatpush1.msra.mxu0 0.0
  %260 = vmatprep.subr.mxu0 0.0
  %261 = vmatpush1.msra.mxu0 0.0
  %262 = vmatprep.subr.mxu0 0.0
  %263 = vmatpush1.msra.mxu0 0.0
  %264 = vmatprep.subr.mxu0 0.0
  %265 = vmatpush1.msra.mxu0 0.0
  %266 = vmatprep.subr.mxu0 0.0
  %267 = vmatpush1.msra.mxu0 0.0
  %268 = vmatprep.subr.mxu0 0.0
  %269 = vmatpush1.msra.mxu0 0.0
  %270 = vmatprep.subr.mxu0 0.0
  %271 = vmatpush1.msra.mxu0 0.0
  %272 = vmatprep.subr.mxu0 0.0
  %273 = vmatpush1.msra.mxu0 0.0
  %274 = vmatprep.subr.mxu0 0.0
  %275 = vmatpush1.msra.mxu0 0.0
  %276 = vmatprep.subr.mxu0 0.0
  %277 = vmatpush1.msra.mxu0 0.0
  %278 = vmatprep.subr.mxu0 0.0
  %279 = vmatpush1.msra.mxu0 0.0
  %280 = vmatprep.subr.mxu0 0.0
  %281 = vmatpush1.msra.mxu0 0.0
  %282 = vmatprep.subr.mxu0 0.0
  %283 = vmatpush1.msra.mxu0 0.0
  %284 = vmatprep.subr.mxu0 0.0
  %285 = vmatpush1.msra.mxu0 0.0
  %286 = vmatprep.subr.mxu0 0.0
  %287 = vmatpush1.msra.mxu0 0.0
  %288 = vmatprep.subr.mxu0 0.0
  %289 = vmatpush1.msra.mxu0 0.0
  %290 = vmatprep.subr.mxu0 0.0
  %291 = vmatpush1.msra.mxu0 0.0
  %292 = vmatprep.subr.mxu0 0.0
  %293 = vmatpush1.msra.mxu0 0.0
  %294 = vmatprep.mubr.f32.mxu0 0.0
  %295 = vmatmul.mubr.f32.gmra.mrb[0].mxu0 %v225
  %v296 = vpop.f32.mrb[0].mxu0
  %v297 = vadd.f32 %v38, %v296
  %v298 = vpop.f32.mrb[0].mxu0
  %299 = vmatprep.mubr.f32.mxu0 0.0
  %300 = vmatmul.mubr.f32.gmra.mrb[0].mxu0 %v228
  %v301 = vpop.f32.mrb[0].mxu0
  %v302 = vadd.f32 %v38, %v301
  %v303 = vpop.f32.mrb[0].mxu0
  %304 = vdwg.mxu0
  %v305 = vtanh.pop %v297
  %v306 = vtanh.pop %v302
  %v308 = vsel %vm137, %v305, 0
  %v311 = vsel %vm137, %v306, 0
  %313 = vmatprep.subr.mxu0 0.0
  %314 = vmatpush1.msra.mxu0 %v29
  %315 = vmatprep.subr.mxu0 0.0
  %316 = vmatpush1.msra.mxu0 %v30
  %317 = vmatprep.subr.mxu0 0.0
  %318 = vmatpush1.msra.mxu0 %v31
  %319 = vmatprep.subr.mxu0 0.0
  %320 = vmatpush1.msra.mxu0 %v32
  %321 = vmatprep.subr.mxu0 0.0
  %322 = vmatpush1.msra.mxu0 0.0
  %323 = vmatprep.subr.mxu0 0.0
  %324 = vmatpush1.msra.mxu0 0.0
  %325 = vmatprep.subr.mxu0 0.0
  %326 = vmatpush1.msra.mxu0 0.0
  %327 = vmatprep.subr.mxu0 0.0
  %328 = vmatpush1.msra.mxu0 0.0
  %329 = vmatprep.subr.mxu0 0.0
  %330 = vmatpush1.msra.mxu0 0.0
  %331 = vmatprep.subr.mxu0 0.0
  %332 = vmatpush1.msra.mxu0 0.0
  %333 = vmatprep.subr.mxu0 0.0
  %334 = vmatpush1.msra.mxu0 0.0
  %335 = vmatprep.subr.mxu0 0.0
  %336 = vmatpush1.msra.mxu0 0.0
  %337 = vmatprep.subr.mxu0 0.0
  %338 = vmatpush1.msra.mxu0 0.0
  %339 = vmatprep.subr.mxu0 0.0
  %340 = vmatpush1.msra.mxu0 0.0
  %341 = vmatprep.subr.mxu0 0.0
  %342 = vmatpush1.msra.mxu0 0.0
  %343 = vmatprep.subr.mxu0 0.0
  %344 = vmatpush1.msra.mxu0 0.0
  %345 = vmatprep.subr.mxu0 0.0
  %346 = vmatpush1.msra.mxu0 0.0
  %347 = vmatprep.subr.mxu0 0.0
  %348 = vmatpush1.msra.mxu0 0.0
  %349 = vmatprep.subr.mxu0 0.0
  %350 = vmatpush1.msra.mxu0 0.0
  %351 = vmatprep.subr.mxu0 0.0
  %352 = vmatpush1.msra.mxu0 0.0
  %353 = vmatprep.subr.mxu0 0.0
  %354 = vmatpush1.msra.mxu0 0.0
  %355 = vmatprep.subr.mxu0 0.0
  %356 = vmatpush1.msra.mxu0 0.0
  %357 = vmatprep.subr.mxu0 0.0
  %358 = vmatpush1.msra.mxu0 0.0
  %359 = vmatprep.subr.mxu0 0.0
  %360 = vmatpush1.msra.mxu0 0.0
  %361 = vmatprep.subr.mxu0 0.0
  %362 = vmatpush1.msra.mxu0 0.0
  %363 = vmatprep.subr.mxu0 0.0
  %364 = vmatpush1.msra.mxu0 0.0
  %365 = vmatprep.subr.mxu0 0.0
  %366 = vmatpush1.msra.mxu0 0.0
  %367 = vmatprep.subr.mxu0 0.0
  %368 = vmatpush1.msra.mxu0 0.0
  %369 = vmatprep.subr.mxu0 0.0
  %370 = vmatpush1.msra.mxu0 0.0
  %371 = vmatprep.subr.mxu0 0.0
  %372 = vmatpush1.msra.mxu0 0.0
  %373 = vmatprep.subr.mxu0 0.0
  %374 = vmatpush1.msra.mxu0 0.0
  %375 = vmatprep.subr.mxu0 0.0
  %376 = vmatpush1.msra.mxu0 0.0
  %377 = vmatprep.mubr.f32.mxu0 0.0
  %378 = vmatmul.mubr.f32.gmra.mrb[0].mxu0 %v308
  %v379 = vpop.f32.mrb[0].mxu0
  %v380 = vadd.f32 %v45, %v379
  %v381 = vpop.f32.mrb[0].mxu0
  %382 = vmatprep.mubr.f32.mxu0 0.0
  %383 = vmatmul.mubr.f32.gmra.mrb[0].mxu0 %v311
  %v384 = vpop.f32.mrb[0].mxu0
  %v385 = vadd.f32 %v45, %v384
  %v386 = vpop.f32.mrb[0].mxu0
  %387 = vdwg.mxu0
  %v388 = vmul.f32 %v219, %v380
  %v389 = vmul.f32 %v219, %v385
  %v390 = vadd.f32 %v47, %v388
  %v391 = vadd.f32 %v48, %v389
  %v393 = vsel %vm49, %v390, 0
  %v396 = vsel %vm49, %v391, 0
  %398 = vmatprep.subr.mxu0 0.0
  %399 = vmatpush1.msra.mxu0 %v27
  %400 = vmatprep.subr.mxu0 0.0
  %401 = vmatpush1.msra.mxu0 %v28
  %402 = vmatprep.subr.mxu0 0.0
  %403 = vmatpush1.msra.mxu0 0.0
  %404 = vmatprep.subr.mxu0 0.0
  %405 = vmatpush1.msra.mxu0 0.0
  %406 = vmatprep.subr.mxu0 0.0
  %407 = vmatpush1.msra.mxu0 0.0
  %408 = vmatprep.subr.mxu0 0.0
  %409 = vmatpush1.msra.mxu0 0.0
  %410 = vmatprep.subr.mxu0 0.0
  %411 = vmatpush1.msra.mxu0 0.0
  %412 = vmatprep.subr.mxu0 0.0
  %413 = vmatpush1.msra.mxu0 0.0
  %414 = vmatprep.subr.mxu0 0.0
  %415 = vmatpush1.msra.mxu0 0.0
  %416 = vmatprep.subr.mxu0 0.0
  %417 = vmatpush1.msra.mxu0 0.0
  %418 = vmatprep.subr.mxu0 0.0
  %419 = vmatpush1.msra.mxu0 0.0
  %420 = vmatprep.subr.mxu0 0.0
  %421 = vmatpush1.msra.mxu0 0.0
  %422 = vmatprep.subr.mxu0 0.0
  %423 = vmatpush1.msra.mxu0 0.0
  %424 = vmatprep.subr.mxu0 0.0
  %425 = vmatpush1.msra.mxu0 0.0
  %426 = vmatprep.subr.mxu0 0.0
  %427 = vmatpush1.msra.mxu0 0.0
  %428 = vmatprep.subr.mxu0 0.0
  %429 = vmatpush1.msra.mxu0 0.0
  %430 = vmatprep.subr.mxu0 0.0
  %431 = vmatpush1.msra.mxu0 0.0
  %432 = vmatprep.subr.mxu0 0.0
  %433 = vmatpush1.msra.mxu0 0.0
  %434 = vmatprep.subr.mxu0 0.0
  %435 = vmatpush1.msra.mxu0 0.0
  %436 = vmatprep.subr.mxu0 0.0
  %437 = vmatpush1.msra.mxu0 0.0
  %438 = vmatprep.subr.mxu0 0.0
  %439 = vmatpush1.msra.mxu0 0.0
  %440 = vmatprep.subr.mxu0 0.0
  %441 = vmatpush1.msra.mxu0 0.0
  %442 = vmatprep.subr.mxu0 0.0
  %443 = vmatpush1.msra.mxu0 0.0
  %444 = vmatprep.subr.mxu0 0.0
  %445 = vmatpush1.msra.mxu0 0.0
  %446 = vmatprep.subr.mxu0 0.0
  %447 = vmatpush1.msra.mxu0 0.0
  %448 = vmatprep.subr.mxu0 0.0
  %449 = vmatpush1.msra.mxu0 0.0
  %450 = vmatprep.subr.mxu0 0.0
  %451 = vmatpush1.msra.mxu0 0.0
  %452 = vmatprep.subr.mxu0 0.0
  %453 = vmatpush1.msra.mxu0 0.0
  %454 = vmatprep.subr.mxu0 0.0
  %455 = vmatpush1.msra.mxu0 0.0
  %456 = vmatprep.subr.mxu0 0.0
  %457 = vmatpush1.msra.mxu0 0.0
  %458 = vmatprep.subr.mxu0 0.0
  %459 = vmatpush1.msra.mxu0 0.0
  %460 = vmatprep.subr.mxu0 0.0
  %461 = vmatpush1.msra.mxu0 0.0
  %462 = vmatprep.mubr.f32.mxu0 0.0
  %463 = vmatmul.mubr.f32.gmra.mrb[0].mxu0 %v393
  %v464 = vpop.f32.mrb[0].mxu0
  %v465 = vadd.f32 %v38, %v464
  %v466 = vpop.f32.mrb[0].mxu0
  %467 = vmatprep.mubr.f32.mxu0 0.0
  %468 = vmatmul.mubr.f32.gmra.mrb[0].mxu0 %v396
  %v469 = vpop.f32.mrb[0].mxu0
  %v470 = vadd.f32 %v38, %v469
  %v471 = vpop.f32.mrb[0].mxu0
  %472 = vdwg.mxu0
  %v473 = vtanh.pop %v465
  %v474 = vtanh.pop %v470
  %v476 = vsel %vm137, %v473, 0
  %v479 = vsel %vm137, %v474, 0
  %481 = vmatprep.subr.mxu0 0.0
  %482 = vmatpush1.msra.mxu0 %v29
  %483 = vmatprep.subr.mxu0 0.0
  %484 = vmatpush1.msra.mxu0 %v30
  %485 = vmatprep.subr.mxu0 0.0
  %486 = vmatpush1.msra.mxu0 %v31
  %487 = vmatprep.subr.mxu0 0.0
  %488 = vmatpush1.msra.mxu0 %v32
  %489 = vmatprep.subr.mxu0 0.0
  %490 = vmatpush1.msra.mxu0 0.0
  %491 = vmatprep.subr.mxu0 0.0
  %492 = vmatpush1.msra.mxu0 0.0
  %493 = vmatprep.subr.mxu0 0.0
  %494 = vmatpush1.msra.mxu0 0.0
  %495 = vmatprep.subr.mxu0 0.0
  %496 = vmatpush1.msra.mxu0 0.0
  %497 = vmatprep.subr.mxu0 0.0
  %498 = vmatpush1.msra.mxu0 0.0
  %499 = vmatprep.subr.mxu0 0.0
  %500 = vmatpush1.msra.mxu0 0.0
  %501 = vmatprep.subr.mxu0 0.0
  %502 = vmatpush1.msra.mxu0 0.0
  %503 = vmatprep.subr.mxu0 0.0
  %504 = vmatpush1.msra.mxu0 0.0
  %505 = vmatprep.subr.mxu0 0.0
  %506 = vmatpush1.msra.mxu0 0.0
  %507 = vmatprep.subr.mxu0 0.0
  %508 = vmatpush1.msra.mxu0 0.0
  %509 = vmatprep.subr.mxu0 0.0
  %510 = vmatpush1.msra.mxu0 0.0
  %511 = vmatprep.subr.mxu0 0.0
  %512 = vmatpush1.msra.mxu0 0.0
  %513 = vmatprep.subr.mxu0 0.0
  %514 = vmatpush1.msra.mxu0 0.0
  %515 = vmatprep.subr.mxu0 0.0
  %516 = vmatpush1.msra.mxu0 0.0
  %517 = vmatprep.subr.mxu0 0.0
  %518 = vmatpush1.msra.mxu0 0.0
  %519 = vmatprep.subr.mxu0 0.0
  %520 = vmatpush1.msra.mxu0 0.0
  %521 = vmatprep.subr.mxu0 0.0
  %522 = vmatpush1.msra.mxu0 0.0
  %523 = vmatprep.subr.mxu0 0.0
  %524 = vmatpush1.msra.mxu0 0.0
  %525 = vmatprep.subr.mxu0 0.0
  %526 = vmatpush1.msra.mxu0 0.0
  %527 = vmatprep.subr.mxu0 0.0
  %528 = vmatpush1.msra.mxu0 0.0
  %529 = vmatprep.subr.mxu0 0.0
  %530 = vmatpush1.msra.mxu0 0.0
  %531 = vmatprep.subr.mxu0 0.0
  %532 = vmatpush1.msra.mxu0 0.0
  %533 = vmatprep.subr.mxu0 0.0
  %534 = vmatpush1.msra.mxu0 0.0
  %535 = vmatprep.subr.mxu0 0.0
  %536 = vmatpush1.msra.mxu0 0.0
  %537 = vmatprep.subr.mxu0 0.0
  %538 = vmatpush1.msra.mxu0 0.0
  %539 = vmatprep.subr.mxu0 0.0
  %540 = vmatpush1.msra.mxu0 0.0
  %541 = vmatprep.subr.mxu0 0.0
  %542 = vmatpush1.msra.mxu0 0.0
  %543 = vmatprep.subr.mxu0 0.0
  %544 = vmatpush1.msra.mxu0 0.0
  %545 = vmatprep.mubr.f32.mxu0 0.0
  %546 = vmatmul.mubr.f32.gmra.mrb[0].mxu0 %v476
  %v547 = vpop.f32.mrb[0].mxu0
  %v548 = vadd.f32 %v45, %v547
  %v549 = vpop.f32.mrb[0].mxu0
  %550 = vmatprep.mubr.f32.mxu0 0.0
  %551 = vmatmul.mubr.f32.gmra.mrb[0].mxu0 %v479
  %v552 = vpop.f32.mrb[0].mxu0
  %v553 = vadd.f32 %v45, %v552
  %v554 = vpop.f32.mrb[0].mxu0
  %555 = vdwg.mxu0
  %v556 = vstv %s52
  %v557 = vmul.f32 %v556, %v548
  %v558 = vmul.f32 %v556, %v553
  %v559 = vadd.f32 %v47, %v557
  %v560 = vadd.f32 %v48, %v558
  %v562 = vsel %vm49, %v559, 0
  %v565 = vsel %vm49, %v560, 0
  %567 = vmatprep.subr.mxu0 0.0
  %568 = vmatpush1.msra.mxu0 %v27
  %569 = vmatprep.subr.mxu0 0.0
  %570 = vmatpush1.msra.mxu0 %v28
  %571 = vmatprep.subr.mxu0 0.0
  %572 = vmatpush1.msra.mxu0 0.0
  %573 = vmatprep.subr.mxu0 0.0
  %574 = vmatpush1.msra.mxu0 0.0
  %575 = vmatprep.subr.mxu0 0.0
  %576 = vmatpush1.msra.mxu0 0.0
  %577 = vmatprep.subr.mxu0 0.0
  %578 = vmatpush1.msra.mxu0 0.0
  %579 = vmatprep.subr.mxu0 0.0
  %580 = vmatpush1.msra.mxu0 0.0
  %581 = vmatprep.subr.mxu0 0.0
  %582 = vmatpush1.msra.mxu0 0.0
  %583 = vmatprep.subr.mxu0 0.0
  %584 = vmatpush1.msra.mxu0 0.0
  %585 = vmatprep.subr.mxu0 0.0
  %586 = vmatpush1.msra.mxu0 0.0
  %587 = vmatprep.subr.mxu0 0.0
  %588 = vmatpush1.msra.mxu0 0.0
  %589 = vmatprep.subr.mxu0 0.0
  %590 = vmatpush1.msra.mxu0 0.0
  %591 = vmatprep.subr.mxu0 0.0
  %592 = vmatpush1.msra.mxu0 0.0
  %593 = vmatprep.subr.mxu0 0.0
  %594 = vmatpush1.msra.mxu0 0.0
  %595 = vmatprep.subr.mxu0 0.0
  %596 = vmatpush1.msra.mxu0 0.0
  %597 = vmatprep.subr.mxu0 0.0
  %598 = vmatpush1.msra.mxu0 0.0
  %599 = vmatprep.subr.mxu0 0.0
  %600 = vmatpush1.msra.mxu0 0.0
  %601 = vmatprep.subr.mxu0 0.0
  %602 = vmatpush1.msra.mxu0 0.0
  %603 = vmatprep.subr.mxu0 0.0
  %604 = vmatpush1.msra.mxu0 0.0
  %605 = vmatprep.subr.mxu0 0.0
  %606 = vmatpush1.msra.mxu0 0.0
  %607 = vmatprep.subr.mxu0 0.0
  %608 = vmatpush1.msra.mxu0 0.0
  %609 = vmatprep.subr.mxu0 0.0
  %610 = vmatpush1.msra.mxu0 0.0
  %611 = vmatprep.subr.mxu0 0.0
  %612 = vmatpush1.msra.mxu0 0.0
  %613 = vmatprep.subr.mxu0 0.0
  %614 = vmatpush1.msra.mxu0 0.0
  %615 = vmatprep.subr.mxu0 0.0
  %616 = vmatpush1.msra.mxu0 0.0
  %617 = vmatprep.subr.mxu0 0.0
  %618 = vmatpush1.msra.mxu0 0.0
  %619 = vmatprep.subr.mxu0 0.0
  %620 = vmatpush1.msra.mxu0 0.0
  %621 = vmatprep.subr.mxu0 0.0
  %622 = vmatpush1.msra.mxu0 0.0
  %623 = vmatprep.subr.mxu0 0.0
  %624 = vmatpush1.msra.mxu0 0.0
  %625 = vmatprep.subr.mxu0 0.0
  %626 = vmatpush1.msra.mxu0 0.0
  %627 = vmatprep.subr.mxu0 0.0
  %628 = vmatpush1.msra.mxu0 0.0
  %629 = vmatprep.subr.mxu0 0.0
  %630 = vmatpush1.msra.mxu0 0.0
  %631 = vmatprep.mubr.f32.mxu0 0.0
  %632 = vmatmul.mubr.f32.gmra.mrb[0].mxu0 %v562
  %v633 = vpop.f32.mrb[0].mxu0
  %v634 = vadd.f32 %v38, %v633
  %v635 = vpop.f32.mrb[0].mxu0
  %636 = vmatprep.mubr.f32.mxu0 0.0
  %637 = vmatmul.mubr.f32.gmra.mrb[0].mxu0 %v565
  %v638 = vpop.f32.mrb[0].mxu0
  %v639 = vadd.f32 %v38, %v638
  %v640 = vpop.f32.mrb[0].mxu0
  %641 = vdwg.mxu0
  %v642 = vtanh.pop %v634
  %v643 = vtanh.pop %v639
  %v645 = vsel %vm137, %v642, 0
  %v648 = vsel %vm137, %v643, 0
  %650 = vmatprep.subr.mxu0 0.0
  %651 = vmatpush1.msra.mxu0 %v29
  %652 = vmatprep.subr.mxu0 0.0
  %653 = vmatpush1.msra.mxu0 %v30
  %654 = vmatprep.subr.mxu0 0.0
  %655 = vmatpush1.msra.mxu0 %v31
  %656 = vmatprep.subr.mxu0 0.0
  %657 = vmatpush1.msra.mxu0 %v32
  %658 = vmatprep.subr.mxu0 0.0
  %659 = vmatpush1.msra.mxu0 0.0
  %660 = vmatprep.subr.mxu0 0.0
  %661 = vmatpush1.msra.mxu0 0.0
  %662 = vmatprep.subr.mxu0 0.0
  %663 = vmatpush1.msra.mxu0 0.0
  %664 = vmatprep.subr.mxu0 0.0
  %665 = vmatpush1.msra.mxu0 0.0
  %666 = vmatprep.subr.mxu0 0.0
  %667 = vmatpush1.msra.mxu0 0.0
  %668 = vmatprep.subr.mxu0 0.0
  %669 = vmatpush1.msra.mxu0 0.0
  %670 = vmatprep.subr.mxu0 0.0
  %671 = vmatpush1.msra.mxu0 0.0
  %672 = vmatprep.subr.mxu0 0.0
  %673 = vmatpush1.msra.mxu0 0.0
  %674 = vmatprep.subr.mxu0 0.0
  %675 = vmatpush1.msra.mxu0 0.0
  %676 = vmatprep.subr.mxu0 0.0
  %677 = vmatpush1.msra.mxu0 0.0
  %678 = vmatprep.subr.mxu0 0.0
  %679 = vmatpush1.msra.mxu0 0.0
  %680 = vmatprep.subr.mxu0 0.0
  %681 = vmatpush1.msra.mxu0 0.0
  %682 = vmatprep.subr.mxu0 0.0
  %683 = vmatpush1.msra.mxu0 0.0
  %684 = vmatprep.subr.mxu0 0.0
  %685 = vmatpush1.msra.mxu0 0.0
  %686 = vmatprep.subr.mxu0 0.0
  %687 = vmatpush1.msra.mxu0 0.0
  %688 = vmatprep.subr.mxu0 0.0
  %689 = vmatpush1.msra.mxu0 0.0
  %690 = vmatprep.subr.mxu0 0.0
  %691 = vmatpush1.msra.mxu0 0.0
  %692 = vmatprep.subr.mxu0 0.0
  %693 = vmatpush1.msra.mxu0 0.0
  %694 = vmatprep.subr.mxu0 0.0
  %695 = vmatpush1.msra.mxu0 0.0
  %696 = vmatprep.subr.mxu0 0.0
  %697 = vmatpush1.msra.mxu0 0.0
  %698 = vmatprep.subr.mxu0 0.0
  %699 = vmatpush1.msra.mxu0 0.0
  %700 = vmatprep.subr.mxu0 0.0
  %701 = vmatpush1.msra.mxu0 0.0
  %702 = vmatprep.subr.mxu0 0.0
  %703 = vmatpush1.msra.mxu0 0.0
  %704 = vmatprep.subr.mxu0 0.0
  %705 = vmatpush1.msra.mxu0 0.0
  %706 = vmatprep.subr.mxu0 0.0
  %707 = vmatpush1.msra.mxu0 0.0
  %708 = vmatprep.subr.mxu0 0.0
  %709 = vmatpush1.msra.mxu0 0.0
  %710 = vmatprep.subr.mxu0 0.0
  %711 = vmatpush1.msra.mxu0 0.0
  %712 = vmatprep.subr.mxu0 0.0
  %713 = vmatpush1.msra.mxu0 0.0
  %714 = vmatprep.mubr.f32.mxu0 0.0
  %715 = vmatmul.mubr.f32.gmra.mrb[0].mxu0 %v645
  %v716 = vpop.f32.mrb[0].mxu0
  %v717 = vadd.f32 %v45, %v716
  %v718 = vpop.f32.mrb[0].mxu0
  %719 = vmatprep.mubr.f32.mxu0 0.0
  %720 = vmatmul.mubr.f32.gmra.mrb[0].mxu0 %v648
  %v721 = vpop.f32.mrb[0].mxu0
  %v722 = vadd.f32 %v45, %v721
  %v723 = vpop.f32.mrb[0].mxu0
  %724 = vdwg.mxu0
  %v725 = vrcp.pop 6.0
  %s726 = vtos %v725
  %s727 = smul.f32 %s52, %s726
  %v728 = vmul.f32 %v380, 2.0
  %v729 = vmul.f32 %v385, 2.0
  %v730 = vadd.f32 %v211, %v728
  %v731 = vadd.f32 %v216, %v729
  %v732 = vmul.f32 %v548, 2.0
  %v733 = vmul.f32 %v553, 2.0
  %v734 = vadd.f32 %v730, %v732
  %v735 = vadd.f32 %v731, %v733
  %v736 = vadd.f32 %v734, %v717
  %v737 = vadd.f32 %v735, %v722
  %v738 = vstv %s727
  %v739 = vmul.f32 %v738, %v736
  %v740 = vmul.f32 %v738, %v737
  %v741 = vadd.f32 %v47, %v739
  %v742 = vadd.f32 %v48, %v740
  %s743 = scalar_lea.vmem %s6, 16
  %744 = vst.msk [vmem:[%s743] sm:$0xff] %vm49, %v741
  %745 = vst.msk [vmem:[%s743 + $0x8] sm:$0xff] %vm49, %v742
  %s746 = sld [smem:[#allocation3 + $0x1]]
  %s747 = smul.f32 %s746, 0.5
  %v749 = vsel %vm49, %v741, 0
  %v752 = vsel %vm49, %v742, 0
  %754 = vmatprep.subr.mxu0 0.0
  %755 = vmatpush1.msra.mxu0 %v27
  %756 = vmatprep.subr.mxu0 0.0
  %757 = vmatpush1.msra.mxu0 %v28
  %758 = vmatprep.subr.mxu0 0.0
  %759 = vmatpush1.msra.mxu0 0.0
  %760 = vmatprep.subr.mxu0 0.0
  %761 = vmatpush1.msra.mxu0 0.0
  %762 = vmatprep.subr.mxu0 0.0
  %763 = vmatpush1.msra.mxu0 0.0
  %764 = vmatprep.subr.mxu0 0.0
  %765 = vmatpush1.msra.mxu0 0.0
  %766 = vmatprep.subr.mxu0 0.0
  %767 = vmatpush1.msra.mxu0 0.0
  %768 = vmatprep.subr.mxu0 0.0
  %769 = vmatpush1.msra.mxu0 0.0
  %770 = vmatprep.subr.mxu0 0.0
  %771 = vmatpush1.msra.mxu0 0.0
  %772 = vmatprep.subr.mxu0 0.0
  %773 = vmatpush1.msra.mxu0 0.0
  %774 = vmatprep.subr.mxu0 0.0
  %775 = vmatpush1.msra.mxu0 0.0
  %776 = vmatprep.subr.mxu0 0.0
  %777 = vmatpush1.msra.mxu0 0.0
  %778 = vmatprep.subr.mxu0 0.0
  %779 = vmatpush1.msra.mxu0 0.0
  %780 = vmatprep.subr.mxu0 0.0
  %781 = vmatpush1.msra.mxu0 0.0
  %782 = vmatprep.subr.mxu0 0.0
  %783 = vmatpush1.msra.mxu0 0.0
  %784 = vmatprep.subr.mxu0 0.0
  %785 = vmatpush1.msra.mxu0 0.0
  %786 = vmatprep.subr.mxu0 0.0
  %787 = vmatpush1.msra.mxu0 0.0
  %788 = vmatprep.subr.mxu0 0.0
  %789 = vmatpush1.msra.mxu0 0.0
  %790 = vmatprep.subr.mxu0 0.0
  %791 = vmatpush1.msra.mxu0 0.0
  %792 = vmatprep.subr.mxu0 0.0
  %793 = vmatpush1.msra.mxu0 0.0
  %794 = vmatprep.subr.mxu0 0.0
  %795 = vmatpush1.msra.mxu0 0.0
  %796 = vmatprep.subr.mxu0 0.0
  %797 = vmatpush1.msra.mxu0 0.0
  %798 = vmatprep.subr.mxu0 0.0
  %799 = vmatpush1.msra.mxu0 0.0
  %800 = vmatprep.subr.mxu0 0.0
  %801 = vmatpush1.msra.mxu0 0.0
  %802 = vmatprep.subr.mxu0 0.0
  %803 = vmatpush1.msra.mxu0 0.0
  %804 = vmatprep.subr.mxu0 0.0
  %805 = vmatpush1.msra.mxu0 0.0
  %806 = vmatprep.subr.mxu0 0.0
  %807 = vmatpush1.msra.mxu0 0.0
  %808 = vmatprep.subr.mxu0 0.0
  %809 = vmatpush1.msra.mxu0 0.0
  %810 = vmatprep.subr.mxu0 0.0
  %811 = vmatpush1.msra.mxu0 0.0
  %812 = vmatprep.subr.mxu0 0.0
  %813 = vmatpush1.msra.mxu0 0.0
  %814 = vmatprep.subr.mxu0 0.0
  %815 = vmatpush1.msra.mxu0 0.0
  %816 = vmatprep.subr.mxu0 0.0
  %817 = vmatpush1.msra.mxu0 0.0
  %818 = vmatprep.mubr.f32.mxu0 0.0
  %819 = vmatmul.mubr.f32.gmra.mrb[0].mxu0 %v749
  %v820 = vpop.f32.mrb[0].mxu0
  %v821 = vadd.f32 %v38, %v820
  %v822 = vpop.f32.mrb[0].mxu0
  %823 = vmatprep.mubr.f32.mxu0 0.0
  %824 = vmatmul.mubr.f32.gmra.mrb[0].mxu0 %v752
  %v825 = vpop.f32.mrb[0].mxu0
  %v826 = vadd.f32 %v38, %v825
  %v827 = vpop.f32.mrb[0].mxu0
  %828 = vdwg.mxu0
  %v829 = vtanh.pop %v821
  %v830 = vtanh.pop %v826
  %v832 = vsel %vm137, %v829, 0
  %v835 = vsel %vm137, %v830, 0
  %837 = vmatprep.subr.mxu0 0.0
  %838 = vmatpush1.msra.mxu0 %v29
  %839 = vmatprep.subr.mxu0 0.0
  %840 = vmatpush1.msra.mxu0 %v30
  %841 = vmatprep.subr.mxu0 0.0
  %842 = vmatpush1.msra.mxu0 %v31
  %843 = vmatprep.subr.mxu0 0.0
  %844 = vmatpush1.msra.mxu0 %v32
  %845 = vmatprep.subr.mxu0 0.0
  %846 = vmatpush1.msra.mxu0 0.0
  %847 = vmatprep.subr.mxu0 0.0
  %848 = vmatpush1.msra.mxu0 0.0
  %849 = vmatprep.subr.mxu0 0.0
  %850 = vmatpush1.msra.mxu0 0.0
  %851 = vmatprep.subr.mxu0 0.0
  %852 = vmatpush1.msra.mxu0 0.0
  %853 = vmatprep.subr.mxu0 0.0
  %854 = vmatpush1.msra.mxu0 0.0
  %855 = vmatprep.subr.mxu0 0.0
  %856 = vmatpush1.msra.mxu0 0.0
  %857 = vmatprep.subr.mxu0 0.0
  %858 = vmatpush1.msra.mxu0 0.0
  %859 = vmatprep.subr.mxu0 0.0
  %860 = vmatpush1.msra.mxu0 0.0
  %861 = vmatprep.subr.mxu0 0.0
  %862 = vmatpush1.msra.mxu0 0.0
  %863 = vmatprep.subr.mxu0 0.0
  %864 = vmatpush1.msra.mxu0 0.0
  %865 = vmatprep.subr.mxu0 0.0
  %866 = vmatpush1.msra.mxu0 0.0
  %867 = vmatprep.subr.mxu0 0.0
  %868 = vmatpush1.msra.mxu0 0.0
  %869 = vmatprep.subr.mxu0 0.0
  %870 = vmatpush1.msra.mxu0 0.0
  %871 = vmatprep.subr.mxu0 0.0
  %872 = vmatpush1.msra.mxu0 0.0
  %873 = vmatprep.subr.mxu0 0.0
  %874 = vmatpush1.msra.mxu0 0.0
  %875 = vmatprep.subr.mxu0 0.0
  %876 = vmatpush1.msra.mxu0 0.0
  %877 = vmatprep.subr.mxu0 0.0
  %878 = vmatpush1.msra.mxu0 0.0
  %879 = vmatprep.subr.mxu0 0.0
  %880 = vmatpush1.msra.mxu0 0.0
  %881 = vmatprep.subr.mxu0 0.0
  %882 = vmatpush1.msra.mxu0 0.0
  %883 = vmatprep.subr.mxu0 0.0
  %884 = vmatpush1.msra.mxu0 0.0
  %885 = vmatprep.subr.mxu0 0.0
  %886 = vmatpush1.msra.mxu0 0.0
  %887 = vmatprep.subr.mxu0 0.0
  %888 = vmatpush1.msra.mxu0 0.0
  %889 = vmatprep.subr.mxu0 0.0
  %890 = vmatpush1.msra.mxu0 0.0
  %891 = vmatprep.subr.mxu0 0.0
  %892 = vmatpush1.msra.mxu0 0.0
  %893 = vmatprep.subr.mxu0 0.0
  %894 = vmatpush1.msra.mxu0 0.0
  %895 = vmatprep.subr.mxu0 0.0
  %896 = vmatpush1.msra.mxu0 0.0
  %897 = vmatprep.subr.mxu0 0.0
  %898 = vmatpush1.msra.mxu0 0.0
  %899 = vmatprep.subr.mxu0 0.0
  %900 = vmatpush1.msra.mxu0 0.0
  %901 = vmatprep.mubr.f32.mxu0 0.0
  %902 = vmatmul.mubr.f32.gmra.mrb[0].mxu0 %v832
  %v903 = vpop.f32.mrb[0].mxu0
  %v904 = vadd.f32 %v45, %v903
  %v905 = vpop.f32.mrb[0].mxu0
  %906 = vmatprep.mubr.f32.mxu0 0.0
  %907 = vmatmul.mubr.f32.gmra.mrb[0].mxu0 %v835
  %v908 = vpop.f32.mrb[0].mxu0
  %v909 = vadd.f32 %v45, %v908
  %v910 = vpop.f32.mrb[0].mxu0
  %911 = vdwg.mxu0
  %v912 = vstv %s747
  %v913 = vmul.f32 %v912, %v904
  %v914 = vmul.f32 %v912, %v909
  %v915 = vadd.f32 %v741, %v913
  %v916 = vadd.f32 %v742, %v914
  %v918 = vsel %vm49, %v915, 0
  %v921 = vsel %vm49, %v916, 0
  %923 = vmatprep.subr.mxu0 0.0
  %924 = vmatpush1.msra.mxu0 %v27
  %925 = vmatprep.subr.mxu0 0.0
  %926 = vmatpush1.msra.mxu0 %v28
  %927 = vmatprep.subr.mxu0 0.0
  %928 = vmatpush1.msra.mxu0 0.0
  %929 = vmatprep.subr.mxu0 0.0
  %930 = vmatpush1.msra.mxu0 0.0
  %931 = vmatprep.subr.mxu0 0.0
  %932 = vmatpush1.msra.mxu0 0.0
  %933 = vmatprep.subr.mxu0 0.0
  %934 = vmatpush1.msra.mxu0 0.0
  %935 = vmatprep.subr.mxu0 0.0
  %936 = vmatpush1.msra.mxu0 0.0
  %937 = vmatprep.subr.mxu0 0.0
  %938 = vmatpush1.msra.mxu0 0.0
  %939 = vmatprep.subr.mxu0 0.0
  %940 = vmatpush1.msra.mxu0 0.0
  %941 = vmatprep.subr.mxu0 0.0
  %942 = vmatpush1.msra.mxu0 0.0
  %943 = vmatprep.subr.mxu0 0.0
  %944 = vmatpush1.msra.mxu0 0.0
  %945 = vmatprep.subr.mxu0 0.0
  %946 = vmatpush1.msra.mxu0 0.0
  %947 = vmatprep.subr.mxu0 0.0
  %948 = vmatpush1.msra.mxu0 0.0
  %949 = vmatprep.subr.mxu0 0.0
  %950 = vmatpush1.msra.mxu0 0.0
  %951 = vmatprep.subr.mxu0 0.0
  %952 = vmatpush1.msra.mxu0 0.0
  %953 = vmatprep.subr.mxu0 0.0
  %954 = vmatpush1.msra.mxu0 0.0
  %955 = vmatprep.subr.mxu0 0.0
  %956 = vmatpush1.msra.mxu0 0.0
  %957 = vmatprep.subr.mxu0 0.0
  %958 = vmatpush1.msra.mxu0 0.0
  %959 = vmatprep.subr.mxu0 0.0
  %960 = vmatpush1.msra.mxu0 0.0
  %961 = vmatprep.subr.mxu0 0.0
  %962 = vmatpush1.msra.mxu0 0.0
  %963 = vmatprep.subr.mxu0 0.0
  %964 = vmatpush1.msra.mxu0 0.0
  %965 = vmatprep.subr.mxu0 0.0
  %966 = vmatpush1.msra.mxu0 0.0
  %967 = vmatprep.subr.mxu0 0.0
  %968 = vmatpush1.msra.mxu0 0.0
  %969 = vmatprep.subr.mxu0 0.0
  %970 = vmatpush1.msra.mxu0 0.0
  %971 = vmatprep.subr.mxu0 0.0
  %972 = vmatpush1.msra.mxu0 0.0
  %973 = vmatprep.subr.mxu0 0.0
  %974 = vmatpush1.msra.mxu0 0.0
  %975 = vmatprep.subr.mxu0 0.0
  %976 = vmatpush1.msra.mxu0 0.0
  %977 = vmatprep.subr.mxu0 0.0
  %978 = vmatpush1.msra.mxu0 0.0
  %979 = vmatprep.subr.mxu0 0.0
  %980 = vmatpush1.msra.mxu0 0.0
  %981 = vmatprep.subr.mxu0 0.0
  %982 = vmatpush1.msra.mxu0 0.0
  %983 = vmatprep.subr.mxu0 0.0
  %984 = vmatpush1.msra.mxu0 0.0
  %985 = vmatprep.subr.mxu0 0.0
  %986 = vmatpush1.msra.mxu0 0.0
  %987 = vmatprep.mubr.f32.mxu0 0.0
  %988 = vmatmul.mubr.f32.gmra.mrb[0].mxu0 %v918
  %v989 = vpop.f32.mrb[0].mxu0
  %v990 = vadd.f32 %v38, %v989
  %v991 = vpop.f32.mrb[0].mxu0
  %992 = vmatprep.mubr.f32.mxu0 0.0
  %993 = vmatmul.mubr.f32.gmra.mrb[0].mxu0 %v921
  %v994 = vpop.f32.mrb[0].mxu0
  %v995 = vadd.f32 %v38, %v994
  %v996 = vpop.f32.mrb[0].mxu0
  %997 = vdwg.mxu0
  %v998 = vtanh.pop %v990
  %v999 = vtanh.pop %v995
  %v1001 = vsel %vm137, %v998, 0
  %v1004 = vsel %vm137, %v999, 0
  %1006 = vmatprep.subr.mxu0 0.0
  %1007 = vmatpush1.msra.mxu0 %v29
  %1008 = vmatprep.subr.mxu0 0.0
  %1009 = vmatpush1.msra.mxu0 %v30
  %1010 = vmatprep.subr.mxu0 0.0
  %1011 = vmatpush1.msra.mxu0 %v31
  %1012 = vmatprep.subr.mxu0 0.0
  %1013 = vmatpush1.msra.mxu0 %v32
  %1014 = vmatprep.subr.mxu0 0.0
  %1015 = vmatpush1.msra.mxu0 0.0
  %1016 = vmatprep.subr.mxu0 0.0
  %1017 = vmatpush1.msra.mxu0 0.0
  %1018 = vmatprep.subr.mxu0 0.0
  %1019 = vmatpush1.msra.mxu0 0.0
  %1020 = vmatprep.subr.mxu0 0.0
  %1021 = vmatpush1.msra.mxu0 0.0
  %1022 = vmatprep.subr.mxu0 0.0
  %1023 = vmatpush1.msra.mxu0 0.0
  %1024 = vmatprep.subr.mxu0 0.0
  %1025 = vmatpush1.msra.mxu0 0.0
  %1026 = vmatprep.subr.mxu0 0.0
  %1027 = vmatpush1.msra.mxu0 0.0
  %1028 = vmatprep.subr.mxu0 0.0
  %1029 = vmatpush1.msra.mxu0 0.0
  %1030 = vmatprep.subr.mxu0 0.0
  %1031 = vmatpush1.msra.mxu0 0.0
  %1032 = vmatprep.subr.mxu0 0.0
  %1033 = vmatpush1.msra.mxu0 0.0
  %1034 = vmatprep.subr.mxu0 0.0
  %1035 = vmatpush1.msra.mxu0 0.0
  %1036 = vmatprep.subr.mxu0 0.0
  %1037 = vmatpush1.msra.mxu0 0.0
  %1038 = vmatprep.subr.mxu0 0.0
  %1039 = vmatpush1.msra.mxu0 0.0
  %1040 = vmatprep.subr.mxu0 0.0
  %1041 = vmatpush1.msra.mxu0 0.0
  %1042 = vmatprep.subr.mxu0 0.0
  %1043 = vmatpush1.msra.mxu0 0.0
  %1044 = vmatprep.subr.mxu0 0.0
  %1045 = vmatpush1.msra.mxu0 0.0
  %1046 = vmatprep.subr.mxu0 0.0
  %1047 = vmatpush1.msra.mxu0 0.0
  %1048 = vmatprep.subr.mxu0 0.0
  %1049 = vmatpush1.msra.mxu0 0.0
  %1050 = vmatprep.subr.mxu0 0.0
  %1051 = vmatpush1.msra.mxu0 0.0
  %1052 = vmatprep.subr.mxu0 0.0
  %1053 = vmatpush1.msra.mxu0 0.0
  %1054 = vmatprep.subr.mxu0 0.0
  %1055 = vmatpush1.msra.mxu0 0.0
  %1056 = vmatprep.subr.mxu0 0.0
  %1057 = vmatpush1.msra.mxu0 0.0
  %1058 = vmatprep.subr.mxu0 0.0
  %1059 = vmatpush1.msra.mxu0 0.0
  %1060 = vmatprep.subr.mxu0 0.0
  %1061 = vmatpush1.msra.mxu0 0.0
  %1062 = vmatprep.subr.mxu0 0.0
  %1063 = vmatpush1.msra.mxu0 0.0
  %1064 = vmatprep.subr.mxu0 0.0
  %1065 = vmatpush1.msra.mxu0 0.0
  %1066 = vmatprep.subr.mxu0 0.0
  %1067 = vmatpush1.msra.mxu0 0.0
  %1068 = vmatprep.subr.mxu0 0.0
  %1069 = vmatpush1.msra.mxu0 0.0
  %1070 = vmatprep.mubr.f32.mxu0 0.0
  %1071 = vmatmul.mubr.f32.gmra.mrb[0].mxu0 %v1001
  %v1072 = vpop.f32.mrb[0].mxu0
  %v1073 = vadd.f32 %v45, %v1072
  %v1074 = vpop.f32.mrb[0].mxu0
  %1075 = vmatprep.mubr.f32.mxu0 0.0
  %1076 = vmatmul.mubr.f32.gmra.mrb[0].mxu0 %v1004
  %v1077 = vpop.f32.mrb[0].mxu0
  %v1078 = vadd.f32 %v45, %v1077
  %v1079 = vpop.f32.mrb[0].mxu0
  %1080 = vdwg.mxu0
  %v1081 = vmul.f32 %v912, %v1073
  %v1082 = vmul.f32 %v912, %v1078
  %v1083 = vadd.f32 %v741, %v1081
  %v1084 = vadd.f32 %v742, %v1082
  %v1086 = vsel %vm49, %v1083, 0
  %v1089 = vsel %vm49, %v1084, 0
  %1091 = vmatprep.subr.mxu0 0.0
  %1092 = vmatpush1.msra.mxu0 %v27
  %1093 = vmatprep.subr.mxu0 0.0
  %1094 = vmatpush1.msra.mxu0 %v28
  %1095 = vmatprep.subr.mxu0 0.0
  %1096 = vmatpush1.msra.mxu0 0.0
  %1097 = vmatprep.subr.mxu0 0.0
  %1098 = vmatpush1.msra.mxu0 0.0
  %1099 = vmatprep.subr.mxu0 0.0
  %1100 = vmatpush1.msra.mxu0 0.0
  %1101 = vmatprep.subr.mxu0 0.0
  %1102 = vmatpush1.msra.mxu0 0.0
  %1103 = vmatprep.subr.mxu0 0.0
  %1104 = vmatpush1.msra.mxu0 0.0
  %1105 = vmatprep.subr.mxu0 0.0
  %1106 = vmatpush1.msra.mxu0 0.0
  %1107 = vmatprep.subr.mxu0 0.0
  %1108 = vmatpush1.msra.mxu0 0.0
  %1109 = vmatprep.subr.mxu0 0.0
  %1110 = vmatpush1.msra.mxu0 0.0
  %1111 = vmatprep.subr.mxu0 0.0
  %1112 = vmatpush1.msra.mxu0 0.0
  %1113 = vmatprep.subr.mxu0 0.0
  %1114 = vmatpush1.msra.mxu0 0.0
  %1115 = vmatprep.subr.mxu0 0.0
  %1116 = vmatpush1.msra.mxu0 0.0
  %1117 = vmatprep.subr.mxu0 0.0
  %1118 = vmatpush1.msra.mxu0 0.0
  %1119 = vmatprep.subr.mxu0 0.0
  %1120 = vmatpush1.msra.mxu0 0.0
  %1121 = vmatprep.subr.mxu0 0.0
  %1122 = vmatpush1.msra.mxu0 0.0
  %1123 = vmatprep.subr.mxu0 0.0
  %1124 = vmatpush1.msra.mxu0 0.0
  %1125 = vmatprep.subr.mxu0 0.0
  %1126 = vmatpush1.msra.mxu0 0.0
  %1127 = vmatprep.subr.mxu0 0.0
  %1128 = vmatpush1.msra.mxu0 0.0
  %1129 = vmatprep.subr.mxu0 0.0
  %1130 = vmatpush1.msra.mxu0 0.0
  %1131 = vmatprep.subr.mxu0 0.0
  %1132 = vmatpush1.msra.mxu0 0.0
  %1133 = vmatprep.subr.mxu0 0.0
  %1134 = vmatpush1.msra.mxu0 0.0
  %1135 = vmatprep.subr.mxu0 0.0
  %1136 = vmatpush1.msra.mxu0 0.0
  %1137 = vmatprep.subr.mxu0 0.0
  %1138 = vmatpush1.msra.mxu0 0.0
  %1139 = vmatprep.subr.mxu0 0.0
  %1140 = vmatpush1.msra.mxu0 0.0
  %1141 = vmatprep.subr.mxu0 0.0
  %1142 = vmatpush1.msra.mxu0 0.0
  %1143 = vmatprep.subr.mxu0 0.0
  %1144 = vmatpush1.msra.mxu0 0.0
  %1145 = vmatprep.subr.mxu0 0.0
  %1146 = vmatpush1.msra.mxu0 0.0
  %1147 = vmatprep.subr.mxu0 0.0
  %1148 = vmatpush1.msra.mxu0 0.0
  %1149 = vmatprep.subr.mxu0 0.0
  %1150 = vmatpush1.msra.mxu0 0.0
  %1151 = vmatprep.subr.mxu0 0.0
  %1152 = vmatpush1.msra.mxu0 0.0
  %1153 = vmatprep.subr.mxu0 0.0
  %1154 = vmatpush1.msra.mxu0 0.0
  %1155 = vmatprep.mubr.f32.mxu0 0.0
  %1156 = vmatmul.mubr.f32.gmra.mrb[0].mxu0 %v1086
  %v1157 = vpop.f32.mrb[0].mxu0
  %v1158 = vadd.f32 %v38, %v1157
  %v1159 = vpop.f32.mrb[0].mxu0
  %1160 = vmatprep.mubr.f32.mxu0 0.0
  %1161 = vmatmul.mubr.f32.gmra.mrb[0].mxu0 %v1089
  %v1162 = vpop.f32.mrb[0].mxu0
  %v1163 = vadd.f32 %v38, %v1162
  %v1164 = vpop.f32.mrb[0].mxu0
  %1165 = vdwg.mxu0
  %v1166 = vtanh.pop %v1158
  %v1167 = vtanh.pop %v1163
  %v1169 = vsel %vm137, %v1166, 0
  %v1172 = vsel %vm137, %v1167, 0
  %1174 = vmatprep.subr.mxu0 0.0
  %1175 = vmatpush1.msra.mxu0 %v29
  %1176 = vmatprep.subr.mxu0 0.0
  %1177 = vmatpush1.msra.mxu0 %v30
  %1178 = vmatprep.subr.mxu0 0.0
  %1179 = vmatpush1.msra.mxu0 %v31
  %1180 = vmatprep.subr.mxu0 0.0
  %1181 = vmatpush1.msra.mxu0 %v32
  %1182 = vmatprep.subr.mxu0 0.0
  %1183 = vmatpush1.msra.mxu0 0.0
  %1184 = vmatprep.subr.mxu0 0.0
  %1185 = vmatpush1.msra.mxu0 0.0
  %1186 = vmatprep.subr.mxu0 0.0
  %1187 = vmatpush1.msra.mxu0 0.0
  %1188 = vmatprep.subr.mxu0 0.0
  %1189 = vmatpush1.msra.mxu0 0.0
  %1190 = vmatprep.subr.mxu0 0.0
  %1191 = vmatpush1.msra.mxu0 0.0
  %1192 = vmatprep.subr.mxu0 0.0
  %1193 = vmatpush1.msra.mxu0 0.0
  %1194 = vmatprep.subr.mxu0 0.0
  %1195 = vmatpush1.msra.mxu0 0.0
  %1196 = vmatprep.subr.mxu0 0.0
  %1197 = vmatpush1.msra.mxu0 0.0
  %1198 = vmatprep.subr.mxu0 0.0
  %1199 = vmatpush1.msra.mxu0 0.0
  %1200 = vmatprep.subr.mxu0 0.0
  %1201 = vmatpush1.msra.mxu0 0.0
  %1202 = vmatprep.subr.mxu0 0.0
  %1203 = vmatpush1.msra.mxu0 0.0
  %1204 = vmatprep.subr.mxu0 0.0
  %1205 = vmatpush1.msra.mxu0 0.0
  %1206 = vmatprep.subr.mxu0 0.0
  %1207 = vmatpush1.msra.mxu0 0.0
  %1208 = vmatprep.subr.mxu0 0.0
  %1209 = vmatpush1.msra.mxu0 0.0
  %1210 = vmatprep.subr.mxu0 0.0
  %1211 = vmatpush1.msra.mxu0 0.0
  %1212 = vmatprep.subr.mxu0 0.0
  %1213 = vmatpush1.msra.mxu0 0.0
  %1214 = vmatprep.subr.mxu0 0.0
  %1215 = vmatpush1.msra.mxu0 0.0
  %1216 = vmatprep.subr.mxu0 0.0
  %1217 = vmatpush1.msra.mxu0 0.0
  %1218 = vmatprep.subr.mxu0 0.0
  %1219 = vmatpush1.msra.mxu0 0.0
  %1220 = vmatprep.subr.mxu0 0.0
  %1221 = vmatpush1.msra.mxu0 0.0
  %1222 = vmatprep.subr.mxu0 0.0
  %1223 = vmatpush1.msra.mxu0 0.0
  %1224 = vmatprep.subr.mxu0 0.0
  %1225 = vmatpush1.msra.mxu0 0.0
  %1226 = vmatprep.subr.mxu0 0.0
  %1227 = vmatpush1.msra.mxu0 0.0
  %1228 = vmatprep.subr.mxu0 0.0
  %1229 = vmatpush1.msra.mxu0 0.0
  %1230 = vmatprep.subr.mxu0 0.0
  %1231 = vmatpush1.msra.mxu0 0.0
  %1232 = vmatprep.subr.mxu0 0.0
  %1233 = vmatpush1.msra.mxu0 0.0
  %1234 = vmatprep.subr.mxu0 0.0
  %1235 = vmatpush1.msra.mxu0 0.0
  %1236 = vmatprep.subr.mxu0 0.0
  %1237 = vmatpush1.msra.mxu0 0.0
  %1238 = vmatprep.mubr.f32.mxu0 0.0
  %1239 = vmatmul.mubr.f32.gmra.mrb[0].mxu0 %v1169
  %v1240 = vpop.f32.mrb[0].mxu0
  %v1241 = vadd.f32 %v45, %v1240
  %v1242 = vpop.f32.mrb[0].mxu0
  %1243 = vmatprep.mubr.f32.mxu0 0.0
  %1244 = vmatmul.mubr.f32.gmra.mrb[0].mxu0 %v1172
  %v1245 = vpop.f32.mrb[0].mxu0
  %v1246 = vadd.f32 %v45, %v1245
  %v1247 = vpop.f32.mrb[0].mxu0
  %1248 = vdwg.mxu0
  %v1249 = vstv %s746
  %v1250 = vmul.f32 %v1249, %v1241
  %v1251 = vmul.f32 %v1249, %v1246
  %v1252 = vadd.f32 %v741, %v1250
  %v1253 = vadd.f32 %v742, %v1251
  %v1255 = vsel %vm49, %v1252, 0
  %v1258 = vsel %vm49, %v1253, 0
  %1260 = vmatprep.subr.mxu0 0.0
  %1261 = vmatpush1.msra.mxu0 %v27
  %1262 = vmatprep.subr.mxu0 0.0
  %1263 = vmatpush1.msra.mxu0 %v28
  %1264 = vmatprep.subr.mxu0 0.0
  %1265 = vmatpush1.msra.mxu0 0.0
  %1266 = vmatprep.subr.mxu0 0.0
  %1267 = vmatpush1.msra.mxu0 0.0
  %1268 = vmatprep.subr.mxu0 0.0
  %1269 = vmatpush1.msra.mxu0 0.0
  %1270 = vmatprep.subr.mxu0 0.0
  %1271 = vmatpush1.msra.mxu0 0.0
  %1272 = vmatprep.subr.mxu0 0.0
  %1273 = vmatpush1.msra.mxu0 0.0
  %1274 = vmatprep.subr.mxu0 0.0
  %1275 = vmatpush1.msra.mxu0 0.0
  %1276 = vmatprep.subr.mxu0 0.0
  %1277 = vmatpush1.msra.mxu0 0.0
  %1278 = vmatprep.subr.mxu0 0.0
  %1279 = vmatpush1.msra.mxu0 0.0
  %1280 = vmatprep.subr.mxu0 0.0
  %1281 = vmatpush1.msra.mxu0 0.0
  %1282 = vmatprep.subr.mxu0 0.0
  %1283 = vmatpush1.msra.mxu0 0.0
  %1284 = vmatprep.subr.mxu0 0.0
  %1285 = vmatpush1.msra.mxu0 0.0
  %1286 = vmatprep.subr.mxu0 0.0
  %1287 = vmatpush1.msra.mxu0 0.0
  %1288 = vmatprep.subr.mxu0 0.0
  %1289 = vmatpush1.msra.mxu0 0.0
  %1290 = vmatprep.subr.mxu0 0.0
  %1291 = vmatpush1.msra.mxu0 0.0
  %1292 = vmatprep.subr.mxu0 0.0
  %1293 = vmatpush1.msra.mxu0 0.0
  %1294 = vmatprep.subr.mxu0 0.0
  %1295 = vmatpush1.msra.mxu0 0.0
  %1296 = vmatprep.subr.mxu0 0.0
  %1297 = vmatpush1.msra.mxu0 0.0
  %1298 = vmatprep.subr.mxu0 0.0
  %1299 = vmatpush1.msra.mxu0 0.0
  %1300 = vmatprep.subr.mxu0 0.0
  %1301 = vmatpush1.msra.mxu0 0.0
  %1302 = vmatprep.subr.mxu0 0.0
  %1303 = vmatpush1.msra.mxu0 0.0
  %1304 = vmatprep.subr.mxu0 0.0
  %1305 = vmatpush1.msra.mxu0 0.0
  %1306 = vmatprep.subr.mxu0 0.0
  %1307 = vmatpush1.msra.mxu0 0.0
  %1308 = vmatprep.subr.mxu0 0.0
  %1309 = vmatpush1.msra.mxu0 0.0
  %1310 = vmatprep.subr.mxu0 0.0
  %1311 = vmatpush1.msra.mxu0 0.0
  %1312 = vmatprep.subr.mxu0 0.0
  %1313 = vmatpush1.msra.mxu0 0.0
  %1314 = vmatprep.subr.mxu0 0.0
  %1315 = vmatpush1.msra.mxu0 0.0
  %1316 = vmatprep.subr.mxu0 0.0
  %1317 = vmatpush1.msra.mxu0 0.0
  %1318 = vmatprep.subr.mxu0 0.0
  %1319 = vmatpush1.msra.mxu0 0.0
  %1320 = vmatprep.subr.mxu0 0.0
  %1321 = vmatpush1.msra.mxu0 0.0
  %1322 = vmatprep.subr.mxu0 0.0
  %1323 = vmatpush1.msra.mxu0 0.0
  %1324 = vmatprep.mubr.f32.mxu0 0.0
  %1325 = vmatmul.mubr.f32.gmra.mrb[0].mxu0 %v1255
  %v1326 = vpop.f32.mrb[0].mxu0
  %v1327 = vadd.f32 %v38, %v1326
  %v1328 = vpop.f32.mrb[0].mxu0
  %1329 = vmatprep.mubr.f32.mxu0 0.0
  %1330 = vmatmul.mubr.f32.gmra.mrb[0].mxu0 %v1258
  %v1331 = vpop.f32.mrb[0].mxu0
  %v1332 = vadd.f32 %v38, %v1331
  %v1333 = vpop.f32.mrb[0].mxu0
  %1334 = vdwg.mxu0
  %v1335 = vtanh.pop %v1327
  %v1336 = vtanh.pop %v1332
  %v1338 = vsel %vm137, %v1335, 0
  %v1341 = vsel %vm137, %v1336, 0
  %1343 = vmatprep.subr.mxu0 0.0
  %1344 = vmatpush1.msra.mxu0 %v29
  %1345 = vmatprep.subr.mxu0 0.0
  %1346 = vmatpush1.msra.mxu0 %v30
  %1347 = vmatprep.subr.mxu0 0.0
  %1348 = vmatpush1.msra.mxu0 %v31
  %1349 = vmatprep.subr.mxu0 0.0
  %1350 = vmatpush1.msra.mxu0 %v32
  %1351 = vmatprep.subr.mxu0 0.0
  %1352 = vmatpush1.msra.mxu0 0.0
  %1353 = vmatprep.subr.mxu0 0.0
  %1354 = vmatpush1.msra.mxu0 0.0
  %1355 = vmatprep.subr.mxu0 0.0
  %1356 = vmatpush1.msra.mxu0 0.0
  %1357 = vmatprep.subr.mxu0 0.0
  %1358 = vmatpush1.msra.mxu0 0.0
  %1359 = vmatprep.subr.mxu0 0.0
  %1360 = vmatpush1.msra.mxu0 0.0
  %1361 = vmatprep.subr.mxu0 0.0
  %1362 = vmatpush1.msra.mxu0 0.0
  %1363 = vmatprep.subr.mxu0 0.0
  %1364 = vmatpush1.msra.mxu0 0.0
  %1365 = vmatprep.subr.mxu0 0.0
  %1366 = vmatpush1.msra.mxu0 0.0
  %1367 = vmatprep.subr.mxu0 0.0
  %1368 = vmatpush1.msra.mxu0 0.0
  %1369 = vmatprep.subr.mxu0 0.0
  %1370 = vmatpush1.msra.mxu0 0.0
  %1371 = vmatprep.subr.mxu0 0.0
  %1372 = vmatpush1.msra.mxu0 0.0
  %1373 = vmatprep.subr.mxu0 0.0
  %1374 = vmatpush1.msra.mxu0 0.0
  %1375 = vmatprep.subr.mxu0 0.0
  %1376 = vmatpush1.msra.mxu0 0.0
  %1377 = vmatprep.subr.mxu0 0.0
  %1378 = vmatpush1.msra.mxu0 0.0
  %1379 = vmatprep.subr.mxu0 0.0
  %1380 = vmatpush1.msra.mxu0 0.0
  %1381 = vmatprep.subr.mxu0 0.0
  %1382 = vmatpush1.msra.mxu0 0.0
  %1383 = vmatprep.subr.mxu0 0.0
  %1384 = vmatpush1.msra.mxu0 0.0
  %1385 = vmatprep.subr.mxu0 0.0
  %1386 = vmatpush1.msra.mxu0 0.0
  %1387 = vmatprep.subr.mxu0 0.0
  %1388 = vmatpush1.msra.mxu0 0.0
  %1389 = vmatprep.subr.mxu0 0.0
  %1390 = vmatpush1.msra.mxu0 0.0
  %1391 = vmatprep.subr.mxu0 0.0
  %1392 = vmatpush1.msra.mxu0 0.0
  %1393 = vmatprep.subr.mxu0 0.0
  %1394 = vmatpush1.msra.mxu0 0.0
  %1395 = vmatprep.subr.mxu0 0.0
  %1396 = vmatpush1.msra.mxu0 0.0
  %1397 = vmatprep.subr.mxu0 0.0
  %1398 = vmatpush1.msra.mxu0 0.0
  %1399 = vmatprep.subr.mxu0 0.0
  %1400 = vmatpush1.msra.mxu0 0.0
  %1401 = vmatprep.subr.mxu0 0.0
  %1402 = vmatpush1.msra.mxu0 0.0
  %1403 = vmatprep.subr.mxu0 0.0
  %1404 = vmatpush1.msra.mxu0 0.0
  %1405 = vmatprep.subr.mxu0 0.0
  %1406 = vmatpush1.msra.mxu0 0.0
  %1407 = vmatprep.mubr.f32.mxu0 0.0
  %1408 = vmatmul.mubr.f32.gmra.mrb[0].mxu0 %v1338
  %v1409 = vpop.f32.mrb[0].mxu0
  %v1410 = vadd.f32 %v45, %v1409
  %v1411 = vpop.f32.mrb[0].mxu0
  %1412 = vmatprep.mubr.f32.mxu0 0.0
  %1413 = vmatmul.mubr.f32.gmra.mrb[0].mxu0 %v1341
  %v1414 = vpop.f32.mrb[0].mxu0
  %v1415 = vadd.f32 %v45, %v1414
  %v1416 = vpop.f32.mrb[0].mxu0
  %1417 = vdwg.mxu0
  %v1418 = vrcp.pop 6.0
  %s1419 = vtos %v1418
  %s1420 = smul.f32 %s746, %s1419
  %v1421 = vmul.f32 %v1073, 2.0
  %v1422 = vmul.f32 %v1078, 2.0
  %v1423 = vadd.f32 %v904, %v1421
  %v1424 = vadd.f32 %v909, %v1422
  %v1425 = vmul.f32 %v1241, 2.0
  %v1426 = vmul.f32 %v1246, 2.0
  %v1427 = vadd.f32 %v1423, %v1425
  %v1428 = vadd.f32 %v1424, %v1426
  %v1429 = vadd.f32 %v1427, %v1410
  %v1430 = vadd.f32 %v1428, %v1415
  %v1431 = vstv %s1420
  %v1432 = vmul.f32 %v1431, %v1429
  %v1433 = vmul.f32 %v1431, %v1430
  %v1434 = vadd.f32 %v741, %v1432
  %v1435 = vadd.f32 %v742, %v1433
  %s1436 = scalar_lea.vmem %s6, 32
  %1437 = vst.msk [vmem:[%s1436] sm:$0xff] %vm49, %v1434
  %1438 = vst.msk [vmem:[%s1436 + $0x8] sm:$0xff] %vm49, %v1435
  %s1439 = sld [smem:[#allocation3 + $0x2]]
  %s1440 = smul.f32 %s1439, 0.5
  %v1442 = vsel %vm49, %v1434, 0
  %v1445 = vsel %vm49, %v1435, 0
  %1447 = vmatprep.subr.mxu0 0.0
  %1448 = vmatpush1.msra.mxu0 %v27
  %1449 = vmatprep.subr.mxu0 0.0
  %1450 = vmatpush1.msra.mxu0 %v28
  %1451 = vmatprep.subr.mxu0 0.0
  %1452 = vmatpush1.msra.mxu0 0.0
  %1453 = vmatprep.subr.mxu0 0.0
  %1454 = vmatpush1.msra.mxu0 0.0
  %1455 = vmatprep.subr.mxu0 0.0
  %1456 = vmatpush1.msra.mxu0 0.0
  %1457 = vmatprep.subr.mxu0 0.0
  %1458 = vmatpush1.msra.mxu0 0.0
  %1459 = vmatprep.subr.mxu0 0.0
  %1460 = vmatpush1.msra.mxu0 0.0
  %1461 = vmatprep.subr.mxu0 0.0
  %1462 = vmatpush1.msra.mxu0 0.0
  %1463 = vmatprep.subr.mxu0 0.0
  %1464 = vmatpush1.msra.mxu0 0.0
  %1465 = vmatprep.subr.mxu0 0.0
  %1466 = vmatpush1.msra.mxu0 0.0
  %1467 = vmatprep.subr.mxu0 0.0
  %1468 = vmatpush1.msra.mxu0 0.0
  %1469 = vmatprep.subr.mxu0 0.0
  %1470 = vmatpush1.msra.mxu0 0.0
  %1471 = vmatprep.subr.mxu0 0.0
  %1472 = vmatpush1.msra.mxu0 0.0
  %1473 = vmatprep.subr.mxu0 0.0
  %1474 = vmatpush1.msra.mxu0 0.0
  %1475 = vmatprep.subr.mxu0 0.0
  %1476 = vmatpush1.msra.mxu0 0.0
  %1477 = vmatprep.subr.mxu0 0.0
  %1478 = vmatpush1.msra.mxu0 0.0
  %1479 = vmatprep.subr.mxu0 0.0
  %1480 = vmatpush1.msra.mxu0 0.0
  %1481 = vmatprep.subr.mxu0 0.0
  %1482 = vmatpush1.msra.mxu0 0.0
  %1483 = vmatprep.subr.mxu0 0.0
  %1484 = vmatpush1.msra.mxu0 0.0
  %1485 = vmatprep.subr.mxu0 0.0
  %1486 = vmatpush1.msra.mxu0 0.0
  %1487 = vmatprep.subr.mxu0 0.0
  %1488 = vmatpush1.msra.mxu0 0.0
  %1489 = vmatprep.subr.mxu0 0.0
  %1490 = vmatpush1.msra.mxu0 0.0
  %1491 = vmatprep.subr.mxu0 0.0
  %1492 = vmatpush1.msra.mxu0 0.0
  %1493 = vmatprep.subr.mxu0 0.0
  %1494 = vmatpush1.msra.mxu0 0.0
  %1495 = vmatprep.subr.mxu0 0.0
  %1496 = vmatpush1.msra.mxu0 0.0
  %1497 = vmatprep.subr.mxu0 0.0
  %1498 = vmatpush1.msra.mxu0 0.0
  %1499 = vmatprep.subr.mxu0 0.0
  %1500 = vmatpush1.msra.mxu0 0.0
  %1501 = vmatprep.subr.mxu0 0.0
  %1502 = vmatpush1.msra.mxu0 0.0
  %1503 = vmatprep.subr.mxu0 0.0
  %1504 = vmatpush1.msra.mxu0 0.0
  %1505 = vmatprep.subr.mxu0 0.0
  %1506 = vmatpush1.msra.mxu0 0.0
  %1507 = vmatprep.subr.mxu0 0.0
  %1508 = vmatpush1.msra.mxu0 0.0
  %1509 = vmatprep.subr.mxu0 0.0
  %1510 = vmatpush1.msra.mxu0 0.0
  %1511 = vmatprep.mubr.f32.mxu0 0.0
  %1512 = vmatmul.mubr.f32.gmra.mrb[0].mxu0 %v1442
  %v1513 = vpop.f32.mrb[0].mxu0
  %v1514 = vadd.f32 %v38, %v1513
  %v1515 = vpop.f32.mrb[0].mxu0
  %1516 = vmatprep.mubr.f32.mxu0 0.0
  %1517 = vmatmul.mubr.f32.gmra.mrb[0].mxu0 %v1445
  %v1518 = vpop.f32.mrb[0].mxu0
  %v1519 = vadd.f32 %v38, %v1518
  %v1520 = vpop.f32.mrb[0].mxu0
  %1521 = vdwg.mxu0
  %v1522 = vtanh.pop %v1514
  %v1523 = vtanh.pop %v1519
  %v1525 = vsel %vm137, %v1522, 0
  %v1528 = vsel %vm137, %v1523, 0
  %1530 = vmatprep.subr.mxu0 0.0
  %1531 = vmatpush1.msra.mxu0 %v29
  %1532 = vmatprep.subr.mxu0 0.0
  %1533 = vmatpush1.msra.mxu0 %v30
  %1534 = vmatprep.subr.mxu0 0.0
  %1535 = vmatpush1.msra.mxu0 %v31
  %1536 = vmatprep.subr.mxu0 0.0
  %1537 = vmatpush1.msra.mxu0 %v32
  %1538 = vmatprep.subr.mxu0 0.0
  %1539 = vmatpush1.msra.mxu0 0.0
  %1540 = vmatprep.subr.mxu0 0.0
  %1541 = vmatpush1.msra.mxu0 0.0
  %1542 = vmatprep.subr.mxu0 0.0
  %1543 = vmatpush1.msra.mxu0 0.0
  %1544 = vmatprep.subr.mxu0 0.0
  %1545 = vmatpush1.msra.mxu0 0.0
  %1546 = vmatprep.subr.mxu0 0.0
  %1547 = vmatpush1.msra.mxu0 0.0
  %1548 = vmatprep.subr.mxu0 0.0
  %1549 = vmatpush1.msra.mxu0 0.0
  %1550 = vmatprep.subr.mxu0 0.0
  %1551 = vmatpush1.msra.mxu0 0.0
  %1552 = vmatprep.subr.mxu0 0.0
  %1553 = vmatpush1.msra.mxu0 0.0
  %1554 = vmatprep.subr.mxu0 0.0
  %1555 = vmatpush1.msra.mxu0 0.0
  %1556 = vmatprep.subr.mxu0 0.0
  %1557 = vmatpush1.msra.mxu0 0.0
  %1558 = vmatprep.subr.mxu0 0.0
  %1559 = vmatpush1.msra.mxu0 0.0
  %1560 = vmatprep.subr.mxu0 0.0
  %1561 = vmatpush1.msra.mxu0 0.0
  %1562 = vmatprep.subr.mxu0 0.0
  %1563 = vmatpush1.msra.mxu0 0.0
  %1564 = vmatprep.subr.mxu0 0.0
  %1565 = vmatpush1.msra.mxu0 0.0
  %1566 = vmatprep.subr.mxu0 0.0
  %1567 = vmatpush1.msra.mxu0 0.0
  %1568 = vmatprep.subr.mxu0 0.0
  %1569 = vmatpush1.msra.mxu0 0.0
  %1570 = vmatprep.subr.mxu0 0.0
  %1571 = vmatpush1.msra.mxu0 0.0
  %1572 = vmatprep.subr.mxu0 0.0
  %1573 = vmatpush1.msra.mxu0 0.0
  %1574 = vmatprep.subr.mxu0 0.0
  %1575 = vmatpush1.msra.mxu0 0.0
  %1576 = vmatprep.subr.mxu0 0.0
  %1577 = vmatpush1.msra.mxu0 0.0
  %1578 = vmatprep.subr.mxu0 0.0
  %1579 = vmatpush1.msra.mxu0 0.0
  %1580 = vmatprep.subr.mxu0 0.0
  %1581 = vmatpush1.msra.mxu0 0.0
  %1582 = vmatprep.subr.mxu0 0.0
  %1583 = vmatpush1.msra.mxu0 0.0
  %1584 = vmatprep.subr.mxu0 0.0
  %1585 = vmatpush1.msra.mxu0 0.0
  %1586 = vmatprep.subr.mxu0 0.0
  %1587 = vmatpush1.msra.mxu0 0.0
  %1588 = vmatprep.subr.mxu0 0.0
  %1589 = vmatpush1.msra.mxu0 0.0
  %1590 = vmatprep.subr.mxu0 0.0
  %1591 = vmatpush1.msra.mxu0 0.0
  %1592 = vmatprep.subr.mxu0 0.0
  %1593 = vmatpush1.msra.mxu0 0.0
  %1594 = vmatprep.mubr.f32.mxu0 0.0
  %1595 = vmatmul.mubr.f32.gmra.mrb[0].mxu0 %v1525
  %v1596 = vpop.f32.mrb[0].mxu0
  %v1597 = vadd.f32 %v45, %v1596
  %v1598 = vpop.f32.mrb[0].mxu0
  %1599 = vmatprep.mubr.f32.mxu0 0.0
  %1600 = vmatmul.mubr.f32.gmra.mrb[0].mxu0 %v1528
  %v1601 = vpop.f32.mrb[0].mxu0
  %v1602 = vadd.f32 %v45, %v1601
  %v1603 = vpop.f32.mrb[0].mxu0
  %1604 = vdwg.mxu0
  %v1605 = vstv %s1440
  %v1606 = vmul.f32 %v1605, %v1597
  %v1607 = vmul.f32 %v1605, %v1602
  %v1608 = vadd.f32 %v1434, %v1606
  %v1609 = vadd.f32 %v1435, %v1607
  %v1611 = vsel %vm49, %v1608, 0
  %v1614 = vsel %vm49, %v1609, 0
  %1616 = vmatprep.subr.mxu0 0.0
  %1617 = vmatpush1.msra.mxu0 %v27
  %1618 = vmatprep.subr.mxu0 0.0
  %1619 = vmatpush1.msra.mxu0 %v28
  %1620 = vmatprep.subr.mxu0 0.0
  %1621 = vmatpush1.msra.mxu0 0.0
  %1622 = vmatprep.subr.mxu0 0.0
  %1623 = vmatpush1.msra.mxu0 0.0
  %1624 = vmatprep.subr.mxu0 0.0
  %1625 = vmatpush1.msra.mxu0 0.0
  %1626 = vmatprep.subr.mxu0 0.0
  %1627 = vmatpush1.msra.mxu0 0.0
  %1628 = vmatprep.subr.mxu0 0.0
  %1629 = vmatpush1.msra.mxu0 0.0
  %1630 = vmatprep.subr.mxu0 0.0
  %1631 = vmatpush1.msra.mxu0 0.0
  %1632 = vmatprep.subr.mxu0 0.0
  %1633 = vmatpush1.msra.mxu0 0.0
  %1634 = vmatprep.subr.mxu0 0.0
  %1635 = vmatpush1.msra.mxu0 0.0
  %1636 = vmatprep.subr.mxu0 0.0
  %1637 = vmatpush1.msra.mxu0 0.0
  %1638 = vmatprep.subr.mxu0 0.0
  %1639 = vmatpush1.msra.mxu0 0.0
  %1640 = vmatprep.subr.mxu0 0.0
  %1641 = vmatpush1.msra.mxu0 0.0
  %1642 = vmatprep.subr.mxu0 0.0
  %1643 = vmatpush1.msra.mxu0 0.0
  %1644 = vmatprep.subr.mxu0 0.0
  %1645 = vmatpush1.msra.mxu0 0.0
  %1646 = vmatprep.subr.mxu0 0.0
  %1647 = vmatpush1.msra.mxu0 0.0
  %1648 = vmatprep.subr.mxu0 0.0
  %1649 = vmatpush1.msra.mxu0 0.0
  %1650 = vmatprep.subr.mxu0 0.0
  %1651 = vmatpush1.msra.mxu0 0.0
  %1652 = vmatprep.subr.mxu0 0.0
  %1653 = vmatpush1.msra.mxu0 0.0
  %1654 = vmatprep.subr.mxu0 0.0
  %1655 = vmatpush1.msra.mxu0 0.0
  %1656 = vmatprep.subr.mxu0 0.0
  %1657 = vmatpush1.msra.mxu0 0.0
  %1658 = vmatprep.subr.mxu0 0.0
  %1659 = vmatpush1.msra.mxu0 0.0
  %1660 = vmatprep.subr.mxu0 0.0
  %1661 = vmatpush1.msra.mxu0 0.0
  %1662 = vmatprep.subr.mxu0 0.0
  %1663 = vmatpush1.msra.mxu0 0.0
  %1664 = vmatprep.subr.mxu0 0.0
  %1665 = vmatpush1.msra.mxu0 0.0
  %1666 = vmatprep.subr.mxu0 0.0
  %1667 = vmatpush1.msra.mxu0 0.0
  %1668 = vmatprep.subr.mxu0 0.0
  %1669 = vmatpush1.msra.mxu0 0.0
  %1670 = vmatprep.subr.mxu0 0.0
  %1671 = vmatpush1.msra.mxu0 0.0
  %1672 = vmatprep.subr.mxu0 0.0
  %1673 = vmatpush1.msra.mxu0 0.0
  %1674 = vmatprep.subr.mxu0 0.0
  %1675 = vmatpush1.msra.mxu0 0.0
  %1676 = vmatprep.subr.mxu0 0.0
  %1677 = vmatpush1.msra.mxu0 0.0
  %1678 = vmatprep.subr.mxu0 0.0
  %1679 = vmatpush1.msra.mxu0 0.0
  %1680 = vmatprep.mubr.f32.mxu0 0.0
  %1681 = vmatmul.mubr.f32.gmra.mrb[0].mxu0 %v1611
  %v1682 = vpop.f32.mrb[0].mxu0
  %v1683 = vadd.f32 %v38, %v1682
  %v1684 = vpop.f32.mrb[0].mxu0
  %1685 = vmatprep.mubr.f32.mxu0 0.0
  %1686 = vmatmul.mubr.f32.gmra.mrb[0].mxu0 %v1614
  %v1687 = vpop.f32.mrb[0].mxu0
  %v1688 = vadd.f32 %v38, %v1687
  %v1689 = vpop.f32.mrb[0].mxu0
  %1690 = vdwg.mxu0
  %v1691 = vtanh.pop %v1683
  %v1692 = vtanh.pop %v1688
  %v1694 = vsel %vm137, %v1691, 0
  %v1697 = vsel %vm137, %v1692, 0
  %1699 = vmatprep.subr.mxu0 0.0
  %1700 = vmatpush1.msra.mxu0 %v29
  %1701 = vmatprep.subr.mxu0 0.0
  %1702 = vmatpush1.msra.mxu0 %v30
  %1703 = vmatprep.subr.mxu0 0.0
  %1704 = vmatpush1.msra.mxu0 %v31
  %1705 = vmatprep.subr.mxu0 0.0
  %1706 = vmatpush1.msra.mxu0 %v32
  %1707 = vmatprep.subr.mxu0 0.0
  %1708 = vmatpush1.msra.mxu0 0.0
  %1709 = vmatprep.subr.mxu0 0.0
  %1710 = vmatpush1.msra.mxu0 0.0
  %1711 = vmatprep.subr.mxu0 0.0
  %1712 = vmatpush1.msra.mxu0 0.0
  %1713 = vmatprep.subr.mxu0 0.0
  %1714 = vmatpush1.msra.mxu0 0.0
  %1715 = vmatprep.subr.mxu0 0.0
  %1716 = vmatpush1.msra.mxu0 0.0
  %1717 = vmatprep.subr.mxu0 0.0
  %1718 = vmatpush1.msra.mxu0 0.0
  %1719 = vmatprep.subr.mxu0 0.0
  %1720 = vmatpush1.msra.mxu0 0.0
  %1721 = vmatprep.subr.mxu0 0.0
  %1722 = vmatpush1.msra.mxu0 0.0
  %1723 = vmatprep.subr.mxu0 0.0
  %1724 = vmatpush1.msra.mxu0 0.0
  %1725 = vmatprep.subr.mxu0 0.0
  %1726 = vmatpush1.msra.mxu0 0.0
  %1727 = vmatprep.subr.mxu0 0.0
  %1728 = vmatpush1.msra.mxu0 0.0
  %1729 = vmatprep.subr.mxu0 0.0
  %1730 = vmatpush1.msra.mxu0 0.0
  %1731 = vmatprep.subr.mxu0 0.0
  %1732 = vmatpush1.msra.mxu0 0.0
  %1733 = vmatprep.subr.mxu0 0.0
  %1734 = vmatpush1.msra.mxu0 0.0
  %1735 = vmatprep.subr.mxu0 0.0
  %1736 = vmatpush1.msra.mxu0 0.0
  %1737 = vmatprep.subr.mxu0 0.0
  %1738 = vmatpush1.msra.mxu0 0.0
  %1739 = vmatprep.subr.mxu0 0.0
  %1740 = vmatpush1.msra.mxu0 0.0
  %1741 = vmatprep.subr.mxu0 0.0
  %1742 = vmatpush1.msra.mxu0 0.0
  %1743 = vmatprep.subr.mxu0 0.0
  %1744 = vmatpush1.msra.mxu0 0.0
  %1745 = vmatprep.subr.mxu0 0.0
  %1746 = vmatpush1.msra.mxu0 0.0
  %1747 = vmatprep.subr.mxu0 0.0
  %1748 = vmatpush1.msra.mxu0 0.0
  %1749 = vmatprep.subr.mxu0 0.0
  %1750 = vmatpush1.msra.mxu0 0.0
  %1751 = vmatprep.subr.mxu0 0.0
  %1752 = vmatpush1.msra.mxu0 0.0
  %1753 = vmatprep.subr.mxu0 0.0
  %1754 = vmatpush1.msra.mxu0 0.0
  %1755 = vmatprep.subr.mxu0 0.0
  %1756 = vmatpush1.msra.mxu0 0.0
  %1757 = vmatprep.subr.mxu0 0.0
  %1758 = vmatpush1.msra.mxu0 0.0
  %1759 = vmatprep.subr.mxu0 0.0
  %1760 = vmatpush1.msra.mxu0 0.0
  %1761 = vmatprep.subr.mxu0 0.0
  %1762 = vmatpush1.msra.mxu0 0.0
  %1763 = vmatprep.mubr.f32.mxu0 0.0
  %1764 = vmatmul.mubr.f32.gmra.mrb[0].mxu0 %v1694
  %v1765 = vpop.f32.mrb[0].mxu0
  %v1766 = vadd.f32 %v45, %v1765
  %v1767 = vpop.f32.mrb[0].mxu0
  %1768 = vmatprep.mubr.f32.mxu0 0.0
  %1769 = vmatmul.mubr.f32.gmra.mrb[0].mxu0 %v1697
  %v1770 = vpop.f32.mrb[0].mxu0
  %v1771 = vadd.f32 %v45, %v1770
  %v1772 = vpop.f32.mrb[0].mxu0
  %1773 = vdwg.mxu0
  %v1774 = vmul.f32 %v1605, %v1766
  %v1775 = vmul.f32 %v1605, %v1771
  %v1776 = vadd.f32 %v1434, %v1774
  %v1777 = vadd.f32 %v1435, %v1775
  %v1779 = vsel %vm49, %v1776, 0
  %v1782 = vsel %vm49, %v1777, 0
  %1784 = vmatprep.subr.mxu0 0.0
  %1785 = vmatpush1.msra.mxu0 %v27
  %1786 = vmatprep.subr.mxu0 0.0
  %1787 = vmatpush1.msra.mxu0 %v28
  %1788 = vmatprep.subr.mxu0 0.0
  %1789 = vmatpush1.msra.mxu0 0.0
  %1790 = vmatprep.subr.mxu0 0.0
  %1791 = vmatpush1.msra.mxu0 0.0
  %1792 = vmatprep.subr.mxu0 0.0
  %1793 = vmatpush1.msra.mxu0 0.0
  %1794 = vmatprep.subr.mxu0 0.0
  %1795 = vmatpush1.msra.mxu0 0.0
  %1796 = vmatprep.subr.mxu0 0.0
  %1797 = vmatpush1.msra.mxu0 0.0
  %1798 = vmatprep.subr.mxu0 0.0
  %1799 = vmatpush1.msra.mxu0 0.0
  %1800 = vmatprep.subr.mxu0 0.0
  %1801 = vmatpush1.msra.mxu0 0.0
  %1802 = vmatprep.subr.mxu0 0.0
  %1803 = vmatpush1.msra.mxu0 0.0
  %1804 = vmatprep.subr.mxu0 0.0
  %1805 = vmatpush1.msra.mxu0 0.0
  %1806 = vmatprep.subr.mxu0 0.0
  %1807 = vmatpush1.msra.mxu0 0.0
  %1808 = vmatprep.subr.mxu0 0.0
  %1809 = vmatpush1.msra.mxu0 0.0
  %1810 = vmatprep.subr.mxu0 0.0
  %1811 = vmatpush1.msra.mxu0 0.0
  %1812 = vmatprep.subr.mxu0 0.0
  %1813 = vmatpush1.msra.mxu0 0.0
  %1814 = vmatprep.subr.mxu0 0.0
  %1815 = vmatpush1.msra.mxu0 0.0
  %1816 = vmatprep.subr.mxu0 0.0
  %1817 = vmatpush1.msra.mxu0 0.0
  %1818 = vmatprep.subr.mxu0 0.0
  %1819 = vmatpush1.msra.mxu0 0.0
  %1820 = vmatprep.subr.mxu0 0.0
  %1821 = vmatpush1.msra.mxu0 0.0
  %1822 = vmatprep.subr.mxu0 0.0
  %1823 = vmatpush1.msra.mxu0 0.0
  %1824 = vmatprep.subr.mxu0 0.0
  %1825 = vmatpush1.msra.mxu0 0.0
  %1826 = vmatprep.subr.mxu0 0.0
  %1827 = vmatpush1.msra.mxu0 0.0
  %1828 = vmatprep.subr.mxu0 0.0
  %1829 = vmatpush1.msra.mxu0 0.0
  %1830 = vmatprep.subr.mxu0 0.0
  %1831 = vmatpush1.msra.mxu0 0.0
  %1832 = vmatprep.subr.mxu0 0.0
  %1833 = vmatpush1.msra.mxu0 0.0
  %1834 = vmatprep.subr.mxu0 0.0
  %1835 = vmatpush1.msra.mxu0 0.0
  %1836 = vmatprep.subr.mxu0 0.0
  %1837 = vmatpush1.msra.mxu0 0.0
  %1838 = vmatprep.subr.mxu0 0.0
  %1839 = vmatpush1.msra.mxu0 0.0
  %1840 = vmatprep.subr.mxu0 0.0
  %1841 = vmatpush1.msra.mxu0 0.0
  %1842 = vmatprep.subr.mxu0 0.0
  %1843 = vmatpush1.msra.mxu0 0.0
  %1844 = vmatprep.subr.mxu0 0.0
  %1845 = vmatpush1.msra.mxu0 0.0
  %1846 = vmatprep.subr.mxu0 0.0
  %1847 = vmatpush1.msra.mxu0 0.0
  %1848 = vmatprep.mubr.f32.mxu0 0.0
  %1849 = vmatmul.mubr.f32.gmra.mrb[0].mxu0 %v1779
  %v1850 = vpop.f32.mrb[0].mxu0
  %v1851 = vadd.f32 %v38, %v1850
  %v1852 = vpop.f32.mrb[0].mxu0
  %1853 = vmatprep.mubr.f32.mxu0 0.0
  %1854 = vmatmul.mubr.f32.gmra.mrb[0].mxu0 %v1782
  %v1855 = vpop.f32.mrb[0].mxu0
  %v1856 = vadd.f32 %v38, %v1855
  %v1857 = vpop.f32.mrb[0].mxu0
  %1858 = vdwg.mxu0
  %v1859 = vtanh.pop %v1851
  %v1860 = vtanh.pop %v1856
  %v1862 = vsel %vm137, %v1859, 0
  %v1865 = vsel %vm137, %v1860, 0
  %1867 = vmatprep.subr.mxu0 0.0
  %1868 = vmatpush1.msra.mxu0 %v29
  %1869 = vmatprep.subr.mxu0 0.0
  %1870 = vmatpush1.msra.mxu0 %v30
  %1871 = vmatprep.subr.mxu0 0.0
  %1872 = vmatpush1.msra.mxu0 %v31
  %1873 = vmatprep.subr.mxu0 0.0
  %1874 = vmatpush1.msra.mxu0 %v32
  %1875 = vmatprep.subr.mxu0 0.0
  %1876 = vmatpush1.msra.mxu0 0.0
  %1877 = vmatprep.subr.mxu0 0.0
  %1878 = vmatpush1.msra.mxu0 0.0
  %1879 = vmatprep.subr.mxu0 0.0
  %1880 = vmatpush1.msra.mxu0 0.0
  %1881 = vmatprep.subr.mxu0 0.0
  %1882 = vmatpush1.msra.mxu0 0.0
  %1883 = vmatprep.subr.mxu0 0.0
  %1884 = vmatpush1.msra.mxu0 0.0
  %1885 = vmatprep.subr.mxu0 0.0
  %1886 = vmatpush1.msra.mxu0 0.0
  %1887 = vmatprep.subr.mxu0 0.0
  %1888 = vmatpush1.msra.mxu0 0.0
  %1889 = vmatprep.subr.mxu0 0.0
  %1890 = vmatpush1.msra.mxu0 0.0
  %1891 = vmatprep.subr.mxu0 0.0
  %1892 = vmatpush1.msra.mxu0 0.0
  %1893 = vmatprep.subr.mxu0 0.0
  %1894 = vmatpush1.msra.mxu0 0.0
  %1895 = vmatprep.subr.mxu0 0.0
  %1896 = vmatpush1.msra.mxu0 0.0
  %1897 = vmatprep.subr.mxu0 0.0
  %1898 = vmatpush1.msra.mxu0 0.0
  %1899 = vmatprep.subr.mxu0 0.0
  %1900 = vmatpush1.msra.mxu0 0.0
  %1901 = vmatprep.subr.mxu0 0.0
  %1902 = vmatpush1.msra.mxu0 0.0
  %1903 = vmatprep.subr.mxu0 0.0
  %1904 = vmatpush1.msra.mxu0 0.0
  %1905 = vmatprep.subr.mxu0 0.0
  %1906 = vmatpush1.msra.mxu0 0.0
  %1907 = vmatprep.subr.mxu0 0.0
  %1908 = vmatpush1.msra.mxu0 0.0
  %1909 = vmatprep.subr.mxu0 0.0
  %1910 = vmatpush1.msra.mxu0 0.0
  %1911 = vmatprep.subr.mxu0 0.0
  %1912 = vmatpush1.msra.mxu0 0.0
  %1913 = vmatprep.subr.mxu0 0.0
  %1914 = vmatpush1.msra.mxu0 0.0
  %1915 = vmatprep.subr.mxu0 0.0
  %1916 = vmatpush1.msra.mxu0 0.0
  %1917 = vmatprep.subr.mxu0 0.0
  %1918 = vmatpush1.msra.mxu0 0.0
  %1919 = vmatprep.subr.mxu0 0.0
  %1920 = vmatpush1.msra.mxu0 0.0
  %1921 = vmatprep.subr.mxu0 0.0
  %1922 = vmatpush1.msra.mxu0 0.0
  %1923 = vmatprep.subr.mxu0 0.0
  %1924 = vmatpush1.msra.mxu0 0.0
  %1925 = vmatprep.subr.mxu0 0.0
  %1926 = vmatpush1.msra.mxu0 0.0
  %1927 = vmatprep.subr.mxu0 0.0
  %1928 = vmatpush1.msra.mxu0 0.0
  %1929 = vmatprep.subr.mxu0 0.0
  %1930 = vmatpush1.msra.mxu0 0.0
  %1931 = vmatprep.mubr.f32.mxu0 0.0
  %1932 = vmatmul.mubr.f32.gmra.mrb[0].mxu0 %v1862
  %v1933 = vpop.f32.mrb[0].mxu0
  %v1934 = vadd.f32 %v45, %v1933
  %v1935 = vpop.f32.mrb[0].mxu0
  %1936 = vmatprep.mubr.f32.mxu0 0.0
  %1937 = vmatmul.mubr.f32.gmra.mrb[0].mxu0 %v1865
  %v1938 = vpop.f32.mrb[0].mxu0
  %v1939 = vadd.f32 %v45, %v1938
  %v1940 = vpop.f32.mrb[0].mxu0
  %1941 = vdwg.mxu0
  %v1942 = vstv %s1439
  %v1943 = vmul.f32 %v1942, %v1934
  %v1944 = vmul.f32 %v1942, %v1939
  %v1945 = vadd.f32 %v1434, %v1943
  %v1946 = vadd.f32 %v1435, %v1944
  %v1948 = vsel %vm49, %v1945, 0
  %v1951 = vsel %vm49, %v1946, 0
  %1953 = vmatprep.subr.mxu0 0.0
  %1954 = vmatpush1.msra.mxu0 %v27
  %1955 = vmatprep.subr.mxu0 0.0
  %1956 = vmatpush1.msra.mxu0 %v28
  %1957 = vmatprep.subr.mxu0 0.0
  %1958 = vmatpush1.msra.mxu0 0.0
  %1959 = vmatprep.subr.mxu0 0.0
  %1960 = vmatpush1.msra.mxu0 0.0
  %1961 = vmatprep.subr.mxu0 0.0
  %1962 = vmatpush1.msra.mxu0 0.0
  %1963 = vmatprep.subr.mxu0 0.0
  %1964 = vmatpush1.msra.mxu0 0.0
  %1965 = vmatprep.subr.mxu0 0.0
  %1966 = vmatpush1.msra.mxu0 0.0
  %1967 = vmatprep.subr.mxu0 0.0
  %1968 = vmatpush1.msra.mxu0 0.0
  %1969 = vmatprep.subr.mxu0 0.0
  %1970 = vmatpush1.msra.mxu0 0.0
  %1971 = vmatprep.subr.mxu0 0.0
  %1972 = vmatpush1.msra.mxu0 0.0
  %1973 = vmatprep.subr.mxu0 0.0
  %1974 = vmatpush1.msra.mxu0 0.0
  %1975 = vmatprep.subr.mxu0 0.0
  %1976 = vmatpush1.msra.mxu0 0.0
  %1977 = vmatprep.subr.mxu0 0.0
  %1978 = vmatpush1.msra.mxu0 0.0
  %1979 = vmatprep.subr.mxu0 0.0
  %1980 = vmatpush1.msra.mxu0 0.0
  %1981 = vmatprep.subr.mxu0 0.0
  %1982 = vmatpush1.msra.mxu0 0.0
  %1983 = vmatprep.subr.mxu0 0.0
  %1984 = vmatpush1.msra.mxu0 0.0
  %1985 = vmatprep.subr.mxu0 0.0
  %1986 = vmatpush1.msra.mxu0 0.0
  %1987 = vmatprep.subr.mxu0 0.0
  %1988 = vmatpush1.msra.mxu0 0.0
  %1989 = vmatprep.subr.mxu0 0.0
  %1990 = vmatpush1.msra.mxu0 0.0
  %1991 = vmatprep.subr.mxu0 0.0
  %1992 = vmatpush1.msra.mxu0 0.0
  %1993 = vmatprep.subr.mxu0 0.0
  %1994 = vmatpush1.msra.mxu0 0.0
  %1995 = vmatprep.subr.mxu0 0.0
  %1996 = vmatpush1.msra.mxu0 0.0
  %1997 = vmatprep.subr.mxu0 0.0
  %1998 = vmatpush1.msra.mxu0 0.0
  %1999 = vmatprep.subr.mxu0 0.0
  %2000 = vmatpush1.msra.mxu0 0.0
  %2001 = vmatprep.subr.mxu0 0.0
  %2002 = vmatpush1.msra.mxu0 0.0
  %2003 = vmatprep.subr.mxu0 0.0
  %2004 = vmatpush1.msra.mxu0 0.0
  %2005 = vmatprep.subr.mxu0 0.0
  %2006 = vmatpush1.msra.mxu0 0.0
  %2007 = vmatprep.subr.mxu0 0.0
  %2008 = vmatpush1.msra.mxu0 0.0
  %2009 = vmatprep.subr.mxu0 0.0
  %2010 = vmatpush1.msra.mxu0 0.0
  %2011 = vmatprep.subr.mxu0 0.0
  %2012 = vmatpush1.msra.mxu0 0.0
  %2013 = vmatprep.subr.mxu0 0.0
  %2014 = vmatpush1.msra.mxu0 0.0
  %2015 = vmatprep.subr.mxu0 0.0
  %2016 = vmatpush1.msra.mxu0 0.0
  %2017 = vmatprep.mubr.f32.mxu0 0.0
  %2018 = vmatmul.mubr.f32.gmra.mrb[0].mxu0 %v1948
  %v2019 = vpop.f32.mrb[0].mxu0
  %v2020 = vadd.f32 %v38, %v2019
  %v2021 = vpop.f32.mrb[0].mxu0
  %2022 = vmatprep.mubr.f32.mxu0 0.0
  %2023 = vmatmul.mubr.f32.gmra.mrb[0].mxu0 %v1951
  %v2024 = vpop.f32.mrb[0].mxu0
  %v2025 = vadd.f32 %v38, %v2024
  %v2026 = vpop.f32.mrb[0].mxu0
  %2027 = vdwg.mxu0
  %v2028 = vtanh.pop %v2020
  %v2029 = vtanh.pop %v2025
  %v2031 = vsel %vm137, %v2028, 0
  %v2034 = vsel %vm137, %v2029, 0
  %2036 = vmatprep.subr.mxu0 0.0
  %2037 = vmatpush1.msra.mxu0 %v29
  %2038 = vmatprep.subr.mxu0 0.0
  %2039 = vmatpush1.msra.mxu0 %v30
  %2040 = vmatprep.subr.mxu0 0.0
  %2041 = vmatpush1.msra.mxu0 %v31
  %2042 = vmatprep.subr.mxu0 0.0
  %2043 = vmatpush1.msra.mxu0 %v32
  %2044 = vmatprep.subr.mxu0 0.0
  %2045 = vmatpush1.msra.mxu0 0.0
  %2046 = vmatprep.subr.mxu0 0.0
  %2047 = vmatpush1.msra.mxu0 0.0
  %2048 = vmatprep.subr.mxu0 0.0
  %2049 = vmatpush1.msra.mxu0 0.0
  %2050 = vmatprep.subr.mxu0 0.0
  %2051 = vmatpush1.msra.mxu0 0.0
  %2052 = vmatprep.subr.mxu0 0.0
  %2053 = vmatpush1.msra.mxu0 0.0
  %2054 = vmatprep.subr.mxu0 0.0
  %2055 = vmatpush1.msra.mxu0 0.0
  %2056 = vmatprep.subr.mxu0 0.0
  %2057 = vmatpush1.msra.mxu0 0.0
  %2058 = vmatprep.subr.mxu0 0.0
  %2059 = vmatpush1.msra.mxu0 0.0
  %2060 = vmatprep.subr.mxu0 0.0
  %2061 = vmatpush1.msra.mxu0 0.0
  %2062 = vmatprep.subr.mxu0 0.0
  %2063 = vmatpush1.msra.mxu0 0.0
  %2064 = vmatprep.subr.mxu0 0.0
  %2065 = vmatpush1.msra.mxu0 0.0
  %2066 = vmatprep.subr.mxu0 0.0
  %2067 = vmatpush1.msra.mxu0 0.0
  %2068 = vmatprep.subr.mxu0 0.0
  %2069 = vmatpush1.msra.mxu0 0.0
  %2070 = vmatprep.subr.mxu0 0.0
  %2071 = vmatpush1.msra.mxu0 0.0
  %2072 = vmatprep.subr.mxu0 0.0
  %2073 = vmatpush1.msra.mxu0 0.0
  %2074 = vmatprep.subr.mxu0 0.0
  %2075 = vmatpush1.msra.mxu0 0.0
  %2076 = vmatprep.subr.mxu0 0.0
  %2077 = vmatpush1.msra.mxu0 0.0
  %2078 = vmatprep.subr.mxu0 0.0
  %2079 = vmatpush1.msra.mxu0 0.0
  %2080 = vmatprep.subr.mxu0 0.0
  %2081 = vmatpush1.msra.mxu0 0.0
  %2082 = vmatprep.subr.mxu0 0.0
  %2083 = vmatpush1.msra.mxu0 0.0
  %2084 = vmatprep.subr.mxu0 0.0
  %2085 = vmatpush1.msra.mxu0 0.0
  %2086 = vmatprep.subr.mxu0 0.0
  %2087 = vmatpush1.msra.mxu0 0.0
  %2088 = vmatprep.subr.mxu0 0.0
  %2089 = vmatpush1.msra.mxu0 0.0
  %2090 = vmatprep.subr.mxu0 0.0
  %2091 = vmatpush1.msra.mxu0 0.0
  %2092 = vmatprep.subr.mxu0 0.0
  %2093 = vmatpush1.msra.mxu0 0.0
  %2094 = vmatprep.subr.mxu0 0.0
  %2095 = vmatpush1.msra.mxu0 0.0
  %2096 = vmatprep.subr.mxu0 0.0
  %2097 = vmatpush1.msra.mxu0 0.0
  %2098 = vmatprep.subr.mxu0 0.0
  %2099 = vmatpush1.msra.mxu0 0.0
  %2100 = vmatprep.mubr.f32.mxu0 0.0
  %2101 = vmatmul.mubr.f32.gmra.mrb[0].mxu0 %v2031
  %v2102 = vpop.f32.mrb[0].mxu0
  %v2103 = vadd.f32 %v45, %v2102
  %v2104 = vpop.f32.mrb[0].mxu0
  %2105 = vmatprep.mubr.f32.mxu0 0.0
  %2106 = vmatmul.mubr.f32.gmra.mrb[0].mxu0 %v2034
  %v2107 = vpop.f32.mrb[0].mxu0
  %v2108 = vadd.f32 %v45, %v2107
  %v2109 = vpop.f32.mrb[0].mxu0
  %2110 = vdwg.mxu0
  %v2111 = vrcp.pop 6.0
  %s2112 = vtos %v2111
  %s2113 = smul.f32 %s1439, %s2112
  %v2114 = vmul.f32 %v1766, 2.0
  %v2115 = vmul.f32 %v1771, 2.0
  %v2116 = vadd.f32 %v1597, %v2114
  %v2117 = vadd.f32 %v1602, %v2115
  %v2118 = vmul.f32 %v1934, 2.0
  %v2119 = vmul.f32 %v1939, 2.0
  %v2120 = vadd.f32 %v2116, %v2118
  %v2121 = vadd.f32 %v2117, %v2119
  %v2122 = vadd.f32 %v2120, %v2103
  %v2123 = vadd.f32 %v2121, %v2108
  %v2124 = vstv %s2113
  %v2125 = vmul.f32 %v2124, %v2122
  %v2126 = vmul.f32 %v2124, %v2123
  %v2127 = vadd.f32 %v1434, %v2125
  %v2128 = vadd.f32 %v1435, %v2126
  %s2129 = scalar_lea.vmem %s6, 48
  %2130 = vst.msk [vmem:[%s2129] sm:$0xff] %vm49, %v2127
  %2131 = vst.msk [vmem:[%s2129 + $0x8] sm:$0xff] %vm49, %v2128
  %s2132 = sld [smem:[#allocation3 + $0x3]]
  %s2133 = smul.f32 %s2132, 0.5
  %v2135 = vsel %vm49, %v2127, 0
  %v2138 = vsel %vm49, %v2128, 0
  %2140 = vmatprep.subr.mxu0 0.0
  %2141 = vmatpush1.msra.mxu0 %v27
  %2142 = vmatprep.subr.mxu0 0.0
  %2143 = vmatpush1.msra.mxu0 %v28
  %2144 = vmatprep.subr.mxu0 0.0
  %2145 = vmatpush1.msra.mxu0 0.0
  %2146 = vmatprep.subr.mxu0 0.0
  %2147 = vmatpush1.msra.mxu0 0.0
  %2148 = vmatprep.subr.mxu0 0.0
  %2149 = vmatpush1.msra.mxu0 0.0
  %2150 = vmatprep.subr.mxu0 0.0
  %2151 = vmatpush1.msra.mxu0 0.0
  %2152 = vmatprep.subr.mxu0 0.0
  %2153 = vmatpush1.msra.mxu0 0.0
  %2154 = vmatprep.subr.mxu0 0.0
  %2155 = vmatpush1.msra.mxu0 0.0
  %2156 = vmatprep.subr.mxu0 0.0
  %2157 = vmatpush1.msra.mxu0 0.0
  %2158 = vmatprep.subr.mxu0 0.0
  %2159 = vmatpush1.msra.mxu0 0.0
  %2160 = vmatprep.subr.mxu0 0.0
  %2161 = vmatpush1.msra.mxu0 0.0
  %2162 = vmatprep.subr.mxu0 0.0
  %2163 = vmatpush1.msra.mxu0 0.0
  %2164 = vmatprep.subr.mxu0 0.0
  %2165 = vmatpush1.msra.mxu0 0.0
  %2166 = vmatprep.subr.mxu0 0.0
  %2167 = vmatpush1.msra.mxu0 0.0
  %2168 = vmatprep.subr.mxu0 0.0
  %2169 = vmatpush1.msra.mxu0 0.0
  %2170 = vmatprep.subr.mxu0 0.0
  %2171 = vmatpush1.msra.mxu0 0.0
  %2172 = vmatprep.subr.mxu0 0.0
  %2173 = vmatpush1.msra.mxu0 0.0
  %2174 = vmatprep.subr.mxu0 0.0
  %2175 = vmatpush1.msra.mxu0 0.0
  %2176 = vmatprep.subr.mxu0 0.0
  %2177 = vmatpush1.msra.mxu0 0.0
  %2178 = vmatprep.subr.mxu0 0.0
  %2179 = vmatpush1.msra.mxu0 0.0
  %2180 = vmatprep.subr.mxu0 0.0
  %2181 = vmatpush1.msra.mxu0 0.0
  %2182 = vmatprep.subr.mxu0 0.0
  %2183 = vmatpush1.msra.mxu0 0.0
  %2184 = vmatprep.subr.mxu0 0.0
  %2185 = vmatpush1.msra.mxu0 0.0
  %2186 = vmatprep.subr.mxu0 0.0
  %2187 = vmatpush1.msra.mxu0 0.0
  %2188 = vmatprep.subr.mxu0 0.0
  %2189 = vmatpush1.msra.mxu0 0.0
  %2190 = vmatprep.subr.mxu0 0.0
  %2191 = vmatpush1.msra.mxu0 0.0
  %2192 = vmatprep.subr.mxu0 0.0
  %2193 = vmatpush1.msra.mxu0 0.0
  %2194 = vmatprep.subr.mxu0 0.0
  %2195 = vmatpush1.msra.mxu0 0.0
  %2196 = vmatprep.subr.mxu0 0.0
  %2197 = vmatpush1.msra.mxu0 0.0
  %2198 = vmatprep.subr.mxu0 0.0
  %2199 = vmatpush1.msra.mxu0 0.0
  %2200 = vmatprep.subr.mxu0 0.0
  %2201 = vmatpush1.msra.mxu0 0.0
  %2202 = vmatprep.subr.mxu0 0.0
  %2203 = vmatpush1.msra.mxu0 0.0
  %2204 = vmatprep.mubr.f32.mxu0 0.0
  %2205 = vmatmul.mubr.f32.gmra.mrb[0].mxu0 %v2135
  %v2206 = vpop.f32.mrb[0].mxu0
  %v2207 = vadd.f32 %v38, %v2206
  %v2208 = vpop.f32.mrb[0].mxu0
  %2209 = vmatprep.mubr.f32.mxu0 0.0
  %2210 = vmatmul.mubr.f32.gmra.mrb[0].mxu0 %v2138
  %v2211 = vpop.f32.mrb[0].mxu0
  %v2212 = vadd.f32 %v38, %v2211
  %v2213 = vpop.f32.mrb[0].mxu0
  %2214 = vdwg.mxu0
  %v2215 = vtanh.pop %v2207
  %v2216 = vtanh.pop %v2212
  %v2218 = vsel %vm137, %v2215, 0
  %v2221 = vsel %vm137, %v2216, 0
  %2223 = vmatprep.subr.mxu0 0.0
  %2224 = vmatpush1.msra.mxu0 %v29
  %2225 = vmatprep.subr.mxu0 0.0
  %2226 = vmatpush1.msra.mxu0 %v30
  %2227 = vmatprep.subr.mxu0 0.0
  %2228 = vmatpush1.msra.mxu0 %v31
  %2229 = vmatprep.subr.mxu0 0.0
  %2230 = vmatpush1.msra.mxu0 %v32
  %2231 = vmatprep.subr.mxu0 0.0
  %2232 = vmatpush1.msra.mxu0 0.0
  %2233 = vmatprep.subr.mxu0 0.0
  %2234 = vmatpush1.msra.mxu0 0.0
  %2235 = vmatprep.subr.mxu0 0.0
  %2236 = vmatpush1.msra.mxu0 0.0
  %2237 = vmatprep.subr.mxu0 0.0
  %2238 = vmatpush1.msra.mxu0 0.0
  %2239 = vmatprep.subr.mxu0 0.0
  %2240 = vmatpush1.msra.mxu0 0.0
  %2241 = vmatprep.subr.mxu0 0.0
  %2242 = vmatpush1.msra.mxu0 0.0
  %2243 = vmatprep.subr.mxu0 0.0
  %2244 = vmatpush1.msra.mxu0 0.0
  %2245 = vmatprep.subr.mxu0 0.0
  %2246 = vmatpush1.msra.mxu0 0.0
  %2247 = vmatprep.subr.mxu0 0.0
  %2248 = vmatpush1.msra.mxu0 0.0
  %2249 = vmatprep.subr.mxu0 0.0
  %2250 = vmatpush1.msra.mxu0 0.0
  %2251 = vmatprep.subr.mxu0 0.0
  %2252 = vmatpush1.msra.mxu0 0.0
  %2253 = vmatprep.subr.mxu0 0.0
  %2254 = vmatpush1.msra.mxu0 0.0
  %2255 = vmatprep.subr.mxu0 0.0
  %2256 = vmatpush1.msra.mxu0 0.0
  %2257 = vmatprep.subr.mxu0 0.0
  %2258 = vmatpush1.msra.mxu0 0.0
  %2259 = vmatprep.subr.mxu0 0.0
  %2260 = vmatpush1.msra.mxu0 0.0
  %2261 = vmatprep.subr.mxu0 0.0
  %2262 = vmatpush1.msra.mxu0 0.0
  %2263 = vmatprep.subr.mxu0 0.0
  %2264 = vmatpush1.msra.mxu0 0.0
  %2265 = vmatprep.subr.mxu0 0.0
  %2266 = vmatpush1.msra.mxu0 0.0
  %2267 = vmatprep.subr.mxu0 0.0
  %2268 = vmatpush1.msra.mxu0 0.0
  %2269 = vmatprep.subr.mxu0 0.0
  %2270 = vmatpush1.msra.mxu0 0.0
  %2271 = vmatprep.subr.mxu0 0.0
  %2272 = vmatpush1.msra.mxu0 0.0
  %2273 = vmatprep.subr.mxu0 0.0
  %2274 = vmatpush1.msra.mxu0 0.0
  %2275 = vmatprep.subr.mxu0 0.0
  %2276 = vmatpush1.msra.mxu0 0.0
  %2277 = vmatprep.subr.mxu0 0.0
  %2278 = vmatpush1.msra.mxu0 0.0
  %2279 = vmatprep.subr.mxu0 0.0
  %2280 = vmatpush1.msra.mxu0 0.0
  %2281 = vmatprep.subr.mxu0 0.0
  %2282 = vmatpush1.msra.mxu0 0.0
  %2283 = vmatprep.subr.mxu0 0.0
  %2284 = vmatpush1.msra.mxu0 0.0
  %2285 = vmatprep.subr.mxu0 0.0
  %2286 = vmatpush1.msra.mxu0 0.0
  %2287 = vmatprep.mubr.f32.mxu0 0.0
  %2288 = vmatmul.mubr.f32.gmra.mrb[0].mxu0 %v2218
  %v2289 = vpop.f32.mrb[0].mxu0
  %v2290 = vadd.f32 %v45, %v2289
  %v2291 = vpop.f32.mrb[0].mxu0
  %2292 = vmatprep.mubr.f32.mxu0 0.0
  %2293 = vmatmul.mubr.f32.gmra.mrb[0].mxu0 %v2221
  %v2294 = vpop.f32.mrb[0].mxu0
  %v2295 = vadd.f32 %v45, %v2294
  %v2296 = vpop.f32.mrb[0].mxu0
  %2297 = vdwg.mxu0
  %v2298 = vstv %s2133
  %v2299 = vmul.f32 %v2298, %v2290
  %v2300 = vmul.f32 %v2298, %v2295
  %v2301 = vadd.f32 %v2127, %v2299
  %v2302 = vadd.f32 %v2128, %v2300
  %v2304 = vsel %vm49, %v2301, 0
  %v2307 = vsel %vm49, %v2302, 0
  %2309 = vmatprep.subr.mxu0 0.0
  %2310 = vmatpush1.msra.mxu0 %v27
  %2311 = vmatprep.subr.mxu0 0.0
  %2312 = vmatpush1.msra.mxu0 %v28
  %2313 = vmatprep.subr.mxu0 0.0
  %2314 = vmatpush1.msra.mxu0 0.0
  %2315 = vmatprep.subr.mxu0 0.0
  %2316 = vmatpush1.msra.mxu0 0.0
  %2317 = vmatprep.subr.mxu0 0.0
  %2318 = vmatpush1.msra.mxu0 0.0
  %2319 = vmatprep.subr.mxu0 0.0
  %2320 = vmatpush1.msra.mxu0 0.0
  %2321 = vmatprep.subr.mxu0 0.0
  %2322 = vmatpush1.msra.mxu0 0.0
  %2323 = vmatprep.subr.mxu0 0.0
  %2324 = vmatpush1.msra.mxu0 0.0
  %2325 = vmatprep.subr.mxu0 0.0
  %2326 = vmatpush1.msra.mxu0 0.0
  %2327 = vmatprep.subr.mxu0 0.0
  %2328 = vmatpush1.msra.mxu0 0.0
  %2329 = vmatprep.subr.mxu0 0.0
  %2330 = vmatpush1.msra.mxu0 0.0
  %2331 = vmatprep.subr.mxu0 0.0
  %2332 = vmatpush1.msra.mxu0 0.0
  %2333 = vmatprep.subr.mxu0 0.0
  %2334 = vmatpush1.msra.mxu0 0.0
  %2335 = vmatprep.subr.mxu0 0.0
  %2336 = vmatpush1.msra.mxu0 0.0
  %2337 = vmatprep.subr.mxu0 0.0
  %2338 = vmatpush1.msra.mxu0 0.0
  %2339 = vmatprep.subr.mxu0 0.0
  %2340 = vmatpush1.msra.mxu0 0.0
  %2341 = vmatprep.subr.mxu0 0.0
  %2342 = vmatpush1.msra.mxu0 0.0
  %2343 = vmatprep.subr.mxu0 0.0
  %2344 = vmatpush1.msra.mxu0 0.0
  %2345 = vmatprep.subr.mxu0 0.0
  %2346 = vmatpush1.msra.mxu0 0.0
  %2347 = vmatprep.subr.mxu0 0.0
  %2348 = vmatpush1.msra.mxu0 0.0
  %2349 = vmatprep.subr.mxu0 0.0
  %2350 = vmatpush1.msra.mxu0 0.0
  %2351 = vmatprep.subr.mxu0 0.0
  %2352 = vmatpush1.msra.mxu0 0.0
  %2353 = vmatprep.subr.mxu0 0.0
  %2354 = vmatpush1.msra.mxu0 0.0
  %2355 = vmatprep.subr.mxu0 0.0
  %2356 = vmatpush1.msra.mxu0 0.0
  %2357 = vmatprep.subr.mxu0 0.0
  %2358 = vmatpush1.msra.mxu0 0.0
  %2359 = vmatprep.subr.mxu0 0.0
  %2360 = vmatpush1.msra.mxu0 0.0
  %2361 = vmatprep.subr.mxu0 0.0
  %2362 = vmatpush1.msra.mxu0 0.0
  %2363 = vmatprep.subr.mxu0 0.0
  %2364 = vmatpush1.msra.mxu0 0.0
  %2365 = vmatprep.subr.mxu0 0.0
  %2366 = vmatpush1.msra.mxu0 0.0
  %2367 = vmatprep.subr.mxu0 0.0
  %2368 = vmatpush1.msra.mxu0 0.0
  %2369 = vmatprep.subr.mxu0 0.0
  %2370 = vmatpush1.msra.mxu0 0.0
  %2371 = vmatprep.subr.mxu0 0.0
  %2372 = vmatpush1.msra.mxu0 0.0
  %2373 = vmatprep.mubr.f32.mxu0 0.0
  %2374 = vmatmul.mubr.f32.gmra.mrb[0].mxu0 %v2304
  %v2375 = vpop.f32.mrb[0].mxu0
  %v2376 = vadd.f32 %v38, %v2375
  %v2377 = vpop.f32.mrb[0].mxu0
  %2378 = vmatprep.mubr.f32.mxu0 0.0
  %2379 = vmatmul.mubr.f32.gmra.mrb[0].mxu0 %v2307
  %v2380 = vpop.f32.mrb[0].mxu0
  %v2381 = vadd.f32 %v38, %v2380
  %v2382 = vpop.f32.mrb[0].mxu0
  %2383 = vdwg.mxu0
  %v2384 = vtanh.pop %v2376
  %v2385 = vtanh.pop %v2381
  %v2387 = vsel %vm137, %v2384, 0
  %v2390 = vsel %vm137, %v2385, 0
  %2392 = vmatprep.subr.mxu0 0.0
  %2393 = vmatpush1.msra.mxu0 %v29
  %2394 = vmatprep.subr.mxu0 0.0
  %2395 = vmatpush1.msra.mxu0 %v30
  %2396 = vmatprep.subr.mxu0 0.0
  %2397 = vmatpush1.msra.mxu0 %v31
  %2398 = vmatprep.subr.mxu0 0.0
  %2399 = vmatpush1.msra.mxu0 %v32
  %2400 = vmatprep.subr.mxu0 0.0
  %2401 = vmatpush1.msra.mxu0 0.0
  %2402 = vmatprep.subr.mxu0 0.0
  %2403 = vmatpush1.msra.mxu0 0.0
  %2404 = vmatprep.subr.mxu0 0.0
  %2405 = vmatpush1.msra.mxu0 0.0
  %2406 = vmatprep.subr.mxu0 0.0
  %2407 = vmatpush1.msra.mxu0 0.0
  %2408 = vmatprep.subr.mxu0 0.0
  %2409 = vmatpush1.msra.mxu0 0.0
  %2410 = vmatprep.subr.mxu0 0.0
  %2411 = vmatpush1.msra.mxu0 0.0
  %2412 = vmatprep.subr.mxu0 0.0
  %2413 = vmatpush1.msra.mxu0 0.0
  %2414 = vmatprep.subr.mxu0 0.0
  %2415 = vmatpush1.msra.mxu0 0.0
  %2416 = vmatprep.subr.mxu0 0.0
  %2417 = vmatpush1.msra.mxu0 0.0
  %2418 = vmatprep.subr.mxu0 0.0
  %2419 = vmatpush1.msra.mxu0 0.0
  %2420 = vmatprep.subr.mxu0 0.0
  %2421 = vmatpush1.msra.mxu0 0.0
  %2422 = vmatprep.subr.mxu0 0.0
  %2423 = vmatpush1.msra.mxu0 0.0
  %2424 = vmatprep.subr.mxu0 0.0
  %2425 = vmatpush1.msra.mxu0 0.0
  %2426 = vmatprep.subr.mxu0 0.0
  %2427 = vmatpush1.msra.mxu0 0.0
  %2428 = vmatprep.subr.mxu0 0.0
  %2429 = vmatpush1.msra.mxu0 0.0
  %2430 = vmatprep.subr.mxu0 0.0
  %2431 = vmatpush1.msra.mxu0 0.0
  %2432 = vmatprep.subr.mxu0 0.0
  %2433 = vmatpush1.msra.mxu0 0.0
  %2434 = vmatprep.subr.mxu0 0.0
  %2435 = vmatpush1.msra.mxu0 0.0
  %2436 = vmatprep.subr.mxu0 0.0
  %2437 = vmatpush1.msra.mxu0 0.0
  %2438 = vmatprep.subr.mxu0 0.0
  %2439 = vmatpush1.msra.mxu0 0.0
  %2440 = vmatprep.subr.mxu0 0.0
  %2441 = vmatpush1.msra.mxu0 0.0
  %2442 = vmatprep.subr.mxu0 0.0
  %2443 = vmatpush1.msra.mxu0 0.0
  %2444 = vmatprep.subr.mxu0 0.0
  %2445 = vmatpush1.msra.mxu0 0.0
  %2446 = vmatprep.subr.mxu0 0.0
  %2447 = vmatpush1.msra.mxu0 0.0
  %2448 = vmatprep.subr.mxu0 0.0
  %2449 = vmatpush1.msra.mxu0 0.0
  %2450 = vmatprep.subr.mxu0 0.0
  %2451 = vmatpush1.msra.mxu0 0.0
  %2452 = vmatprep.subr.mxu0 0.0
  %2453 = vmatpush1.msra.mxu0 0.0
  %2454 = vmatprep.subr.mxu0 0.0
  %2455 = vmatpush1.msra.mxu0 0.0
  %2456 = vmatprep.mubr.f32.mxu0 0.0
  %2457 = vmatmul.mubr.f32.gmra.mrb[0].mxu0 %v2387
  %v2458 = vpop.f32.mrb[0].mxu0
  %v2459 = vadd.f32 %v45, %v2458
  %v2460 = vpop.f32.mrb[0].mxu0
  %2461 = vmatprep.mubr.f32.mxu0 0.0
  %2462 = vmatmul.mubr.f32.gmra.mrb[0].mxu0 %v2390
  %v2463 = vpop.f32.mrb[0].mxu0
  %v2464 = vadd.f32 %v45, %v2463
  %v2465 = vpop.f32.mrb[0].mxu0
  %2466 = vdwg.mxu0
  %v2467 = vmul.f32 %v2298, %v2459
  %v2468 = vmul.f32 %v2298, %v2464
  %v2469 = vadd.f32 %v2127, %v2467
  %v2470 = vadd.f32 %v2128, %v2468
  %v2472 = vsel %vm49, %v2469, 0
  %v2475 = vsel %vm49, %v2470, 0
  %2477 = vmatprep.subr.mxu0 0.0
  %2478 = vmatpush1.msra.mxu0 %v27
  %2479 = vmatprep.subr.mxu0 0.0
  %2480 = vmatpush1.msra.mxu0 %v28
  %2481 = vmatprep.subr.mxu0 0.0
  %2482 = vmatpush1.msra.mxu0 0.0
  %2483 = vmatprep.subr.mxu0 0.0
  %2484 = vmatpush1.msra.mxu0 0.0
  %2485 = vmatprep.subr.mxu0 0.0
  %2486 = vmatpush1.msra.mxu0 0.0
  %2487 = vmatprep.subr.mxu0 0.0
  %2488 = vmatpush1.msra.mxu0 0.0
  %2489 = vmatprep.subr.mxu0 0.0
  %2490 = vmatpush1.msra.mxu0 0.0
  %2491 = vmatprep.subr.mxu0 0.0
  %2492 = vmatpush1.msra.mxu0 0.0
  %2493 = vmatprep.subr.mxu0 0.0
  %2494 = vmatpush1.msra.mxu0 0.0
  %2495 = vmatprep.subr.mxu0 0.0
  %2496 = vmatpush1.msra.mxu0 0.0
  %2497 = vmatprep.subr.mxu0 0.0
  %2498 = vmatpush1.msra.mxu0 0.0
  %2499 = vmatprep.subr.mxu0 0.0
  %2500 = vmatpush1.msra.mxu0 0.0
  %2501 = vmatprep.subr.mxu0 0.0
  %2502 = vmatpush1.msra.mxu0 0.0
  %2503 = vmatprep.subr.mxu0 0.0
  %2504 = vmatpush1.msra.mxu0 0.0
  %2505 = vmatprep.subr.mxu0 0.0
  %2506 = vmatpush1.msra.mxu0 0.0
  %2507 = vmatprep.subr.mxu0 0.0
  %2508 = vmatpush1.msra.mxu0 0.0
  %2509 = vmatprep.subr.mxu0 0.0
  %2510 = vmatpush1.msra.mxu0 0.0
  %2511 = vmatprep.subr.mxu0 0.0
  %2512 = vmatpush1.msra.mxu0 0.0
  %2513 = vmatprep.subr.mxu0 0.0
  %2514 = vmatpush1.msra.mxu0 0.0
  %2515 = vmatprep.subr.mxu0 0.0
  %2516 = vmatpush1.msra.mxu0 0.0
  %2517 = vmatprep.subr.mxu0 0.0
  %2518 = vmatpush1.msra.mxu0 0.0
  %2519 = vmatprep.subr.mxu0 0.0
  %2520 = vmatpush1.msra.mxu0 0.0
  %2521 = vmatprep.subr.mxu0 0.0
  %2522 = vmatpush1.msra.mxu0 0.0
  %2523 = vmatprep.subr.mxu0 0.0
  %2524 = vmatpush1.msra.mxu0 0.0
  %2525 = vmatprep.subr.mxu0 0.0
  %2526 = vmatpush1.msra.mxu0 0.0
  %2527 = vmatprep.subr.mxu0 0.0
  %2528 = vmatpush1.msra.mxu0 0.0
  %2529 = vmatprep.subr.mxu0 0.0
  %2530 = vmatpush1.msra.mxu0 0.0
  %2531 = vmatprep.subr.mxu0 0.0
  %2532 = vmatpush1.msra.mxu0 0.0
  %2533 = vmatprep.subr.mxu0 0.0
  %2534 = vmatpush1.msra.mxu0 0.0
  %2535 = vmatprep.subr.mxu0 0.0
  %2536 = vmatpush1.msra.mxu0 0.0
  %2537 = vmatprep.subr.mxu0 0.0
  %2538 = vmatpush1.msra.mxu0 0.0
  %2539 = vmatprep.subr.mxu0 0.0
  %2540 = vmatpush1.msra.mxu0 0.0
  %2541 = vmatprep.mubr.f32.mxu0 0.0
  %2542 = vmatmul.mubr.f32.gmra.mrb[0].mxu0 %v2472
  %v2543 = vpop.f32.mrb[0].mxu0
  %v2544 = vadd.f32 %v38, %v2543
  %v2545 = vpop.f32.mrb[0].mxu0
  %2546 = vmatprep.mubr.f32.mxu0 0.0
  %2547 = vmatmul.mubr.f32.gmra.mrb[0].mxu0 %v2475
  %v2548 = vpop.f32.mrb[0].mxu0
  %v2549 = vadd.f32 %v38, %v2548
  %v2550 = vpop.f32.mrb[0].mxu0
  %2551 = vdwg.mxu0
  %v2552 = vtanh.pop %v2544
  %v2553 = vtanh.pop %v2549
  %v2555 = vsel %vm137, %v2552, 0
  %v2558 = vsel %vm137, %v2553, 0
  %2560 = vmatprep.subr.mxu0 0.0
  %2561 = vmatpush1.msra.mxu0 %v29
  %2562 = vmatprep.subr.mxu0 0.0
  %2563 = vmatpush1.msra.mxu0 %v30
  %2564 = vmatprep.subr.mxu0 0.0
  %2565 = vmatpush1.msra.mxu0 %v31
  %2566 = vmatprep.subr.mxu0 0.0
  %2567 = vmatpush1.msra.mxu0 %v32
  %2568 = vmatprep.subr.mxu0 0.0
  %2569 = vmatpush1.msra.mxu0 0.0
  %2570 = vmatprep.subr.mxu0 0.0
  %2571 = vmatpush1.msra.mxu0 0.0
  %2572 = vmatprep.subr.mxu0 0.0
  %2573 = vmatpush1.msra.mxu0 0.0
  %2574 = vmatprep.subr.mxu0 0.0
  %2575 = vmatpush1.msra.mxu0 0.0
  %2576 = vmatprep.subr.mxu0 0.0
  %2577 = vmatpush1.msra.mxu0 0.0
  %2578 = vmatprep.subr.mxu0 0.0
  %2579 = vmatpush1.msra.mxu0 0.0
  %2580 = vmatprep.subr.mxu0 0.0
  %2581 = vmatpush1.msra.mxu0 0.0
  %2582 = vmatprep.subr.mxu0 0.0
  %2583 = vmatpush1.msra.mxu0 0.0
  %2584 = vmatprep.subr.mxu0 0.0
  %2585 = vmatpush1.msra.mxu0 0.0
  %2586 = vmatprep.subr.mxu0 0.0
  %2587 = vmatpush1.msra.mxu0 0.0
  %2588 = vmatprep.subr.mxu0 0.0
  %2589 = vmatpush1.msra.mxu0 0.0
  %2590 = vmatprep.subr.mxu0 0.0
  %2591 = vmatpush1.msra.mxu0 0.0
  %2592 = vmatprep.subr.mxu0 0.0
  %2593 = vmatpush1.msra.mxu0 0.0
  %2594 = vmatprep.subr.mxu0 0.0
  %2595 = vmatpush1.msra.mxu0 0.0
  %2596 = vmatprep.subr.mxu0 0.0
  %2597 = vmatpush1.msra.mxu0 0.0
  %2598 = vmatprep.subr.mxu0 0.0
  %2599 = vmatpush1.msra.mxu0 0.0
  %2600 = vmatprep.subr.mxu0 0.0
  %2601 = vmatpush1.msra.mxu0 0.0
  %2602 = vmatprep.subr.mxu0 0.0
  %2603 = vmatpush1.msra.mxu0 0.0
  %2604 = vmatprep.subr.mxu0 0.0
  %2605 = vmatpush1.msra.mxu0 0.0
  %2606 = vmatprep.subr.mxu0 0.0
  %2607 = vmatpush1.msra.mxu0 0.0
  %2608 = vmatprep.subr.mxu0 0.0
  %2609 = vmatpush1.msra.mxu0 0.0
  %2610 = vmatprep.subr.mxu0 0.0
  %2611 = vmatpush1.msra.mxu0 0.0
  %2612 = vmatprep.subr.mxu0 0.0
  %2613 = vmatpush1.msra.mxu0 0.0
  %2614 = vmatprep.subr.mxu0 0.0
  %2615 = vmatpush1.msra.mxu0 0.0
  %2616 = vmatprep.subr.mxu0 0.0
  %2617 = vmatpush1.msra.mxu0 0.0
  %2618 = vmatprep.subr.mxu0 0.0
  %2619 = vmatpush1.msra.mxu0 0.0
  %2620 = vmatprep.subr.mxu0 0.0
  %2621 = vmatpush1.msra.mxu0 0.0
  %2622 = vmatprep.subr.mxu0 0.0
  %2623 = vmatpush1.msra.mxu0 0.0
  %2624 = vmatprep.mubr.f32.mxu0 0.0
  %2625 = vmatmul.mubr.f32.gmra.mrb[0].mxu0 %v2555
  %v2626 = vpop.f32.mrb[0].mxu0
  %v2627 = vadd.f32 %v45, %v2626
  %v2628 = vpop.f32.mrb[0].mxu0
  %2629 = vmatprep.mubr.f32.mxu0 0.0
  %2630 = vmatmul.mubr.f32.gmra.mrb[0].mxu0 %v2558
  %v2631 = vpop.f32.mrb[0].mxu0
  %v2632 = vadd.f32 %v45, %v2631
  %v2633 = vpop.f32.mrb[0].mxu0
  %2634 = vdwg.mxu0
  %v2635 = vstv %s2132
  %v2636 = vmul.f32 %v2635, %v2627
  %v2637 = vmul.f32 %v2635, %v2632
  %v2638 = vadd.f32 %v2127, %v2636
  %v2639 = vadd.f32 %v2128, %v2637
  %v2641 = vsel %vm49, %v2638, 0
  %v2644 = vsel %vm49, %v2639, 0
  %2646 = vmatprep.subr.mxu0 0.0
  %2647 = vmatpush1.msra.mxu0 %v27
  %2648 = vmatprep.subr.mxu0 0.0
  %2649 = vmatpush1.msra.mxu0 %v28
  %2650 = vmatprep.subr.mxu0 0.0
  %2651 = vmatpush1.msra.mxu0 0.0
  %2652 = vmatprep.subr.mxu0 0.0
  %2653 = vmatpush1.msra.mxu0 0.0
  %2654 = vmatprep.subr.mxu0 0.0
  %2655 = vmatpush1.msra.mxu0 0.0
  %2656 = vmatprep.subr.mxu0 0.0
  %2657 = vmatpush1.msra.mxu0 0.0
  %2658 = vmatprep.subr.mxu0 0.0
  %2659 = vmatpush1.msra.mxu0 0.0
  %2660 = vmatprep.subr.mxu0 0.0
  %2661 = vmatpush1.msra.mxu0 0.0
  %2662 = vmatprep.subr.mxu0 0.0
  %2663 = vmatpush1.msra.mxu0 0.0
  %2664 = vmatprep.subr.mxu0 0.0
  %2665 = vmatpush1.msra.mxu0 0.0
  %2666 = vmatprep.subr.mxu0 0.0
  %2667 = vmatpush1.msra.mxu0 0.0
  %2668 = vmatprep.subr.mxu0 0.0
  %2669 = vmatpush1.msra.mxu0 0.0
  %2670 = vmatprep.subr.mxu0 0.0
  %2671 = vmatpush1.msra.mxu0 0.0
  %2672 = vmatprep.subr.mxu0 0.0
  %2673 = vmatpush1.msra.mxu0 0.0
  %2674 = vmatprep.subr.mxu0 0.0
  %2675 = vmatpush1.msra.mxu0 0.0
  %2676 = vmatprep.subr.mxu0 0.0
  %2677 = vmatpush1.msra.mxu0 0.0
  %2678 = vmatprep.subr.mxu0 0.0
  %2679 = vmatpush1.msra.mxu0 0.0
  %2680 = vmatprep.subr.mxu0 0.0
  %2681 = vmatpush1.msra.mxu0 0.0
  %2682 = vmatprep.subr.mxu0 0.0
  %2683 = vmatpush1.msra.mxu0 0.0
  %2684 = vmatprep.subr.mxu0 0.0
  %2685 = vmatpush1.msra.mxu0 0.0
  %2686 = vmatprep.subr.mxu0 0.0
  %2687 = vmatpush1.msra.mxu0 0.0
  %2688 = vmatprep.subr.mxu0 0.0
  %2689 = vmatpush1.msra.mxu0 0.0
  %2690 = vmatprep.subr.mxu0 0.0
  %2691 = vmatpush1.msra.mxu0 0.0
  %2692 = vmatprep.subr.mxu0 0.0
  %2693 = vmatpush1.msra.mxu0 0.0
  %2694 = vmatprep.subr.mxu0 0.0
  %2695 = vmatpush1.msra.mxu0 0.0
  %2696 = vmatprep.subr.mxu0 0.0
  %2697 = vmatpush1.msra.mxu0 0.0
  %2698 = vmatprep.subr.mxu0 0.0
  %2699 = vmatpush1.msra.mxu0 0.0
  %2700 = vmatprep.subr.mxu0 0.0
  %2701 = vmatpush1.msra.mxu0 0.0
  %2702 = vmatprep.subr.mxu0 0.0
  %2703 = vmatpush1.msra.mxu0 0.0
  %2704 = vmatprep.subr.mxu0 0.0
  %2705 = vmatpush1.msra.mxu0 0.0
  %2706 = vmatprep.subr.mxu0 0.0
  %2707 = vmatpush1.msra.mxu0 0.0
  %2708 = vmatprep.subr.mxu0 0.0
  %2709 = vmatpush1.msra.mxu0 0.0
  %2710 = vmatprep.mubr.f32.mxu0 0.0
  %2711 = vmatmul.mubr.f32.gmra.mrb[0].mxu0 %v2641
  %v2712 = vpop.f32.mrb[0].mxu0
  %v2713 = vadd.f32 %v38, %v2712
  %v2714 = vpop.f32.mrb[0].mxu0
  %2715 = vmatprep.mubr.f32.mxu0 0.0
  %2716 = vmatmul.mubr.f32.gmra.mrb[0].mxu0 %v2644
  %v2717 = vpop.f32.mrb[0].mxu0
  %v2718 = vadd.f32 %v38, %v2717
  %v2719 = vpop.f32.mrb[0].mxu0
  %2720 = vdwg.mxu0
  %v2721 = vtanh.pop %v2713
  %v2722 = vtanh.pop %v2718
  %v2724 = vsel %vm137, %v2721, 0
  %v2727 = vsel %vm137, %v2722, 0
  %2729 = vmatprep.subr.mxu0 0.0
  %2730 = vmatpush1.msra.mxu0 %v29
  %2731 = vmatprep.subr.mxu0 0.0
  %2732 = vmatpush1.msra.mxu0 %v30
  %2733 = vmatprep.subr.mxu0 0.0
  %2734 = vmatpush1.msra.mxu0 %v31
  %2735 = vmatprep.subr.mxu0 0.0
  %2736 = vmatpush1.msra.mxu0 %v32
  %2737 = vmatprep.subr.mxu0 0.0
  %2738 = vmatpush1.msra.mxu0 0.0
  %2739 = vmatprep.subr.mxu0 0.0
  %2740 = vmatpush1.msra.mxu0 0.0
  %2741 = vmatprep.subr.mxu0 0.0
  %2742 = vmatpush1.msra.mxu0 0.0
  %2743 = vmatprep.subr.mxu0 0.0
  %2744 = vmatpush1.msra.mxu0 0.0
  %2745 = vmatprep.subr.mxu0 0.0
  %2746 = vmatpush1.msra.mxu0 0.0
  %2747 = vmatprep.subr.mxu0 0.0
  %2748 = vmatpush1.msra.mxu0 0.0
  %2749 = vmatprep.subr.mxu0 0.0
  %2750 = vmatpush1.msra.mxu0 0.0
  %2751 = vmatprep.subr.mxu0 0.0
  %2752 = vmatpush1.msra.mxu0 0.0
  %2753 = vmatprep.subr.mxu0 0.0
  %2754 = vmatpush1.msra.mxu0 0.0
  %2755 = vmatprep.subr.mxu0 0.0
  %2756 = vmatpush1.msra.mxu0 0.0
  %2757 = vmatprep.subr.mxu0 0.0
  %2758 = vmatpush1.msra.mxu0 0.0
  %2759 = vmatprep.subr.mxu0 0.0
  %2760 = vmatpush1.msra.mxu0 0.0
  %2761 = vmatprep.subr.mxu0 0.0
  %2762 = vmatpush1.msra.mxu0 0.0
  %2763 = vmatprep.subr.mxu0 0.0
  %2764 = vmatpush1.msra.mxu0 0.0
  %2765 = vmatprep.subr.mxu0 0.0
  %2766 = vmatpush1.msra.mxu0 0.0
  %2767 = vmatprep.subr.mxu0 0.0
  %2768 = vmatpush1.msra.mxu0 0.0
  %2769 = vmatprep.subr.mxu0 0.0
  %2770 = vmatpush1.msra.mxu0 0.0
  %2771 = vmatprep.subr.mxu0 0.0
  %2772 = vmatpush1.msra.mxu0 0.0
  %2773 = vmatprep.subr.mxu0 0.0
  %2774 = vmatpush1.msra.mxu0 0.0
  %2775 = vmatprep.subr.mxu0 0.0
  %2776 = vmatpush1.msra.mxu0 0.0
  %2777 = vmatprep.subr.mxu0 0.0
  %2778 = vmatpush1.msra.mxu0 0.0
  %2779 = vmatprep.subr.mxu0 0.0
  %2780 = vmatpush1.msra.mxu0 0.0
  %2781 = vmatprep.subr.mxu0 0.0
  %2782 = vmatpush1.msra.mxu0 0.0
  %2783 = vmatprep.subr.mxu0 0.0
  %2784 = vmatpush1.msra.mxu0 0.0
  %2785 = vmatprep.subr.mxu0 0.0
  %2786 = vmatpush1.msra.mxu0 0.0
  %2787 = vmatprep.subr.mxu0 0.0
  %2788 = vmatpush1.msra.mxu0 0.0
  %2789 = vmatprep.subr.mxu0 0.0
  %2790 = vmatpush1.msra.mxu0 0.0
  %2791 = vmatprep.subr.mxu0 0.0
  %2792 = vmatpush1.msra.mxu0 0.0
  %2793 = vmatprep.mubr.f32.mxu0 0.0
  %2794 = vmatmul.mubr.f32.gmra.mrb[0].mxu0 %v2724
  %v2795 = vpop.f32.mrb[0].mxu0
  %v2796 = vadd.f32 %v45, %v2795
  %v2797 = vpop.f32.mrb[0].mxu0
  %2798 = vmatprep.mubr.f32.mxu0 0.0
  %2799 = vmatmul.mubr.f32.gmra.mrb[0].mxu0 %v2727
  %v2800 = vpop.f32.mrb[0].mxu0
  %v2801 = vadd.f32 %v45, %v2800
  %v2802 = vpop.f32.mrb[0].mxu0
  %2803 = vdwg.mxu0
  %v2804 = vrcp.pop 6.0
  %s2805 = vtos %v2804
  %s2806 = smul.f32 %s2132, %s2805
  %v2807 = vmul.f32 %v2459, 2.0
  %v2808 = vmul.f32 %v2464, 2.0
  %v2809 = vadd.f32 %v2290, %v2807
  %v2810 = vadd.f32 %v2295, %v2808
  %v2811 = vmul.f32 %v2627, 2.0
  %v2812 = vmul.f32 %v2632, 2.0
  %v2813 = vadd.f32 %v2809, %v2811
  %v2814 = vadd.f32 %v2810, %v2812
  %v2815 = vadd.f32 %v2813, %v2796
  %v2816 = vadd.f32 %v2814, %v2801
  %v2817 = vstv %s2806
  %v2818 = vmul.f32 %v2817, %v2815
  %v2819 = vmul.f32 %v2817, %v2816
  %v2820 = vadd.f32 %v2127, %v2818
  %v2821 = vadd.f32 %v2128, %v2819
  %s2822 = scalar_lea.vmem %s6, 64
  %2823 = vst.msk [vmem:[%s2822] sm:$0xff] %vm49, %v2820
  %2824 = vst.msk [vmem:[%s2822 + $0x8] sm:$0xff] %vm49, %v2821
  %s2825 = sld [smem:[#allocation3 + $0x4]]
  %s2826 = smul.f32 %s2825, 0.5
  %v2828 = vsel %vm49, %v2820, 0
  %v2831 = vsel %vm49, %v2821, 0
  %2833 = vmatprep.subr.mxu0 0.0
  %2834 = vmatpush1.msra.mxu0 %v27
  %2835 = vmatprep.subr.mxu0 0.0
  %2836 = vmatpush1.msra.mxu0 %v28
  %2837 = vmatprep.subr.mxu0 0.0
  %2838 = vmatpush1.msra.mxu0 0.0
  %2839 = vmatprep.subr.mxu0 0.0
  %2840 = vmatpush1.msra.mxu0 0.0
  %2841 = vmatprep.subr.mxu0 0.0
  %2842 = vmatpush1.msra.mxu0 0.0
  %2843 = vmatprep.subr.mxu0 0.0
  %2844 = vmatpush1.msra.mxu0 0.0
  %2845 = vmatprep.subr.mxu0 0.0
  %2846 = vmatpush1.msra.mxu0 0.0
  %2847 = vmatprep.subr.mxu0 0.0
  %2848 = vmatpush1.msra.mxu0 0.0
  %2849 = vmatprep.subr.mxu0 0.0
  %2850 = vmatpush1.msra.mxu0 0.0
  %2851 = vmatprep.subr.mxu0 0.0
  %2852 = vmatpush1.msra.mxu0 0.0
  %2853 = vmatprep.subr.mxu0 0.0
  %2854 = vmatpush1.msra.mxu0 0.0
  %2855 = vmatprep.subr.mxu0 0.0
  %2856 = vmatpush1.msra.mxu0 0.0
  %2857 = vmatprep.subr.mxu0 0.0
  %2858 = vmatpush1.msra.mxu0 0.0
  %2859 = vmatprep.subr.mxu0 0.0
  %2860 = vmatpush1.msra.mxu0 0.0
  %2861 = vmatprep.subr.mxu0 0.0
  %2862 = vmatpush1.msra.mxu0 0.0
  %2863 = vmatprep.subr.mxu0 0.0
  %2864 = vmatpush1.msra.mxu0 0.0
  %2865 = vmatprep.subr.mxu0 0.0
  %2866 = vmatpush1.msra.mxu0 0.0
  %2867 = vmatprep.subr.mxu0 0.0
  %2868 = vmatpush1.msra.mxu0 0.0
  %2869 = vmatprep.subr.mxu0 0.0
  %2870 = vmatpush1.msra.mxu0 0.0
  %2871 = vmatprep.subr.mxu0 0.0
  %2872 = vmatpush1.msra.mxu0 0.0
  %2873 = vmatprep.subr.mxu0 0.0
  %2874 = vmatpush1.msra.mxu0 0.0
  %2875 = vmatprep.subr.mxu0 0.0
  %2876 = vmatpush1.msra.mxu0 0.0
  %2877 = vmatprep.subr.mxu0 0.0
  %2878 = vmatpush1.msra.mxu0 0.0
  %2879 = vmatprep.subr.mxu0 0.0
  %2880 = vmatpush1.msra.mxu0 0.0
  %2881 = vmatprep.subr.mxu0 0.0
  %2882 = vmatpush1.msra.mxu0 0.0
  %2883 = vmatprep.subr.mxu0 0.0
  %2884 = vmatpush1.msra.mxu0 0.0
  %2885 = vmatprep.subr.mxu0 0.0
  %2886 = vmatpush1.msra.mxu0 0.0
  %2887 = vmatprep.subr.mxu0 0.0
  %2888 = vmatpush1.msra.mxu0 0.0
  %2889 = vmatprep.subr.mxu0 0.0
  %2890 = vmatpush1.msra.mxu0 0.0
  %2891 = vmatprep.subr.mxu0 0.0
  %2892 = vmatpush1.msra.mxu0 0.0
  %2893 = vmatprep.subr.mxu0 0.0
  %2894 = vmatpush1.msra.mxu0 0.0
  %2895 = vmatprep.subr.mxu0 0.0
  %2896 = vmatpush1.msra.mxu0 0.0
  %2897 = vmatprep.mubr.f32.mxu0 0.0
  %2898 = vmatmul.mubr.f32.gmra.mrb[0].mxu0 %v2828
  %v2899 = vpop.f32.mrb[0].mxu0
  %v2900 = vadd.f32 %v38, %v2899
  %v2901 = vpop.f32.mrb[0].mxu0
  %2902 = vmatprep.mubr.f32.mxu0 0.0
  %2903 = vmatmul.mubr.f32.gmra.mrb[0].mxu0 %v2831
  %v2904 = vpop.f32.mrb[0].mxu0
  %v2905 = vadd.f32 %v38, %v2904
  %v2906 = vpop.f32.mrb[0].mxu0
  %2907 = vdwg.mxu0
  %v2908 = vtanh.pop %v2900
  %v2909 = vtanh.pop %v2905
  %v2911 = vsel %vm137, %v2908, 0
  %v2914 = vsel %vm137, %v2909, 0
  %2916 = vmatprep.subr.mxu0 0.0
  %2917 = vmatpush1.msra.mxu0 %v29
  %2918 = vmatprep.subr.mxu0 0.0
  %2919 = vmatpush1.msra.mxu0 %v30
  %2920 = vmatprep.subr.mxu0 0.0
  %2921 = vmatpush1.msra.mxu0 %v31
  %2922 = vmatprep.subr.mxu0 0.0
  %2923 = vmatpush1.msra.mxu0 %v32
  %2924 = vmatprep.subr.mxu0 0.0
  %2925 = vmatpush1.msra.mxu0 0.0
  %2926 = vmatprep.subr.mxu0 0.0
  %2927 = vmatpush1.msra.mxu0 0.0
  %2928 = vmatprep.subr.mxu0 0.0
  %2929 = vmatpush1.msra.mxu0 0.0
  %2930 = vmatprep.subr.mxu0 0.0
  %2931 = vmatpush1.msra.mxu0 0.0
  %2932 = vmatprep.subr.mxu0 0.0
  %2933 = vmatpush1.msra.mxu0 0.0
  %2934 = vmatprep.subr.mxu0 0.0
  %2935 = vmatpush1.msra.mxu0 0.0
  %2936 = vmatprep.subr.mxu0 0.0
  %2937 = vmatpush1.msra.mxu0 0.0
  %2938 = vmatprep.subr.mxu0 0.0
  %2939 = vmatpush1.msra.mxu0 0.0
  %2940 = vmatprep.subr.mxu0 0.0
  %2941 = vmatpush1.msra.mxu0 0.0
  %2942 = vmatprep.subr.mxu0 0.0
  %2943 = vmatpush1.msra.mxu0 0.0
  %2944 = vmatprep.subr.mxu0 0.0
  %2945 = vmatpush1.msra.mxu0 0.0
  %2946 = vmatprep.subr.mxu0 0.0
  %2947 = vmatpush1.msra.mxu0 0.0
  %2948 = vmatprep.subr.mxu0 0.0
  %2949 = vmatpush1.msra.mxu0 0.0
  %2950 = vmatprep.subr.mxu0 0.0
  %2951 = vmatpush1.msra.mxu0 0.0
  %2952 = vmatprep.subr.mxu0 0.0
  %2953 = vmatpush1.msra.mxu0 0.0
  %2954 = vmatprep.subr.mxu0 0.0
  %2955 = vmatpush1.msra.mxu0 0.0
  %2956 = vmatprep.subr.mxu0 0.0
  %2957 = vmatpush1.msra.mxu0 0.0
  %2958 = vmatprep.subr.mxu0 0.0
  %2959 = vmatpush1.msra.mxu0 0.0
  %2960 = vmatprep.subr.mxu0 0.0
  %2961 = vmatpush1.msra.mxu0 0.0
  %2962 = vmatprep.subr.mxu0 0.0
  %2963 = vmatpush1.msra.mxu0 0.0
  %2964 = vmatprep.subr.mxu0 0.0
  %2965 = vmatpush1.msra.mxu0 0.0
  %2966 = vmatprep.subr.mxu0 0.0
  %2967 = vmatpush1.msra.mxu0 0.0
  %2968 = vmatprep.subr.mxu0 0.0
  %2969 = vmatpush1.msra.mxu0 0.0
  %2970 = vmatprep.subr.mxu0 0.0
  %2971 = vmatpush1.msra.mxu0 0.0
  %2972 = vmatprep.subr.mxu0 0.0
  %2973 = vmatpush1.msra.mxu0 0.0
  %2974 = vmatprep.subr.mxu0 0.0
  %2975 = vmatpush1.msra.mxu0 0.0
  %2976 = vmatprep.subr.mxu0 0.0
  %2977 = vmatpush1.msra.mxu0 0.0
  %2978 = vmatprep.subr.mxu0 0.0
  %2979 = vmatpush1.msra.mxu0 0.0
  %2980 = vmatprep.mubr.f32.mxu0 0.0
  %2981 = vmatmul.mubr.f32.gmra.mrb[0].mxu0 %v2911
  %v2982 = vpop.f32.mrb[0].mxu0
  %v2983 = vadd.f32 %v45, %v2982
  %v2984 = vpop.f32.mrb[0].mxu0
  %2985 = vmatprep.mubr.f32.mxu0 0.0
  %2986 = vmatmul.mubr.f32.gmra.mrb[0].mxu0 %v2914
  %v2987 = vpop.f32.mrb[0].mxu0
  %v2988 = vadd.f32 %v45, %v2987
  %v2989 = vpop.f32.mrb[0].mxu0
  %2990 = vdwg.mxu0
  %v2991 = vstv %s2826
  %v2992 = vmul.f32 %v2991, %v2983
  %v2993 = vmul.f32 %v2991, %v2988
  %v2994 = vadd.f32 %v2820, %v2992
  %v2995 = vadd.f32 %v2821, %v2993
  %v2997 = vsel %vm49, %v2994, 0
  %v3000 = vsel %vm49, %v2995, 0
  %3002 = vmatprep.subr.mxu0 0.0
  %3003 = vmatpush1.msra.mxu0 %v27
  %3004 = vmatprep.subr.mxu0 0.0
  %3005 = vmatpush1.msra.mxu0 %v28
  %3006 = vmatprep.subr.mxu0 0.0
  %3007 = vmatpush1.msra.mxu0 0.0
  %3008 = vmatprep.subr.mxu0 0.0
  %3009 = vmatpush1.msra.mxu0 0.0
  %3010 = vmatprep.subr.mxu0 0.0
  %3011 = vmatpush1.msra.mxu0 0.0
  %3012 = vmatprep.subr.mxu0 0.0
  %3013 = vmatpush1.msra.mxu0 0.0
  %3014 = vmatprep.subr.mxu0 0.0
  %3015 = vmatpush1.msra.mxu0 0.0
  %3016 = vmatprep.subr.mxu0 0.0
  %3017 = vmatpush1.msra.mxu0 0.0
  %3018 = vmatprep.subr.mxu0 0.0
  %3019 = vmatpush1.msra.mxu0 0.0
  %3020 = vmatprep.subr.mxu0 0.0
  %3021 = vmatpush1.msra.mxu0 0.0
  %3022 = vmatprep.subr.mxu0 0.0
  %3023 = vmatpush1.msra.mxu0 0.0
  %3024 = vmatprep.subr.mxu0 0.0
  %3025 = vmatpush1.msra.mxu0 0.0
  %3026 = vmatprep.subr.mxu0 0.0
  %3027 = vmatpush1.msra.mxu0 0.0
  %3028 = vmatprep.subr.mxu0 0.0
  %3029 = vmatpush1.msra.mxu0 0.0
  %3030 = vmatprep.subr.mxu0 0.0
  %3031 = vmatpush1.msra.mxu0 0.0
  %3032 = vmatprep.subr.mxu0 0.0
  %3033 = vmatpush1.msra.mxu0 0.0
  %3034 = vmatprep.subr.mxu0 0.0
  %3035 = vmatpush1.msra.mxu0 0.0
  %3036 = vmatprep.subr.mxu0 0.0
  %3037 = vmatpush1.msra.mxu0 0.0
  %3038 = vmatprep.subr.mxu0 0.0
  %3039 = vmatpush1.msra.mxu0 0.0
  %3040 = vmatprep.subr.mxu0 0.0
  %3041 = vmatpush1.msra.mxu0 0.0
  %3042 = vmatprep.subr.mxu0 0.0
  %3043 = vmatpush1.msra.mxu0 0.0
  %3044 = vmatprep.subr.mxu0 0.0
  %3045 = vmatpush1.msra.mxu0 0.0
  %3046 = vmatprep.subr.mxu0 0.0
  %3047 = vmatpush1.msra.mxu0 0.0
  %3048 = vmatprep.subr.mxu0 0.0
  %3049 = vmatpush1.msra.mxu0 0.0
  %3050 = vmatprep.subr.mxu0 0.0
  %3051 = vmatpush1.msra.mxu0 0.0
  %3052 = vmatprep.subr.mxu0 0.0
  %3053 = vmatpush1.msra.mxu0 0.0
  %3054 = vmatprep.subr.mxu0 0.0
  %3055 = vmatpush1.msra.mxu0 0.0
  %3056 = vmatprep.subr.mxu0 0.0
  %3057 = vmatpush1.msra.mxu0 0.0
  %3058 = vmatprep.subr.mxu0 0.0
  %3059 = vmatpush1.msra.mxu0 0.0
  %3060 = vmatprep.subr.mxu0 0.0
  %3061 = vmatpush1.msra.mxu0 0.0
  %3062 = vmatprep.subr.mxu0 0.0
  %3063 = vmatpush1.msra.mxu0 0.0
  %3064 = vmatprep.subr.mxu0 0.0
  %3065 = vmatpush1.msra.mxu0 0.0
  %3066 = vmatprep.mubr.f32.mxu0 0.0
  %3067 = vmatmul.mubr.f32.gmra.mrb[0].mxu0 %v2997
  %v3068 = vpop.f32.mrb[0].mxu0
  %v3069 = vadd.f32 %v38, %v3068
  %v3070 = vpop.f32.mrb[0].mxu0
  %3071 = vmatprep.mubr.f32.mxu0 0.0
  %3072 = vmatmul.mubr.f32.gmra.mrb[0].mxu0 %v3000
  %v3073 = vpop.f32.mrb[0].mxu0
  %v3074 = vadd.f32 %v38, %v3073
  %v3075 = vpop.f32.mrb[0].mxu0
  %3076 = vdwg.mxu0
  %v3077 = vtanh.pop %v3069
  %v3078 = vtanh.pop %v3074
  %v3080 = vsel %vm137, %v3077, 0
  %v3083 = vsel %vm137, %v3078, 0
  %3085 = vmatprep.subr.mxu0 0.0
  %3086 = vmatpush1.msra.mxu0 %v29
  %3087 = vmatprep.subr.mxu0 0.0
  %3088 = vmatpush1.msra.mxu0 %v30
  %3089 = vmatprep.subr.mxu0 0.0
  %3090 = vmatpush1.msra.mxu0 %v31
  %3091 = vmatprep.subr.mxu0 0.0
  %3092 = vmatpush1.msra.mxu0 %v32
  %3093 = vmatprep.subr.mxu0 0.0
  %3094 = vmatpush1.msra.mxu0 0.0
  %3095 = vmatprep.subr.mxu0 0.0
  %3096 = vmatpush1.msra.mxu0 0.0
  %3097 = vmatprep.subr.mxu0 0.0
  %3098 = vmatpush1.msra.mxu0 0.0
  %3099 = vmatprep.subr.mxu0 0.0
  %3100 = vmatpush1.msra.mxu0 0.0
  %3101 = vmatprep.subr.mxu0 0.0
  %3102 = vmatpush1.msra.mxu0 0.0
  %3103 = vmatprep.subr.mxu0 0.0
  %3104 = vmatpush1.msra.mxu0 0.0
  %3105 = vmatprep.subr.mxu0 0.0
  %3106 = vmatpush1.msra.mxu0 0.0
  %3107 = vmatprep.subr.mxu0 0.0
  %3108 = vmatpush1.msra.mxu0 0.0
  %3109 = vmatprep.subr.mxu0 0.0
  %3110 = vmatpush1.msra.mxu0 0.0
  %3111 = vmatprep.subr.mxu0 0.0
  %3112 = vmatpush1.msra.mxu0 0.0
  %3113 = vmatprep.subr.mxu0 0.0
  %3114 = vmatpush1.msra.mxu0 0.0
  %3115 = vmatprep.subr.mxu0 0.0
  %3116 = vmatpush1.msra.mxu0 0.0
  %3117 = vmatprep.subr.mxu0 0.0
  %3118 = vmatpush1.msra.mxu0 0.0
  %3119 = vmatprep.subr.mxu0 0.0
  %3120 = vmatpush1.msra.mxu0 0.0
  %3121 = vmatprep.subr.mxu0 0.0
  %3122 = vmatpush1.msra.mxu0 0.0
  %3123 = vmatprep.subr.mxu0 0.0
  %3124 = vmatpush1.msra.mxu0 0.0
  %3125 = vmatprep.subr.mxu0 0.0
  %3126 = vmatpush1.msra.mxu0 0.0
  %3127 = vmatprep.subr.mxu0 0.0
  %3128 = vmatpush1.msra.mxu0 0.0
  %3129 = vmatprep.subr.mxu0 0.0
  %3130 = vmatpush1.msra.mxu0 0.0
  %3131 = vmatprep.subr.mxu0 0.0
  %3132 = vmatpush1.msra.mxu0 0.0
  %3133 = vmatprep.subr.mxu0 0.0
  %3134 = vmatpush1.msra.mxu0 0.0
  %3135 = vmatprep.subr.mxu0 0.0
  %3136 = vmatpush1.msra.mxu0 0.0
  %3137 = vmatprep.subr.mxu0 0.0
  %3138 = vmatpush1.msra.mxu0 0.0
  %3139 = vmatprep.subr.mxu0 0.0
  %3140 = vmatpush1.msra.mxu0 0.0
  %3141 = vmatprep.subr.mxu0 0.0
  %3142 = vmatpush1.msra.mxu0 0.0
  %3143 = vmatprep.subr.mxu0 0.0
  %3144 = vmatpush1.msra.mxu0 0.0
  %3145 = vmatprep.subr.mxu0 0.0
  %3146 = vmatpush1.msra.mxu0 0.0
  %3147 = vmatprep.subr.mxu0 0.0
  %3148 = vmatpush1.msra.mxu0 0.0
  %3149 = vmatprep.mubr.f32.mxu0 0.0
  %3150 = vmatmul.mubr.f32.gmra.mrb[0].mxu0 %v3080
  %v3151 = vpop.f32.mrb[0].mxu0
  %v3152 = vadd.f32 %v45, %v3151
  %v3153 = vpop.f32.mrb[0].mxu0
  %3154 = vmatprep.mubr.f32.mxu0 0.0
  %3155 = vmatmul.mubr.f32.gmra.mrb[0].mxu0 %v3083
  %v3156 = vpop.f32.mrb[0].mxu0
  %v3157 = vadd.f32 %v45, %v3156
  %v3158 = vpop.f32.mrb[0].mxu0
  %3159 = vdwg.mxu0
  %v3160 = vmul.f32 %v2991, %v3152
  %v3161 = vmul.f32 %v2991, %v3157
  %v3162 = vadd.f32 %v2820, %v3160
  %v3163 = vadd.f32 %v2821, %v3161
  %v3165 = vsel %vm49, %v3162, 0
  %v3168 = vsel %vm49, %v3163, 0
  %3170 = vmatprep.subr.mxu0 0.0
  %3171 = vmatpush1.msra.mxu0 %v27
  %3172 = vmatprep.subr.mxu0 0.0
  %3173 = vmatpush1.msra.mxu0 %v28
  %3174 = vmatprep.subr.mxu0 0.0
  %3175 = vmatpush1.msra.mxu0 0.0
  %3176 = vmatprep.subr.mxu0 0.0
  %3177 = vmatpush1.msra.mxu0 0.0
  %3178 = vmatprep.subr.mxu0 0.0
  %3179 = vmatpush1.msra.mxu0 0.0
  %3180 = vmatprep.subr.mxu0 0.0
  %3181 = vmatpush1.msra.mxu0 0.0
  %3182 = vmatprep.subr.mxu0 0.0
  %3183 = vmatpush1.msra.mxu0 0.0
  %3184 = vmatprep.subr.mxu0 0.0
  %3185 = vmatpush1.msra.mxu0 0.0
  %3186 = vmatprep.subr.mxu0 0.0
  %3187 = vmatpush1.msra.mxu0 0.0
  %3188 = vmatprep.subr.mxu0 0.0
  %3189 = vmatpush1.msra.mxu0 0.0
  %3190 = vmatprep.subr.mxu0 0.0
  %3191 = vmatpush1.msra.mxu0 0.0
  %3192 = vmatprep.subr.mxu0 0.0
  %3193 = vmatpush1.msra.mxu0 0.0
  %3194 = vmatprep.subr.mxu0 0.0
  %3195 = vmatpush1.msra.mxu0 0.0
  %3196 = vmatprep.subr.mxu0 0.0
  %3197 = vmatpush1.msra.mxu0 0.0
  %3198 = vmatprep.subr.mxu0 0.0
  %3199 = vmatpush1.msra.mxu0 0.0
  %3200 = vmatprep.subr.mxu0 0.0
  %3201 = vmatpush1.msra.mxu0 0.0
  %3202 = vmatprep.subr.mxu0 0.0
  %3203 = vmatpush1.msra.mxu0 0.0
  %3204 = vmatprep.subr.mxu0 0.0
  %3205 = vmatpush1.msra.mxu0 0.0
  %3206 = vmatprep.subr.mxu0 0.0
  %3207 = vmatpush1.msra.mxu0 0.0
  %3208 = vmatprep.subr.mxu0 0.0
  %3209 = vmatpush1.msra.mxu0 0.0
  %3210 = vmatprep.subr.mxu0 0.0
  %3211 = vmatpush1.msra.mxu0 0.0
  %3212 = vmatprep.subr.mxu0 0.0
  %3213 = vmatpush1.msra.mxu0 0.0
  %3214 = vmatprep.subr.mxu0 0.0
  %3215 = vmatpush1.msra.mxu0 0.0
  %3216 = vmatprep.subr.mxu0 0.0
  %3217 = vmatpush1.msra.mxu0 0.0
  %3218 = vmatprep.subr.mxu0 0.0
  %3219 = vmatpush1.msra.mxu0 0.0
  %3220 = vmatprep.subr.mxu0 0.0
  %3221 = vmatpush1.msra.mxu0 0.0
  %3222 = vmatprep.subr.mxu0 0.0
  %3223 = vmatpush1.msra.mxu0 0.0
  %3224 = vmatprep.subr.mxu0 0.0
  %3225 = vmatpush1.msra.mxu0 0.0
  %3226 = vmatprep.subr.mxu0 0.0
  %3227 = vmatpush1.msra.mxu0 0.0
  %3228 = vmatprep.subr.mxu0 0.0
  %3229 = vmatpush1.msra.mxu0 0.0
  %3230 = vmatprep.subr.mxu0 0.0
  %3231 = vmatpush1.msra.mxu0 0.0
  %3232 = vmatprep.subr.mxu0 0.0
  %3233 = vmatpush1.msra.mxu0 0.0
  %3234 = vmatprep.mubr.f32.mxu0 0.0
  %3235 = vmatmul.mubr.f32.gmra.mrb[0].mxu0 %v3165
  %v3236 = vpop.f32.mrb[0].mxu0
  %v3237 = vadd.f32 %v38, %v3236
  %v3238 = vpop.f32.mrb[0].mxu0
  %3239 = vmatprep.mubr.f32.mxu0 0.0
  %3240 = vmatmul.mubr.f32.gmra.mrb[0].mxu0 %v3168
  %v3241 = vpop.f32.mrb[0].mxu0
  %v3242 = vadd.f32 %v38, %v3241
  %v3243 = vpop.f32.mrb[0].mxu0
  %3244 = vdwg.mxu0
  %v3245 = vtanh.pop %v3237
  %v3246 = vtanh.pop %v3242
  %v3248 = vsel %vm137, %v3245, 0
  %v3251 = vsel %vm137, %v3246, 0
  %3253 = vmatprep.subr.mxu0 0.0
  %3254 = vmatpush1.msra.mxu0 %v29
  %3255 = vmatprep.subr.mxu0 0.0
  %3256 = vmatpush1.msra.mxu0 %v30
  %3257 = vmatprep.subr.mxu0 0.0
  %3258 = vmatpush1.msra.mxu0 %v31
  %3259 = vmatprep.subr.mxu0 0.0
  %3260 = vmatpush1.msra.mxu0 %v32
  %3261 = vmatprep.subr.mxu0 0.0
  %3262 = vmatpush1.msra.mxu0 0.0
  %3263 = vmatprep.subr.mxu0 0.0
  %3264 = vmatpush1.msra.mxu0 0.0
  %3265 = vmatprep.subr.mxu0 0.0
  %3266 = vmatpush1.msra.mxu0 0.0
  %3267 = vmatprep.subr.mxu0 0.0
  %3268 = vmatpush1.msra.mxu0 0.0
  %3269 = vmatprep.subr.mxu0 0.0
  %3270 = vmatpush1.msra.mxu0 0.0
  %3271 = vmatprep.subr.mxu0 0.0
  %3272 = vmatpush1.msra.mxu0 0.0
  %3273 = vmatprep.subr.mxu0 0.0
  %3274 = vmatpush1.msra.mxu0 0.0
  %3275 = vmatprep.subr.mxu0 0.0
  %3276 = vmatpush1.msra.mxu0 0.0
  %3277 = vmatprep.subr.mxu0 0.0
  %3278 = vmatpush1.msra.mxu0 0.0
  %3279 = vmatprep.subr.mxu0 0.0
  %3280 = vmatpush1.msra.mxu0 0.0
  %3281 = vmatprep.subr.mxu0 0.0
  %3282 = vmatpush1.msra.mxu0 0.0
  %3283 = vmatprep.subr.mxu0 0.0
  %3284 = vmatpush1.msra.mxu0 0.0
  %3285 = vmatprep.subr.mxu0 0.0
  %3286 = vmatpush1.msra.mxu0 0.0
  %3287 = vmatprep.subr.mxu0 0.0
  %3288 = vmatpush1.msra.mxu0 0.0
  %3289 = vmatprep.subr.mxu0 0.0
  %3290 = vmatpush1.msra.mxu0 0.0
  %3291 = vmatprep.subr.mxu0 0.0
  %3292 = vmatpush1.msra.mxu0 0.0
  %3293 = vmatprep.subr.mxu0 0.0
  %3294 = vmatpush1.msra.mxu0 0.0
  %3295 = vmatprep.subr.mxu0 0.0
  %3296 = vmatpush1.msra.mxu0 0.0
  %3297 = vmatprep.subr.mxu0 0.0
  %3298 = vmatpush1.msra.mxu0 0.0
  %3299 = vmatprep.subr.mxu0 0.0
  %3300 = vmatpush1.msra.mxu0 0.0
  %3301 = vmatprep.subr.mxu0 0.0
  %3302 = vmatpush1.msra.mxu0 0.0
  %3303 = vmatprep.subr.mxu0 0.0
  %3304 = vmatpush1.msra.mxu0 0.0
  %3305 = vmatprep.subr.mxu0 0.0
  %3306 = vmatpush1.msra.mxu0 0.0
  %3307 = vmatprep.subr.mxu0 0.0
  %3308 = vmatpush1.msra.mxu0 0.0
  %3309 = vmatprep.subr.mxu0 0.0
  %3310 = vmatpush1.msra.mxu0 0.0
  %3311 = vmatprep.subr.mxu0 0.0
  %3312 = vmatpush1.msra.mxu0 0.0
  %3313 = vmatprep.subr.mxu0 0.0
  %3314 = vmatpush1.msra.mxu0 0.0
  %3315 = vmatprep.subr.mxu0 0.0
  %3316 = vmatpush1.msra.mxu0 0.0
  %3317 = vmatprep.mubr.f32.mxu0 0.0
  %3318 = vmatmul.mubr.f32.gmra.mrb[0].mxu0 %v3248
  %v3319 = vpop.f32.mrb[0].mxu0
  %v3320 = vadd.f32 %v45, %v3319
  %v3321 = vpop.f32.mrb[0].mxu0
  %3322 = vmatprep.mubr.f32.mxu0 0.0
  %3323 = vmatmul.mubr.f32.gmra.mrb[0].mxu0 %v3251
  %v3324 = vpop.f32.mrb[0].mxu0
  %v3325 = vadd.f32 %v45, %v3324
  %v3326 = vpop.f32.mrb[0].mxu0
  %3327 = vdwg.mxu0
  %v3328 = vstv %s2825
  %v3329 = vmul.f32 %v3328, %v3320
  %v3330 = vmul.f32 %v3328, %v3325
  %v3331 = vadd.f32 %v2820, %v3329
  %v3332 = vadd.f32 %v2821, %v3330
  %v3334 = vsel %vm49, %v3331, 0
  %v3337 = vsel %vm49, %v3332, 0
  %3339 = vmatprep.subr.mxu0 0.0
  %3340 = vmatpush1.msra.mxu0 %v27
  %3341 = vmatprep.subr.mxu0 0.0
  %3342 = vmatpush1.msra.mxu0 %v28
  %3343 = vmatprep.subr.mxu0 0.0
  %3344 = vmatpush1.msra.mxu0 0.0
  %3345 = vmatprep.subr.mxu0 0.0
  %3346 = vmatpush1.msra.mxu0 0.0
  %3347 = vmatprep.subr.mxu0 0.0
  %3348 = vmatpush1.msra.mxu0 0.0
  %3349 = vmatprep.subr.mxu0 0.0
  %3350 = vmatpush1.msra.mxu0 0.0
  %3351 = vmatprep.subr.mxu0 0.0
  %3352 = vmatpush1.msra.mxu0 0.0
  %3353 = vmatprep.subr.mxu0 0.0
  %3354 = vmatpush1.msra.mxu0 0.0
  %3355 = vmatprep.subr.mxu0 0.0
  %3356 = vmatpush1.msra.mxu0 0.0
  %3357 = vmatprep.subr.mxu0 0.0
  %3358 = vmatpush1.msra.mxu0 0.0
  %3359 = vmatprep.subr.mxu0 0.0
  %3360 = vmatpush1.msra.mxu0 0.0
  %3361 = vmatprep.subr.mxu0 0.0
  %3362 = vmatpush1.msra.mxu0 0.0
  %3363 = vmatprep.subr.mxu0 0.0
  %3364 = vmatpush1.msra.mxu0 0.0
  %3365 = vmatprep.subr.mxu0 0.0
  %3366 = vmatpush1.msra.mxu0 0.0
  %3367 = vmatprep.subr.mxu0 0.0
  %3368 = vmatpush1.msra.mxu0 0.0
  %3369 = vmatprep.subr.mxu0 0.0
  %3370 = vmatpush1.msra.mxu0 0.0
  %3371 = vmatprep.subr.mxu0 0.0
  %3372 = vmatpush1.msra.mxu0 0.0
  %3373 = vmatprep.subr.mxu0 0.0
  %3374 = vmatpush1.msra.mxu0 0.0
  %3375 = vmatprep.subr.mxu0 0.0
  %3376 = vmatpush1.msra.mxu0 0.0
  %3377 = vmatprep.subr.mxu0 0.0
  %3378 = vmatpush1.msra.mxu0 0.0
  %3379 = vmatprep.subr.mxu0 0.0
  %3380 = vmatpush1.msra.mxu0 0.0
  %3381 = vmatprep.subr.mxu0 0.0
  %3382 = vmatpush1.msra.mxu0 0.0
  %3383 = vmatprep.subr.mxu0 0.0
  %3384 = vmatpush1.msra.mxu0 0.0
  %3385 = vmatprep.subr.mxu0 0.0
  %3386 = vmatpush1.msra.mxu0 0.0
  %3387 = vmatprep.subr.mxu0 0.0
  %3388 = vmatpush1.msra.mxu0 0.0
  %3389 = vmatprep.subr.mxu0 0.0
  %3390 = vmatpush1.msra.mxu0 0.0
  %3391 = vmatprep.subr.mxu0 0.0
  %3392 = vmatpush1.msra.mxu0 0.0
  %3393 = vmatprep.subr.mxu0 0.0
  %3394 = vmatpush1.msra.mxu0 0.0
  %3395 = vmatprep.subr.mxu0 0.0
  %3396 = vmatpush1.msra.mxu0 0.0
  %3397 = vmatprep.subr.mxu0 0.0
  %3398 = vmatpush1.msra.mxu0 0.0
  %3399 = vmatprep.subr.mxu0 0.0
  %3400 = vmatpush1.msra.mxu0 0.0
  %3401 = vmatprep.subr.mxu0 0.0
  %3402 = vmatpush1.msra.mxu0 0.0
  %3403 = vmatprep.mubr.f32.mxu0 0.0
  %3404 = vmatmul.mubr.f32.gmra.mrb[0].mxu0 %v3334
  %v3405 = vpop.f32.mrb[0].mxu0
  %v3406 = vadd.f32 %v38, %v3405
  %v3407 = vpop.f32.mrb[0].mxu0
  %3408 = vmatprep.mubr.f32.mxu0 0.0
  %3409 = vmatmul.mubr.f32.gmra.mrb[0].mxu0 %v3337
  %v3410 = vpop.f32.mrb[0].mxu0
  %v3411 = vadd.f32 %v38, %v3410
  %v3412 = vpop.f32.mrb[0].mxu0
  %3413 = vdwg.mxu0
  %v3414 = vtanh.pop %v3406
  %v3415 = vtanh.pop %v3411
  %v3417 = vsel %vm137, %v3414, 0
  %v3420 = vsel %vm137, %v3415, 0
  %3422 = vmatprep.subr.mxu0 0.0
  %3423 = vmatpush1.msra.mxu0 %v29
  %3424 = vmatprep.subr.mxu0 0.0
  %3425 = vmatpush1.msra.mxu0 %v30
  %3426 = vmatprep.subr.mxu0 0.0
  %3427 = vmatpush1.msra.mxu0 %v31
  %3428 = vmatprep.subr.mxu0 0.0
  %3429 = vmatpush1.msra.mxu0 %v32
  %3430 = vmatprep.subr.mxu0 0.0
  %3431 = vmatpush1.msra.mxu0 0.0
  %3432 = vmatprep.subr.mxu0 0.0
  %3433 = vmatpush1.msra.mxu0 0.0
  %3434 = vmatprep.subr.mxu0 0.0
  %3435 = vmatpush1.msra.mxu0 0.0
  %3436 = vmatprep.subr.mxu0 0.0
  %3437 = vmatpush1.msra.mxu0 0.0
  %3438 = vmatprep.subr.mxu0 0.0
  %3439 = vmatpush1.msra.mxu0 0.0
  %3440 = vmatprep.subr.mxu0 0.0
  %3441 = vmatpush1.msra.mxu0 0.0
  %3442 = vmatprep.subr.mxu0 0.0
  %3443 = vmatpush1.msra.mxu0 0.0
  %3444 = vmatprep.subr.mxu0 0.0
  %3445 = vmatpush1.msra.mxu0 0.0
  %3446 = vmatprep.subr.mxu0 0.0
  %3447 = vmatpush1.msra.mxu0 0.0
  %3448 = vmatprep.subr.mxu0 0.0
  %3449 = vmatpush1.msra.mxu0 0.0
  %3450 = vmatprep.subr.mxu0 0.0
  %3451 = vmatpush1.msra.mxu0 0.0
  %3452 = vmatprep.subr.mxu0 0.0
  %3453 = vmatpush1.msra.mxu0 0.0
  %3454 = vmatprep.subr.mxu0 0.0
  %3455 = vmatpush1.msra.mxu0 0.0
  %3456 = vmatprep.subr.mxu0 0.0
  %3457 = vmatpush1.msra.mxu0 0.0
  %3458 = vmatprep.subr.mxu0 0.0
  %3459 = vmatpush1.msra.mxu0 0.0
  %3460 = vmatprep.subr.mxu0 0.0
  %3461 = vmatpush1.msra.mxu0 0.0
  %3462 = vmatprep.subr.mxu0 0.0
  %3463 = vmatpush1.msra.mxu0 0.0
  %3464 = vmatprep.subr.mxu0 0.0
  %3465 = vmatpush1.msra.mxu0 0.0
  %3466 = vmatprep.subr.mxu0 0.0
  %3467 = vmatpush1.msra.mxu0 0.0
  %3468 = vmatprep.subr.mxu0 0.0
  %3469 = vmatpush1.msra.mxu0 0.0
  %3470 = vmatprep.subr.mxu0 0.0
  %3471 = vmatpush1.msra.mxu0 0.0
  %3472 = vmatprep.subr.mxu0 0.0
  %3473 = vmatpush1.msra.mxu0 0.0
  %3474 = vmatprep.subr.mxu0 0.0
  %3475 = vmatpush1.msra.mxu0 0.0
  %3476 = vmatprep.subr.mxu0 0.0
  %3477 = vmatpush1.msra.mxu0 0.0
  %3478 = vmatprep.subr.mxu0 0.0
  %3479 = vmatpush1.msra.mxu0 0.0
  %3480 = vmatprep.subr.mxu0 0.0
  %3481 = vmatpush1.msra.mxu0 0.0
  %3482 = vmatprep.subr.mxu0 0.0
  %3483 = vmatpush1.msra.mxu0 0.0
  %3484 = vmatprep.subr.mxu0 0.0
  %3485 = vmatpush1.msra.mxu0 0.0
  %3486 = vmatprep.mubr.f32.mxu0 0.0
  %3487 = vmatmul.mubr.f32.gmra.mrb[0].mxu0 %v3417
  %v3488 = vpop.f32.mrb[0].mxu0
  %v3489 = vadd.f32 %v45, %v3488
  %v3490 = vpop.f32.mrb[0].mxu0
  %3491 = vmatprep.mubr.f32.mxu0 0.0
  %3492 = vmatmul.mubr.f32.gmra.mrb[0].mxu0 %v3420
  %v3493 = vpop.f32.mrb[0].mxu0
  %v3494 = vadd.f32 %v45, %v3493
  %v3495 = vpop.f32.mrb[0].mxu0
  %3496 = vdwg.mxu0
  %v3497 = vrcp.pop 6.0
  %s3498 = vtos %v3497
  %s3499 = smul.f32 %s2825, %s3498
  %v3500 = vmul.f32 %v3152, 2.0
  %v3501 = vmul.f32 %v3157, 2.0
  %v3502 = vadd.f32 %v2983, %v3500
  %v3503 = vadd.f32 %v2988, %v3501
  %v3504 = vmul.f32 %v3320, 2.0
  %v3505 = vmul.f32 %v3325, 2.0
  %v3506 = vadd.f32 %v3502, %v3504
  %v3507 = vadd.f32 %v3503, %v3505
  %v3508 = vadd.f32 %v3506, %v3489
  %v3509 = vadd.f32 %v3507, %v3494
  %v3510 = vstv %s3499
  %v3511 = vmul.f32 %v3510, %v3508
  %v3512 = vmul.f32 %v3510, %v3509
  %v3513 = vadd.f32 %v2820, %v3511
  %v3514 = vadd.f32 %v2821, %v3512
  %s3515 = scalar_lea.vmem %s6, 80
  %3516 = vst.msk [vmem:[%s3515] sm:$0xff] %vm49, %v3513
  %3517 = vst.msk [vmem:[%s3515 + $0x8] sm:$0xff] %vm49, %v3514
  %s3518 = sld [smem:[#allocation3 + $0x5]]
  %s3519 = smul.f32 %s3518, 0.5
  %v3521 = vsel %vm49, %v3513, 0
  %v3524 = vsel %vm49, %v3514, 0
  %3526 = vmatprep.subr.mxu0 0.0
  %3527 = vmatpush1.msra.mxu0 %v27
  %3528 = vmatprep.subr.mxu0 0.0
  %3529 = vmatpush1.msra.mxu0 %v28
  %3530 = vmatprep.subr.mxu0 0.0
  %3531 = vmatpush1.msra.mxu0 0.0
  %3532 = vmatprep.subr.mxu0 0.0
  %3533 = vmatpush1.msra.mxu0 0.0
  %3534 = vmatprep.subr.mxu0 0.0
  %3535 = vmatpush1.msra.mxu0 0.0
  %3536 = vmatprep.subr.mxu0 0.0
  %3537 = vmatpush1.msra.mxu0 0.0
  %3538 = vmatprep.subr.mxu0 0.0
  %3539 = vmatpush1.msra.mxu0 0.0
  %3540 = vmatprep.subr.mxu0 0.0
  %3541 = vmatpush1.msra.mxu0 0.0
  %3542 = vmatprep.subr.mxu0 0.0
  %3543 = vmatpush1.msra.mxu0 0.0
  %3544 = vmatprep.subr.mxu0 0.0
  %3545 = vmatpush1.msra.mxu0 0.0
  %3546 = vmatprep.subr.mxu0 0.0
  %3547 = vmatpush1.msra.mxu0 0.0
  %3548 = vmatprep.subr.mxu0 0.0
  %3549 = vmatpush1.msra.mxu0 0.0
  %3550 = vmatprep.subr.mxu0 0.0
  %3551 = vmatpush1.msra.mxu0 0.0
  %3552 = vmatprep.subr.mxu0 0.0
  %3553 = vmatpush1.msra.mxu0 0.0
  %3554 = vmatprep.subr.mxu0 0.0
  %3555 = vmatpush1.msra.mxu0 0.0
  %3556 = vmatprep.subr.mxu0 0.0
  %3557 = vmatpush1.msra.mxu0 0.0
  %3558 = vmatprep.subr.mxu0 0.0
  %3559 = vmatpush1.msra.mxu0 0.0
  %3560 = vmatprep.subr.mxu0 0.0
  %3561 = vmatpush1.msra.mxu0 0.0
  %3562 = vmatprep.subr.mxu0 0.0
  %3563 = vmatpush1.msra.mxu0 0.0
  %3564 = vmatprep.subr.mxu0 0.0
  %3565 = vmatpush1.msra.mxu0 0.0
  %3566 = vmatprep.subr.mxu0 0.0
  %3567 = vmatpush1.msra.mxu0 0.0
  %3568 = vmatprep.subr.mxu0 0.0
  %3569 = vmatpush1.msra.mxu0 0.0
  %3570 = vmatprep.subr.mxu0 0.0
  %3571 = vmatpush1.msra.mxu0 0.0
  %3572 = vmatprep.subr.mxu0 0.0
  %3573 = vmatpush1.msra.mxu0 0.0
  %3574 = vmatprep.subr.mxu0 0.0
  %3575 = vmatpush1.msra.mxu0 0.0
  %3576 = vmatprep.subr.mxu0 0.0
  %3577 = vmatpush1.msra.mxu0 0.0
  %3578 = vmatprep.subr.mxu0 0.0
  %3579 = vmatpush1.msra.mxu0 0.0
  %3580 = vmatprep.subr.mxu0 0.0
  %3581 = vmatpush1.msra.mxu0 0.0
  %3582 = vmatprep.subr.mxu0 0.0
  %3583 = vmatpush1.msra.mxu0 0.0
  %3584 = vmatprep.subr.mxu0 0.0
  %3585 = vmatpush1.msra.mxu0 0.0
  %3586 = vmatprep.subr.mxu0 0.0
  %3587 = vmatpush1.msra.mxu0 0.0
  %3588 = vmatprep.subr.mxu0 0.0
  %3589 = vmatpush1.msra.mxu0 0.0
  %3590 = vmatprep.mubr.f32.mxu0 0.0
  %3591 = vmatmul.mubr.f32.gmra.mrb[0].mxu0 %v3521
  %v3592 = vpop.f32.mrb[0].mxu0
  %v3593 = vadd.f32 %v38, %v3592
  %v3594 = vpop.f32.mrb[0].mxu0
  %3595 = vmatprep.mubr.f32.mxu0 0.0
  %3596 = vmatmul.mubr.f32.gmra.mrb[0].mxu0 %v3524
  %v3597 = vpop.f32.mrb[0].mxu0
  %v3598 = vadd.f32 %v38, %v3597
  %v3599 = vpop.f32.mrb[0].mxu0
  %3600 = vdwg.mxu0
  %v3601 = vtanh.pop %v3593
  %v3602 = vtanh.pop %v3598
  %v3604 = vsel %vm137, %v3601, 0
  %v3607 = vsel %vm137, %v3602, 0
  %3609 = vmatprep.subr.mxu0 0.0
  %3610 = vmatpush1.msra.mxu0 %v29
  %3611 = vmatprep.subr.mxu0 0.0
  %3612 = vmatpush1.msra.mxu0 %v30
  %3613 = vmatprep.subr.mxu0 0.0
  %3614 = vmatpush1.msra.mxu0 %v31
  %3615 = vmatprep.subr.mxu0 0.0
  %3616 = vmatpush1.msra.mxu0 %v32
  %3617 = vmatprep.subr.mxu0 0.0
  %3618 = vmatpush1.msra.mxu0 0.0
  %3619 = vmatprep.subr.mxu0 0.0
  %3620 = vmatpush1.msra.mxu0 0.0
  %3621 = vmatprep.subr.mxu0 0.0
  %3622 = vmatpush1.msra.mxu0 0.0
  %3623 = vmatprep.subr.mxu0 0.0
  %3624 = vmatpush1.msra.mxu0 0.0
  %3625 = vmatprep.subr.mxu0 0.0
  %3626 = vmatpush1.msra.mxu0 0.0
  %3627 = vmatprep.subr.mxu0 0.0
  %3628 = vmatpush1.msra.mxu0 0.0
  %3629 = vmatprep.subr.mxu0 0.0
  %3630 = vmatpush1.msra.mxu0 0.0
  %3631 = vmatprep.subr.mxu0 0.0
  %3632 = vmatpush1.msra.mxu0 0.0
  %3633 = vmatprep.subr.mxu0 0.0
  %3634 = vmatpush1.msra.mxu0 0.0
  %3635 = vmatprep.subr.mxu0 0.0
  %3636 = vmatpush1.msra.mxu0 0.0
  %3637 = vmatprep.subr.mxu0 0.0
  %3638 = vmatpush1.msra.mxu0 0.0
  %3639 = vmatprep.subr.mxu0 0.0
  %3640 = vmatpush1.msra.mxu0 0.0
  %3641 = vmatprep.subr.mxu0 0.0
  %3642 = vmatpush1.msra.mxu0 0.0
  %3643 = vmatprep.subr.mxu0 0.0
  %3644 = vmatpush1.msra.mxu0 0.0
  %3645 = vmatprep.subr.mxu0 0.0
  %3646 = vmatpush1.msra.mxu0 0.0
  %3647 = vmatprep.subr.mxu0 0.0
  %3648 = vmatpush1.msra.mxu0 0.0
  %3649 = vmatprep.subr.mxu0 0.0
  %3650 = vmatpush1.msra.mxu0 0.0
  %3651 = vmatprep.subr.mxu0 0.0
  %3652 = vmatpush1.msra.mxu0 0.0
  %3653 = vmatprep.subr.mxu0 0.0
  %3654 = vmatpush1.msra.mxu0 0.0
  %3655 = vmatprep.subr.mxu0 0.0
  %3656 = vmatpush1.msra.mxu0 0.0
  %3657 = vmatprep.subr.mxu0 0.0
  %3658 = vmatpush1.msra.mxu0 0.0
  %3659 = vmatprep.subr.mxu0 0.0
  %3660 = vmatpush1.msra.mxu0 0.0
  %3661 = vmatprep.subr.mxu0 0.0
  %3662 = vmatpush1.msra.mxu0 0.0
  %3663 = vmatprep.subr.mxu0 0.0
  %3664 = vmatpush1.msra.mxu0 0.0
  %3665 = vmatprep.subr.mxu0 0.0
  %3666 = vmatpush1.msra.mxu0 0.0
  %3667 = vmatprep.subr.mxu0 0.0
  %3668 = vmatpush1.msra.mxu0 0.0
  %3669 = vmatprep.subr.mxu0 0.0
  %3670 = vmatpush1.msra.mxu0 0.0
  %3671 = vmatprep.subr.mxu0 0.0
  %3672 = vmatpush1.msra.mxu0 0.0
  %3673 = vmatprep.mubr.f32.mxu0 0.0
  %3674 = vmatmul.mubr.f32.gmra.mrb[0].mxu0 %v3604
  %v3675 = vpop.f32.mrb[0].mxu0
  %v3676 = vadd.f32 %v45, %v3675
  %v3677 = vpop.f32.mrb[0].mxu0
  %3678 = vmatprep.mubr.f32.mxu0 0.0
  %3679 = vmatmul.mubr.f32.gmra.mrb[0].mxu0 %v3607
  %v3680 = vpop.f32.mrb[0].mxu0
  %v3681 = vadd.f32 %v45, %v3680
  %v3682 = vpop.f32.mrb[0].mxu0
  %3683 = vdwg.mxu0
  %v3684 = vstv %s3519
  %v3685 = vmul.f32 %v3684, %v3676
  %v3686 = vmul.f32 %v3684, %v3681
  %v3687 = vadd.f32 %v3513, %v3685
  %v3688 = vadd.f32 %v3514, %v3686
  %v3690 = vsel %vm49, %v3687, 0
  %v3693 = vsel %vm49, %v3688, 0
  %3695 = vmatprep.subr.mxu0 0.0
  %3696 = vmatpush1.msra.mxu0 %v27
  %3697 = vmatprep.subr.mxu0 0.0
  %3698 = vmatpush1.msra.mxu0 %v28
  %3699 = vmatprep.subr.mxu0 0.0
  %3700 = vmatpush1.msra.mxu0 0.0
  %3701 = vmatprep.subr.mxu0 0.0
  %3702 = vmatpush1.msra.mxu0 0.0
  %3703 = vmatprep.subr.mxu0 0.0
  %3704 = vmatpush1.msra.mxu0 0.0
  %3705 = vmatprep.subr.mxu0 0.0
  %3706 = vmatpush1.msra.mxu0 0.0
  %3707 = vmatprep.subr.mxu0 0.0
  %3708 = vmatpush1.msra.mxu0 0.0
  %3709 = vmatprep.subr.mxu0 0.0
  %3710 = vmatpush1.msra.mxu0 0.0
  %3711 = vmatprep.subr.mxu0 0.0
  %3712 = vmatpush1.msra.mxu0 0.0
  %3713 = vmatprep.subr.mxu0 0.0
  %3714 = vmatpush1.msra.mxu0 0.0
  %3715 = vmatprep.subr.mxu0 0.0
  %3716 = vmatpush1.msra.mxu0 0.0
  %3717 = vmatprep.subr.mxu0 0.0
  %3718 = vmatpush1.msra.mxu0 0.0
  %3719 = vmatprep.subr.mxu0 0.0
  %3720 = vmatpush1.msra.mxu0 0.0
  %3721 = vmatprep.subr.mxu0 0.0
  %3722 = vmatpush1.msra.mxu0 0.0
  %3723 = vmatprep.subr.mxu0 0.0
  %3724 = vmatpush1.msra.mxu0 0.0
  %3725 = vmatprep.subr.mxu0 0.0
  %3726 = vmatpush1.msra.mxu0 0.0
  %3727 = vmatprep.subr.mxu0 0.0
  %3728 = vmatpush1.msra.mxu0 0.0
  %3729 = vmatprep.subr.mxu0 0.0
  %3730 = vmatpush1.msra.mxu0 0.0
  %3731 = vmatprep.subr.mxu0 0.0
  %3732 = vmatpush1.msra.mxu0 0.0
  %3733 = vmatprep.subr.mxu0 0.0
  %3734 = vmatpush1.msra.mxu0 0.0
  %3735 = vmatprep.subr.mxu0 0.0
  %3736 = vmatpush1.msra.mxu0 0.0
  %3737 = vmatprep.subr.mxu0 0.0
  %3738 = vmatpush1.msra.mxu0 0.0
  %3739 = vmatprep.subr.mxu0 0.0
  %3740 = vmatpush1.msra.mxu0 0.0
  %3741 = vmatprep.subr.mxu0 0.0
  %3742 = vmatpush1.msra.mxu0 0.0
  %3743 = vmatprep.subr.mxu0 0.0
  %3744 = vmatpush1.msra.mxu0 0.0
  %3745 = vmatprep.subr.mxu0 0.0
  %3746 = vmatpush1.msra.mxu0 0.0
  %3747 = vmatprep.subr.mxu0 0.0
  %3748 = vmatpush1.msra.mxu0 0.0
  %3749 = vmatprep.subr.mxu0 0.0
  %3750 = vmatpush1.msra.mxu0 0.0
  %3751 = vmatprep.subr.mxu0 0.0
  %3752 = vmatpush1.msra.mxu0 0.0
  %3753 = vmatprep.subr.mxu0 0.0
  %3754 = vmatpush1.msra.mxu0 0.0
  %3755 = vmatprep.subr.mxu0 0.0
  %3756 = vmatpush1.msra.mxu0 0.0
  %3757 = vmatprep.subr.mxu0 0.0
  %3758 = vmatpush1.msra.mxu0 0.0
  %3759 = vmatprep.mubr.f32.mxu0 0.0
  %3760 = vmatmul.mubr.f32.gmra.mrb[0].mxu0 %v3690
  %v3761 = vpop.f32.mrb[0].mxu0
  %v3762 = vadd.f32 %v38, %v3761
  %v3763 = vpop.f32.mrb[0].mxu0
  %3764 = vmatprep.mubr.f32.mxu0 0.0
  %3765 = vmatmul.mubr.f32.gmra.mrb[0].mxu0 %v3693
  %v3766 = vpop.f32.mrb[0].mxu0
  %v3767 = vadd.f32 %v38, %v3766
  %v3768 = vpop.f32.mrb[0].mxu0
  %3769 = vdwg.mxu0
  %v3770 = vtanh.pop %v3762
  %v3771 = vtanh.pop %v3767
  %v3773 = vsel %vm137, %v3770, 0
  %v3776 = vsel %vm137, %v3771, 0
  %3778 = vmatprep.subr.mxu0 0.0
  %3779 = vmatpush1.msra.mxu0 %v29
  %3780 = vmatprep.subr.mxu0 0.0
  %3781 = vmatpush1.msra.mxu0 %v30
  %3782 = vmatprep.subr.mxu0 0.0
  %3783 = vmatpush1.msra.mxu0 %v31
  %3784 = vmatprep.subr.mxu0 0.0
  %3785 = vmatpush1.msra.mxu0 %v32
  %3786 = vmatprep.subr.mxu0 0.0
  %3787 = vmatpush1.msra.mxu0 0.0
  %3788 = vmatprep.subr.mxu0 0.0
  %3789 = vmatpush1.msra.mxu0 0.0
  %3790 = vmatprep.subr.mxu0 0.0
  %3791 = vmatpush1.msra.mxu0 0.0
  %3792 = vmatprep.subr.mxu0 0.0
  %3793 = vmatpush1.msra.mxu0 0.0
  %3794 = vmatprep.subr.mxu0 0.0
  %3795 = vmatpush1.msra.mxu0 0.0
  %3796 = vmatprep.subr.mxu0 0.0
  %3797 = vmatpush1.msra.mxu0 0.0
  %3798 = vmatprep.subr.mxu0 0.0
  %3799 = vmatpush1.msra.mxu0 0.0
  %3800 = vmatprep.subr.mxu0 0.0
  %3801 = vmatpush1.msra.mxu0 0.0
  %3802 = vmatprep.subr.mxu0 0.0
  %3803 = vmatpush1.msra.mxu0 0.0
  %3804 = vmatprep.subr.mxu0 0.0
  %3805 = vmatpush1.msra.mxu0 0.0
  %3806 = vmatprep.subr.mxu0 0.0
  %3807 = vmatpush1.msra.mxu0 0.0
  %3808 = vmatprep.subr.mxu0 0.0
  %3809 = vmatpush1.msra.mxu0 0.0
  %3810 = vmatprep.subr.mxu0 0.0
  %3811 = vmatpush1.msra.mxu0 0.0
  %3812 = vmatprep.subr.mxu0 0.0
  %3813 = vmatpush1.msra.mxu0 0.0
  %3814 = vmatprep.subr.mxu0 0.0
  %3815 = vmatpush1.msra.mxu0 0.0
  %3816 = vmatprep.subr.mxu0 0.0
  %3817 = vmatpush1.msra.mxu0 0.0
  %3818 = vmatprep.subr.mxu0 0.0
  %3819 = vmatpush1.msra.mxu0 0.0
  %3820 = vmatprep.subr.mxu0 0.0
  %3821 = vmatpush1.msra.mxu0 0.0
  %3822 = vmatprep.subr.mxu0 0.0
  %3823 = vmatpush1.msra.mxu0 0.0
  %3824 = vmatprep.subr.mxu0 0.0
  %3825 = vmatpush1.msra.mxu0 0.0
  %3826 = vmatprep.subr.mxu0 0.0
  %3827 = vmatpush1.msra.mxu0 0.0
  %3828 = vmatprep.subr.mxu0 0.0
  %3829 = vmatpush1.msra.mxu0 0.0
  %3830 = vmatprep.subr.mxu0 0.0
  %3831 = vmatpush1.msra.mxu0 0.0
  %3832 = vmatprep.subr.mxu0 0.0
  %3833 = vmatpush1.msra.mxu0 0.0
  %3834 = vmatprep.subr.mxu0 0.0
  %3835 = vmatpush1.msra.mxu0 0.0
  %3836 = vmatprep.subr.mxu0 0.0
  %3837 = vmatpush1.msra.mxu0 0.0
  %3838 = vmatprep.subr.mxu0 0.0
  %3839 = vmatpush1.msra.mxu0 0.0
  %3840 = vmatprep.subr.mxu0 0.0
  %3841 = vmatpush1.msra.mxu0 0.0
  %3842 = vmatprep.mubr.f32.mxu0 0.0
  %3843 = vmatmul.mubr.f32.gmra.mrb[0].mxu0 %v3773
  %v3844 = vpop.f32.mrb[0].mxu0
  %v3845 = vadd.f32 %v45, %v3844
  %v3846 = vpop.f32.mrb[0].mxu0
  %3847 = vmatprep.mubr.f32.mxu0 0.0
  %3848 = vmatmul.mubr.f32.gmra.mrb[0].mxu0 %v3776
  %v3849 = vpop.f32.mrb[0].mxu0
  %v3850 = vadd.f32 %v45, %v3849
  %v3851 = vpop.f32.mrb[0].mxu0
  %3852 = vdwg.mxu0
  %v3853 = vmul.f32 %v3684, %v3845
  %v3854 = vmul.f32 %v3684, %v3850
  %v3855 = vadd.f32 %v3513, %v3853
  %v3856 = vadd.f32 %v3514, %v3854
  %v3858 = vsel %vm49, %v3855, 0
  %v3861 = vsel %vm49, %v3856, 0
  %3863 = vmatprep.subr.mxu0 0.0
  %3864 = vmatpush1.msra.mxu0 %v27
  %3865 = vmatprep.subr.mxu0 0.0
  %3866 = vmatpush1.msra.mxu0 %v28
  %3867 = vmatprep.subr.mxu0 0.0
  %3868 = vmatpush1.msra.mxu0 0.0
  %3869 = vmatprep.subr.mxu0 0.0
  %3870 = vmatpush1.msra.mxu0 0.0
  %3871 = vmatprep.subr.mxu0 0.0
  %3872 = vmatpush1.msra.mxu0 0.0
  %3873 = vmatprep.subr.mxu0 0.0
  %3874 = vmatpush1.msra.mxu0 0.0
  %3875 = vmatprep.subr.mxu0 0.0
  %3876 = vmatpush1.msra.mxu0 0.0
  %3877 = vmatprep.subr.mxu0 0.0
  %3878 = vmatpush1.msra.mxu0 0.0
  %3879 = vmatprep.subr.mxu0 0.0
  %3880 = vmatpush1.msra.mxu0 0.0
  %3881 = vmatprep.subr.mxu0 0.0
  %3882 = vmatpush1.msra.mxu0 0.0
  %3883 = vmatprep.subr.mxu0 0.0
  %3884 = vmatpush1.msra.mxu0 0.0
  %3885 = vmatprep.subr.mxu0 0.0
  %3886 = vmatpush1.msra.mxu0 0.0
  %3887 = vmatprep.subr.mxu0 0.0
  %3888 = vmatpush1.msra.mxu0 0.0
  %3889 = vmatprep.subr.mxu0 0.0
  %3890 = vmatpush1.msra.mxu0 0.0
  %3891 = vmatprep.subr.mxu0 0.0
  %3892 = vmatpush1.msra.mxu0 0.0
  %3893 = vmatprep.subr.mxu0 0.0
  %3894 = vmatpush1.msra.mxu0 0.0
  %3895 = vmatprep.subr.mxu0 0.0
  %3896 = vmatpush1.msra.mxu0 0.0
  %3897 = vmatprep.subr.mxu0 0.0
  %3898 = vmatpush1.msra.mxu0 0.0
  %3899 = vmatprep.subr.mxu0 0.0
  %3900 = vmatpush1.msra.mxu0 0.0
  %3901 = vmatprep.subr.mxu0 0.0
  %3902 = vmatpush1.msra.mxu0 0.0
  %3903 = vmatprep.subr.mxu0 0.0
  %3904 = vmatpush1.msra.mxu0 0.0
  %3905 = vmatprep.subr.mxu0 0.0
  %3906 = vmatpush1.msra.mxu0 0.0
  %3907 = vmatprep.subr.mxu0 0.0
  %3908 = vmatpush1.msra.mxu0 0.0
  %3909 = vmatprep.subr.mxu0 0.0
  %3910 = vmatpush1.msra.mxu0 0.0
  %3911 = vmatprep.subr.mxu0 0.0
  %3912 = vmatpush1.msra.mxu0 0.0
  %3913 = vmatprep.subr.mxu0 0.0
  %3914 = vmatpush1.msra.mxu0 0.0
  %3915 = vmatprep.subr.mxu0 0.0
  %3916 = vmatpush1.msra.mxu0 0.0
  %3917 = vmatprep.subr.mxu0 0.0
  %3918 = vmatpush1.msra.mxu0 0.0
  %3919 = vmatprep.subr.mxu0 0.0
  %3920 = vmatpush1.msra.mxu0 0.0
  %3921 = vmatprep.subr.mxu0 0.0
  %3922 = vmatpush1.msra.mxu0 0.0
  %3923 = vmatprep.subr.mxu0 0.0
  %3924 = vmatpush1.msra.mxu0 0.0
  %3925 = vmatprep.subr.mxu0 0.0
  %3926 = vmatpush1.msra.mxu0 0.0
  %3927 = vmatprep.mubr.f32.mxu0 0.0
  %3928 = vmatmul.mubr.f32.gmra.mrb[0].mxu0 %v3858
  %v3929 = vpop.f32.mrb[0].mxu0
  %v3930 = vadd.f32 %v38, %v3929
  %v3931 = vpop.f32.mrb[0].mxu0
  %3932 = vmatprep.mubr.f32.mxu0 0.0
  %3933 = vmatmul.mubr.f32.gmra.mrb[0].mxu0 %v3861
  %v3934 = vpop.f32.mrb[0].mxu0
  %v3935 = vadd.f32 %v38, %v3934
  %v3936 = vpop.f32.mrb[0].mxu0
  %3937 = vdwg.mxu0
  %v3938 = vtanh.pop %v3930
  %v3939 = vtanh.pop %v3935
  %v3941 = vsel %vm137, %v3938, 0
  %v3944 = vsel %vm137, %v3939, 0
  %3946 = vmatprep.subr.mxu0 0.0
  %3947 = vmatpush1.msra.mxu0 %v29
  %3948 = vmatprep.subr.mxu0 0.0
  %3949 = vmatpush1.msra.mxu0 %v30
  %3950 = vmatprep.subr.mxu0 0.0
  %3951 = vmatpush1.msra.mxu0 %v31
  %3952 = vmatprep.subr.mxu0 0.0
  %3953 = vmatpush1.msra.mxu0 %v32
  %3954 = vmatprep.subr.mxu0 0.0
  %3955 = vmatpush1.msra.mxu0 0.0
  %3956 = vmatprep.subr.mxu0 0.0
  %3957 = vmatpush1.msra.mxu0 0.0
  %3958 = vmatprep.subr.mxu0 0.0
  %3959 = vmatpush1.msra.mxu0 0.0
  %3960 = vmatprep.subr.mxu0 0.0
  %3961 = vmatpush1.msra.mxu0 0.0
  %3962 = vmatprep.subr.mxu0 0.0
  %3963 = vmatpush1.msra.mxu0 0.0
  %3964 = vmatprep.subr.mxu0 0.0
  %3965 = vmatpush1.msra.mxu0 0.0
  %3966 = vmatprep.subr.mxu0 0.0
  %3967 = vmatpush1.msra.mxu0 0.0
  %3968 = vmatprep.subr.mxu0 0.0
  %3969 = vmatpush1.msra.mxu0 0.0
  %3970 = vmatprep.subr.mxu0 0.0
  %3971 = vmatpush1.msra.mxu0 0.0
  %3972 = vmatprep.subr.mxu0 0.0
  %3973 = vmatpush1.msra.mxu0 0.0
  %3974 = vmatprep.subr.mxu0 0.0
  %3975 = vmatpush1.msra.mxu0 0.0
  %3976 = vmatprep.subr.mxu0 0.0
  %3977 = vmatpush1.msra.mxu0 0.0
  %3978 = vmatprep.subr.mxu0 0.0
  %3979 = vmatpush1.msra.mxu0 0.0
  %3980 = vmatprep.subr.mxu0 0.0
  %3981 = vmatpush1.msra.mxu0 0.0
  %3982 = vmatprep.subr.mxu0 0.0
  %3983 = vmatpush1.msra.mxu0 0.0
  %3984 = vmatprep.subr.mxu0 0.0
  %3985 = vmatpush1.msra.mxu0 0.0
  %3986 = vmatprep.subr.mxu0 0.0
  %3987 = vmatpush1.msra.mxu0 0.0
  %3988 = vmatprep.subr.mxu0 0.0
  %3989 = vmatpush1.msra.mxu0 0.0
  %3990 = vmatprep.subr.mxu0 0.0
  %3991 = vmatpush1.msra.mxu0 0.0
  %3992 = vmatprep.subr.mxu0 0.0
  %3993 = vmatpush1.msra.mxu0 0.0
  %3994 = vmatprep.subr.mxu0 0.0
  %3995 = vmatpush1.msra.mxu0 0.0
  %3996 = vmatprep.subr.mxu0 0.0
  %3997 = vmatpush1.msra.mxu0 0.0
  %3998 = vmatprep.subr.mxu0 0.0
  %3999 = vmatpush1.msra.mxu0 0.0
  %4000 = vmatprep.subr.mxu0 0.0
  %4001 = vmatpush1.msra.mxu0 0.0
  %4002 = vmatprep.subr.mxu0 0.0
  %4003 = vmatpush1.msra.mxu0 0.0
  %4004 = vmatprep.subr.mxu0 0.0
  %4005 = vmatpush1.msra.mxu0 0.0
  %4006 = vmatprep.subr.mxu0 0.0
  %4007 = vmatpush1.msra.mxu0 0.0
  %4008 = vmatprep.subr.mxu0 0.0
  %4009 = vmatpush1.msra.mxu0 0.0
  %4010 = vmatprep.mubr.f32.mxu0 0.0
  %4011 = vmatmul.mubr.f32.gmra.mrb[0].mxu0 %v3941
  %v4012 = vpop.f32.mrb[0].mxu0
  %v4013 = vadd.f32 %v45, %v4012
  %v4014 = vpop.f32.mrb[0].mxu0
  %4015 = vmatprep.mubr.f32.mxu0 0.0
  %4016 = vmatmul.mubr.f32.gmra.mrb[0].mxu0 %v3944
  %v4017 = vpop.f32.mrb[0].mxu0
  %v4018 = vadd.f32 %v45, %v4017
  %v4019 = vpop.f32.mrb[0].mxu0
  %4020 = vdwg.mxu0
  %v4021 = vstv %s3518
  %v4022 = vmul.f32 %v4021, %v4013
  %v4023 = vmul.f32 %v4021, %v4018
  %v4024 = vadd.f32 %v3513, %v4022
  %v4025 = vadd.f32 %v3514, %v4023
  %v4027 = vsel %vm49, %v4024, 0
  %v4030 = vsel %vm49, %v4025, 0
  %4032 = vmatprep.subr.mxu0 0.0
  %4033 = vmatpush1.msra.mxu0 %v27
  %4034 = vmatprep.subr.mxu0 0.0
  %4035 = vmatpush1.msra.mxu0 %v28
  %4036 = vmatprep.subr.mxu0 0.0
  %4037 = vmatpush1.msra.mxu0 0.0
  %4038 = vmatprep.subr.mxu0 0.0
  %4039 = vmatpush1.msra.mxu0 0.0
  %4040 = vmatprep.subr.mxu0 0.0
  %4041 = vmatpush1.msra.mxu0 0.0
  %4042 = vmatprep.subr.mxu0 0.0
  %4043 = vmatpush1.msra.mxu0 0.0
  %4044 = vmatprep.subr.mxu0 0.0
  %4045 = vmatpush1.msra.mxu0 0.0
  %4046 = vmatprep.subr.mxu0 0.0
  %4047 = vmatpush1.msra.mxu0 0.0
  %4048 = vmatprep.subr.mxu0 0.0
  %4049 = vmatpush1.msra.mxu0 0.0
  %4050 = vmatprep.subr.mxu0 0.0
  %4051 = vmatpush1.msra.mxu0 0.0
  %4052 = vmatprep.subr.mxu0 0.0
  %4053 = vmatpush1.msra.mxu0 0.0
  %4054 = vmatprep.subr.mxu0 0.0
  %4055 = vmatpush1.msra.mxu0 0.0
  %4056 = vmatprep.subr.mxu0 0.0
  %4057 = vmatpush1.msra.mxu0 0.0
  %4058 = vmatprep.subr.mxu0 0.0
  %4059 = vmatpush1.msra.mxu0 0.0
  %4060 = vmatprep.subr.mxu0 0.0
  %4061 = vmatpush1.msra.mxu0 0.0
  %4062 = vmatprep.subr.mxu0 0.0
  %4063 = vmatpush1.msra.mxu0 0.0
  %4064 = vmatprep.subr.mxu0 0.0
  %4065 = vmatpush1.msra.mxu0 0.0
  %4066 = vmatprep.subr.mxu0 0.0
  %4067 = vmatpush1.msra.mxu0 0.0
  %4068 = vmatprep.subr.mxu0 0.0
  %4069 = vmatpush1.msra.mxu0 0.0
  %4070 = vmatprep.subr.mxu0 0.0
  %4071 = vmatpush1.msra.mxu0 0.0
  %4072 = vmatprep.subr.mxu0 0.0
  %4073 = vmatpush1.msra.mxu0 0.0
  %4074 = vmatprep.subr.mxu0 0.0
  %4075 = vmatpush1.msra.mxu0 0.0
  %4076 = vmatprep.subr.mxu0 0.0
  %4077 = vmatpush1.msra.mxu0 0.0
  %4078 = vmatprep.subr.mxu0 0.0
  %4079 = vmatpush1.msra.mxu0 0.0
  %4080 = vmatprep.subr.mxu0 0.0
  %4081 = vmatpush1.msra.mxu0 0.0
  %4082 = vmatprep.subr.mxu0 0.0
  %4083 = vmatpush1.msra.mxu0 0.0
  %4084 = vmatprep.subr.mxu0 0.0
  %4085 = vmatpush1.msra.mxu0 0.0
  %4086 = vmatprep.subr.mxu0 0.0
  %4087 = vmatpush1.msra.mxu0 0.0
  %4088 = vmatprep.subr.mxu0 0.0
  %4089 = vmatpush1.msra.mxu0 0.0
  %4090 = vmatprep.subr.mxu0 0.0
  %4091 = vmatpush1.msra.mxu0 0.0
  %4092 = vmatprep.subr.mxu0 0.0
  %4093 = vmatpush1.msra.mxu0 0.0
  %4094 = vmatprep.subr.mxu0 0.0
  %4095 = vmatpush1.msra.mxu0 0.0
  %4096 = vmatprep.mubr.f32.mxu0 0.0
  %4097 = vmatmul.mubr.f32.gmra.mrb[0].mxu0 %v4027
  %v4098 = vpop.f32.mrb[0].mxu0
  %v4099 = vadd.f32 %v38, %v4098
  %v4100 = vpop.f32.mrb[0].mxu0
  %4101 = vmatprep.mubr.f32.mxu0 0.0
  %4102 = vmatmul.mubr.f32.gmra.mrb[0].mxu0 %v4030
  %v4103 = vpop.f32.mrb[0].mxu0
  %v4104 = vadd.f32 %v38, %v4103
  %v4105 = vpop.f32.mrb[0].mxu0
  %4106 = vdwg.mxu0
  %v4107 = vtanh.pop %v4099
  %v4108 = vtanh.pop %v4104
  %v4110 = vsel %vm137, %v4107, 0
  %v4113 = vsel %vm137, %v4108, 0
  %4115 = vmatprep.subr.mxu0 0.0
  %4116 = vmatpush1.msra.mxu0 %v29
  %4117 = vmatprep.subr.mxu0 0.0
  %4118 = vmatpush1.msra.mxu0 %v30
  %4119 = vmatprep.subr.mxu0 0.0
  %4120 = vmatpush1.msra.mxu0 %v31
  %4121 = vmatprep.subr.mxu0 0.0
  %4122 = vmatpush1.msra.mxu0 %v32
  %4123 = vmatprep.subr.mxu0 0.0
  %4124 = vmatpush1.msra.mxu0 0.0
  %4125 = vmatprep.subr.mxu0 0.0
  %4126 = vmatpush1.msra.mxu0 0.0
  %4127 = vmatprep.subr.mxu0 0.0
  %4128 = vmatpush1.msra.mxu0 0.0
  %4129 = vmatprep.subr.mxu0 0.0
  %4130 = vmatpush1.msra.mxu0 0.0
  %4131 = vmatprep.subr.mxu0 0.0
  %4132 = vmatpush1.msra.mxu0 0.0
  %4133 = vmatprep.subr.mxu0 0.0
  %4134 = vmatpush1.msra.mxu0 0.0
  %4135 = vmatprep.subr.mxu0 0.0
  %4136 = vmatpush1.msra.mxu0 0.0
  %4137 = vmatprep.subr.mxu0 0.0
  %4138 = vmatpush1.msra.mxu0 0.0
  %4139 = vmatprep.subr.mxu0 0.0
  %4140 = vmatpush1.msra.mxu0 0.0
  %4141 = vmatprep.subr.mxu0 0.0
  %4142 = vmatpush1.msra.mxu0 0.0
  %4143 = vmatprep.subr.mxu0 0.0
  %4144 = vmatpush1.msra.mxu0 0.0
  %4145 = vmatprep.subr.mxu0 0.0
  %4146 = vmatpush1.msra.mxu0 0.0
  %4147 = vmatprep.subr.mxu0 0.0
  %4148 = vmatpush1.msra.mxu0 0.0
  %4149 = vmatprep.subr.mxu0 0.0
  %4150 = vmatpush1.msra.mxu0 0.0
  %4151 = vmatprep.subr.mxu0 0.0
  %4152 = vmatpush1.msra.mxu0 0.0
  %4153 = vmatprep.subr.mxu0 0.0
  %4154 = vmatpush1.msra.mxu0 0.0
  %4155 = vmatprep.subr.mxu0 0.0
  %4156 = vmatpush1.msra.mxu0 0.0
  %4157 = vmatprep.subr.mxu0 0.0
  %4158 = vmatpush1.msra.mxu0 0.0
  %4159 = vmatprep.subr.mxu0 0.0
  %4160 = vmatpush1.msra.mxu0 0.0
  %4161 = vmatprep.subr.mxu0 0.0
  %4162 = vmatpush1.msra.mxu0 0.0
  %4163 = vmatprep.subr.mxu0 0.0
  %4164 = vmatpush1.msra.mxu0 0.0
  %4165 = vmatprep.subr.mxu0 0.0
  %4166 = vmatpush1.msra.mxu0 0.0
  %4167 = vmatprep.subr.mxu0 0.0
  %4168 = vmatpush1.msra.mxu0 0.0
  %4169 = vmatprep.subr.mxu0 0.0
  %4170 = vmatpush1.msra.mxu0 0.0
  %4171 = vmatprep.subr.mxu0 0.0
  %4172 = vmatpush1.msra.mxu0 0.0
  %4173 = vmatprep.subr.mxu0 0.0
  %4174 = vmatpush1.msra.mxu0 0.0
  %4175 = vmatprep.subr.mxu0 0.0
  %4176 = vmatpush1.msra.mxu0 0.0
  %4177 = vmatprep.subr.mxu0 0.0
  %4178 = vmatpush1.msra.mxu0 0.0
  %4179 = vmatprep.mubr.f32.mxu0 0.0
  %4180 = vmatmul.mubr.f32.gmra.mrb[0].mxu0 %v4110
  %v4181 = vpop.f32.mrb[0].mxu0
  %v4182 = vadd.f32 %v45, %v4181
  %v4183 = vpop.f32.mrb[0].mxu0
  %4184 = vmatprep.mubr.f32.mxu0 0.0
  %4185 = vmatmul.mubr.f32.gmra.mrb[0].mxu0 %v4113
  %v4186 = vpop.f32.mrb[0].mxu0
  %v4187 = vadd.f32 %v45, %v4186
  %v4188 = vpop.f32.mrb[0].mxu0
  %4189 = vdwg.mxu0
  %v4190 = vrcp.pop 6.0
  %s4191 = vtos %v4190
  %s4192 = smul.f32 %s3518, %s4191
  %v4193 = vmul.f32 %v3845, 2.0
  %v4194 = vmul.f32 %v3850, 2.0
  %v4195 = vadd.f32 %v3676, %v4193
  %v4196 = vadd.f32 %v3681, %v4194
  %v4197 = vmul.f32 %v4013, 2.0
  %v4198 = vmul.f32 %v4018, 2.0
  %v4199 = vadd.f32 %v4195, %v4197
  %v4200 = vadd.f32 %v4196, %v4198
  %v4201 = vadd.f32 %v4199, %v4182
  %v4202 = vadd.f32 %v4200, %v4187
  %v4203 = vstv %s4192
  %v4204 = vmul.f32 %v4203, %v4201
  %v4205 = vmul.f32 %v4203, %v4202
  %v4206 = vadd.f32 %v3513, %v4204
  %v4207 = vadd.f32 %v3514, %v4205
  %s4208 = scalar_lea.vmem %s6, 96
  %4209 = vst.msk [vmem:[%s4208] sm:$0xff] %vm49, %v4206
  %4210 = vst.msk [vmem:[%s4208 + $0x8] sm:$0xff] %vm49, %v4207
  %s4211 = sld [smem:[#allocation3 + $0x6]]
  %s4212 = smul.f32 %s4211, 0.5
  %v4214 = vsel %vm49, %v4206, 0
  %v4217 = vsel %vm49, %v4207, 0
  %4219 = vmatprep.subr.mxu0 0.0
  %4220 = vmatpush1.msra.mxu0 %v27
  %4221 = vmatprep.subr.mxu0 0.0
  %4222 = vmatpush1.msra.mxu0 %v28
  %4223 = vmatprep.subr.mxu0 0.0
  %4224 = vmatpush1.msra.mxu0 0.0
  %4225 = vmatprep.subr.mxu0 0.0
  %4226 = vmatpush1.msra.mxu0 0.0
  %4227 = vmatprep.subr.mxu0 0.0
  %4228 = vmatpush1.msra.mxu0 0.0
  %4229 = vmatprep.subr.mxu0 0.0
  %4230 = vmatpush1.msra.mxu0 0.0
  %4231 = vmatprep.subr.mxu0 0.0
  %4232 = vmatpush1.msra.mxu0 0.0
  %4233 = vmatprep.subr.mxu0 0.0
  %4234 = vmatpush1.msra.mxu0 0.0
  %4235 = vmatprep.subr.mxu0 0.0
  %4236 = vmatpush1.msra.mxu0 0.0
  %4237 = vmatprep.subr.mxu0 0.0
  %4238 = vmatpush1.msra.mxu0 0.0
  %4239 = vmatprep.subr.mxu0 0.0
  %4240 = vmatpush1.msra.mxu0 0.0
  %4241 = vmatprep.subr.mxu0 0.0
  %4242 = vmatpush1.msra.mxu0 0.0
  %4243 = vmatprep.subr.mxu0 0.0
  %4244 = vmatpush1.msra.mxu0 0.0
  %4245 = vmatprep.subr.mxu0 0.0
  %4246 = vmatpush1.msra.mxu0 0.0
  %4247 = vmatprep.subr.mxu0 0.0
  %4248 = vmatpush1.msra.mxu0 0.0
  %4249 = vmatprep.subr.mxu0 0.0
  %4250 = vmatpush1.msra.mxu0 0.0
  %4251 = vmatprep.subr.mxu0 0.0
  %4252 = vmatpush1.msra.mxu0 0.0
  %4253 = vmatprep.subr.mxu0 0.0
  %4254 = vmatpush1.msra.mxu0 0.0
  %4255 = vmatprep.subr.mxu0 0.0
  %4256 = vmatpush1.msra.mxu0 0.0
  %4257 = vmatprep.subr.mxu0 0.0
  %4258 = vmatpush1.msra.mxu0 0.0
  %4259 = vmatprep.subr.mxu0 0.0
  %4260 = vmatpush1.msra.mxu0 0.0
  %4261 = vmatprep.subr.mxu0 0.0
  %4262 = vmatpush1.msra.mxu0 0.0
  %4263 = vmatprep.subr.mxu0 0.0
  %4264 = vmatpush1.msra.mxu0 0.0
  %4265 = vmatprep.subr.mxu0 0.0
  %4266 = vmatpush1.msra.mxu0 0.0
  %4267 = vmatprep.subr.mxu0 0.0
  %4268 = vmatpush1.msra.mxu0 0.0
  %4269 = vmatprep.subr.mxu0 0.0
  %4270 = vmatpush1.msra.mxu0 0.0
  %4271 = vmatprep.subr.mxu0 0.0
  %4272 = vmatpush1.msra.mxu0 0.0
  %4273 = vmatprep.subr.mxu0 0.0
  %4274 = vmatpush1.msra.mxu0 0.0
  %4275 = vmatprep.subr.mxu0 0.0
  %4276 = vmatpush1.msra.mxu0 0.0
  %4277 = vmatprep.subr.mxu0 0.0
  %4278 = vmatpush1.msra.mxu0 0.0
  %4279 = vmatprep.subr.mxu0 0.0
  %4280 = vmatpush1.msra.mxu0 0.0
  %4281 = vmatprep.subr.mxu0 0.0
  %4282 = vmatpush1.msra.mxu0 0.0
  %4283 = vmatprep.mubr.f32.mxu0 0.0
  %4284 = vmatmul.mubr.f32.gmra.mrb[0].mxu0 %v4214
  %v4285 = vpop.f32.mrb[0].mxu0
  %v4286 = vadd.f32 %v38, %v4285
  %v4287 = vpop.f32.mrb[0].mxu0
  %4288 = vmatprep.mubr.f32.mxu0 0.0
  %4289 = vmatmul.mubr.f32.gmra.mrb[0].mxu0 %v4217
  %v4290 = vpop.f32.mrb[0].mxu0
  %v4291 = vadd.f32 %v38, %v4290
  %v4292 = vpop.f32.mrb[0].mxu0
  %4293 = vdwg.mxu0
  %v4294 = vtanh.pop %v4286
  %v4295 = vtanh.pop %v4291
  %v4297 = vsel %vm137, %v4294, 0
  %v4300 = vsel %vm137, %v4295, 0
  %4302 = vmatprep.subr.mxu0 0.0
  %4303 = vmatpush1.msra.mxu0 %v29
  %4304 = vmatprep.subr.mxu0 0.0
  %4305 = vmatpush1.msra.mxu0 %v30
  %4306 = vmatprep.subr.mxu0 0.0
  %4307 = vmatpush1.msra.mxu0 %v31
  %4308 = vmatprep.subr.mxu0 0.0
  %4309 = vmatpush1.msra.mxu0 %v32
  %4310 = vmatprep.subr.mxu0 0.0
  %4311 = vmatpush1.msra.mxu0 0.0
  %4312 = vmatprep.subr.mxu0 0.0
  %4313 = vmatpush1.msra.mxu0 0.0
  %4314 = vmatprep.subr.mxu0 0.0
  %4315 = vmatpush1.msra.mxu0 0.0
  %4316 = vmatprep.subr.mxu0 0.0
  %4317 = vmatpush1.msra.mxu0 0.0
  %4318 = vmatprep.subr.mxu0 0.0
  %4319 = vmatpush1.msra.mxu0 0.0
  %4320 = vmatprep.subr.mxu0 0.0
  %4321 = vmatpush1.msra.mxu0 0.0
  %4322 = vmatprep.subr.mxu0 0.0
  %4323 = vmatpush1.msra.mxu0 0.0
  %4324 = vmatprep.subr.mxu0 0.0
  %4325 = vmatpush1.msra.mxu0 0.0
  %4326 = vmatprep.subr.mxu0 0.0
  %4327 = vmatpush1.msra.mxu0 0.0
  %4328 = vmatprep.subr.mxu0 0.0
  %4329 = vmatpush1.msra.mxu0 0.0
  %4330 = vmatprep.subr.mxu0 0.0
  %4331 = vmatpush1.msra.mxu0 0.0
  %4332 = vmatprep.subr.mxu0 0.0
  %4333 = vmatpush1.msra.mxu0 0.0
  %4334 = vmatprep.subr.mxu0 0.0
  %4335 = vmatpush1.msra.mxu0 0.0
  %4336 = vmatprep.subr.mxu0 0.0
  %4337 = vmatpush1.msra.mxu0 0.0
  %4338 = vmatprep.subr.mxu0 0.0
  %4339 = vmatpush1.msra.mxu0 0.0
  %4340 = vmatprep.subr.mxu0 0.0
  %4341 = vmatpush1.msra.mxu0 0.0
  %4342 = vmatprep.subr.mxu0 0.0
  %4343 = vmatpush1.msra.mxu0 0.0
  %4344 = vmatprep.subr.mxu0 0.0
  %4345 = vmatpush1.msra.mxu0 0.0
  %4346 = vmatprep.subr.mxu0 0.0
  %4347 = vmatpush1.msra.mxu0 0.0
  %4348 = vmatprep.subr.mxu0 0.0
  %4349 = vmatpush1.msra.mxu0 0.0
  %4350 = vmatprep.subr.mxu0 0.0
  %4351 = vmatpush1.msra.mxu0 0.0
  %4352 = vmatprep.subr.mxu0 0.0
  %4353 = vmatpush1.msra.mxu0 0.0
  %4354 = vmatprep.subr.mxu0 0.0
  %4355 = vmatpush1.msra.mxu0 0.0
  %4356 = vmatprep.subr.mxu0 0.0
  %4357 = vmatpush1.msra.mxu0 0.0
  %4358 = vmatprep.subr.mxu0 0.0
  %4359 = vmatpush1.msra.mxu0 0.0
  %4360 = vmatprep.subr.mxu0 0.0
  %4361 = vmatpush1.msra.mxu0 0.0
  %4362 = vmatprep.subr.mxu0 0.0
  %4363 = vmatpush1.msra.mxu0 0.0
  %4364 = vmatprep.subr.mxu0 0.0
  %4365 = vmatpush1.msra.mxu0 0.0
  %4366 = vmatprep.mubr.f32.mxu0 0.0
  %4367 = vmatmul.mubr.f32.gmra.mrb[0].mxu0 %v4297
  %v4368 = vpop.f32.mrb[0].mxu0
  %v4369 = vadd.f32 %v45, %v4368
  %v4370 = vpop.f32.mrb[0].mxu0
  %4371 = vmatprep.mubr.f32.mxu0 0.0
  %4372 = vmatmul.mubr.f32.gmra.mrb[0].mxu0 %v4300
  %v4373 = vpop.f32.mrb[0].mxu0
  %v4374 = vadd.f32 %v45, %v4373
  %v4375 = vpop.f32.mrb[0].mxu0
  %4376 = vdwg.mxu0
  %v4377 = vstv %s4212
  %v4378 = vmul.f32 %v4377, %v4369
  %v4379 = vmul.f32 %v4377, %v4374
  %v4380 = vadd.f32 %v4206, %v4378
  %v4381 = vadd.f32 %v4207, %v4379
  %v4383 = vsel %vm49, %v4380, 0
  %v4386 = vsel %vm49, %v4381, 0
  %4388 = vmatprep.subr.mxu0 0.0
  %4389 = vmatpush1.msra.mxu0 %v27
  %4390 = vmatprep.subr.mxu0 0.0
  %4391 = vmatpush1.msra.mxu0 %v28
  %4392 = vmatprep.subr.mxu0 0.0
  %4393 = vmatpush1.msra.mxu0 0.0
  %4394 = vmatprep.subr.mxu0 0.0
  %4395 = vmatpush1.msra.mxu0 0.0
  %4396 = vmatprep.subr.mxu0 0.0
  %4397 = vmatpush1.msra.mxu0 0.0
  %4398 = vmatprep.subr.mxu0 0.0
  %4399 = vmatpush1.msra.mxu0 0.0
  %4400 = vmatprep.subr.mxu0 0.0
  %4401 = vmatpush1.msra.mxu0 0.0
  %4402 = vmatprep.subr.mxu0 0.0
  %4403 = vmatpush1.msra.mxu0 0.0
  %4404 = vmatprep.subr.mxu0 0.0
  %4405 = vmatpush1.msra.mxu0 0.0
  %4406 = vmatprep.subr.mxu0 0.0
  %4407 = vmatpush1.msra.mxu0 0.0
  %4408 = vmatprep.subr.mxu0 0.0
  %4409 = vmatpush1.msra.mxu0 0.0
  %4410 = vmatprep.subr.mxu0 0.0
  %4411 = vmatpush1.msra.mxu0 0.0
  %4412 = vmatprep.subr.mxu0 0.0
  %4413 = vmatpush1.msra.mxu0 0.0
  %4414 = vmatprep.subr.mxu0 0.0
  %4415 = vmatpush1.msra.mxu0 0.0
  %4416 = vmatprep.subr.mxu0 0.0
  %4417 = vmatpush1.msra.mxu0 0.0
  %4418 = vmatprep.subr.mxu0 0.0
  %4419 = vmatpush1.msra.mxu0 0.0
  %4420 = vmatprep.subr.mxu0 0.0
  %4421 = vmatpush1.msra.mxu0 0.0
  %4422 = vmatprep.subr.mxu0 0.0
  %4423 = vmatpush1.msra.mxu0 0.0
  %4424 = vmatprep.subr.mxu0 0.0
  %4425 = vmatpush1.msra.mxu0 0.0
  %4426 = vmatprep.subr.mxu0 0.0
  %4427 = vmatpush1.msra.mxu0 0.0
  %4428 = vmatprep.subr.mxu0 0.0
  %4429 = vmatpush1.msra.mxu0 0.0
  %4430 = vmatprep.subr.mxu0 0.0
  %4431 = vmatpush1.msra.mxu0 0.0
  %4432 = vmatprep.subr.mxu0 0.0
  %4433 = vmatpush1.msra.mxu0 0.0
  %4434 = vmatprep.subr.mxu0 0.0
  %4435 = vmatpush1.msra.mxu0 0.0
  %4436 = vmatprep.subr.mxu0 0.0
  %4437 = vmatpush1.msra.mxu0 0.0
  %4438 = vmatprep.subr.mxu0 0.0
  %4439 = vmatpush1.msra.mxu0 0.0
  %4440 = vmatprep.subr.mxu0 0.0
  %4441 = vmatpush1.msra.mxu0 0.0
  %4442 = vmatprep.subr.mxu0 0.0
  %4443 = vmatpush1.msra.mxu0 0.0
  %4444 = vmatprep.subr.mxu0 0.0
  %4445 = vmatpush1.msra.mxu0 0.0
  %4446 = vmatprep.subr.mxu0 0.0
  %4447 = vmatpush1.msra.mxu0 0.0
  %4448 = vmatprep.subr.mxu0 0.0
  %4449 = vmatpush1.msra.mxu0 0.0
  %4450 = vmatprep.subr.mxu0 0.0
  %4451 = vmatpush1.msra.mxu0 0.0
  %4452 = vmatprep.mubr.f32.mxu0 0.0
  %4453 = vmatmul.mubr.f32.gmra.mrb[0].mxu0 %v4383
  %v4454 = vpop.f32.mrb[0].mxu0
  %v4455 = vadd.f32 %v38, %v4454
  %v4456 = vpop.f32.mrb[0].mxu0
  %4457 = vmatprep.mubr.f32.mxu0 0.0
  %4458 = vmatmul.mubr.f32.gmra.mrb[0].mxu0 %v4386
  %v4459 = vpop.f32.mrb[0].mxu0
  %v4460 = vadd.f32 %v38, %v4459
  %v4461 = vpop.f32.mrb[0].mxu0
  %4462 = vdwg.mxu0
  %v4463 = vtanh.pop %v4455
  %v4464 = vtanh.pop %v4460
  %v4466 = vsel %vm137, %v4463, 0
  %v4469 = vsel %vm137, %v4464, 0
  %4471 = vmatprep.subr.mxu0 0.0
  %4472 = vmatpush1.msra.mxu0 %v29
  %4473 = vmatprep.subr.mxu0 0.0
  %4474 = vmatpush1.msra.mxu0 %v30
  %4475 = vmatprep.subr.mxu0 0.0
  %4476 = vmatpush1.msra.mxu0 %v31
  %4477 = vmatprep.subr.mxu0 0.0
  %4478 = vmatpush1.msra.mxu0 %v32
  %4479 = vmatprep.subr.mxu0 0.0
  %4480 = vmatpush1.msra.mxu0 0.0
  %4481 = vmatprep.subr.mxu0 0.0
  %4482 = vmatpush1.msra.mxu0 0.0
  %4483 = vmatprep.subr.mxu0 0.0
  %4484 = vmatpush1.msra.mxu0 0.0
  %4485 = vmatprep.subr.mxu0 0.0
  %4486 = vmatpush1.msra.mxu0 0.0
  %4487 = vmatprep.subr.mxu0 0.0
  %4488 = vmatpush1.msra.mxu0 0.0
  %4489 = vmatprep.subr.mxu0 0.0
  %4490 = vmatpush1.msra.mxu0 0.0
  %4491 = vmatprep.subr.mxu0 0.0
  %4492 = vmatpush1.msra.mxu0 0.0
  %4493 = vmatprep.subr.mxu0 0.0
  %4494 = vmatpush1.msra.mxu0 0.0
  %4495 = vmatprep.subr.mxu0 0.0
  %4496 = vmatpush1.msra.mxu0 0.0
  %4497 = vmatprep.subr.mxu0 0.0
  %4498 = vmatpush1.msra.mxu0 0.0
  %4499 = vmatprep.subr.mxu0 0.0
  %4500 = vmatpush1.msra.mxu0 0.0
  %4501 = vmatprep.subr.mxu0 0.0
  %4502 = vmatpush1.msra.mxu0 0.0
  %4503 = vmatprep.subr.mxu0 0.0
  %4504 = vmatpush1.msra.mxu0 0.0
  %4505 = vmatprep.subr.mxu0 0.0
  %4506 = vmatpush1.msra.mxu0 0.0
  %4507 = vmatprep.subr.mxu0 0.0
  %4508 = vmatpush1.msra.mxu0 0.0
  %4509 = vmatprep.subr.mxu0 0.0
  %4510 = vmatpush1.msra.mxu0 0.0
  %4511 = vmatprep.subr.mxu0 0.0
  %4512 = vmatpush1.msra.mxu0 0.0
  %4513 = vmatprep.subr.mxu0 0.0
  %4514 = vmatpush1.msra.mxu0 0.0
  %4515 = vmatprep.subr.mxu0 0.0
  %4516 = vmatpush1.msra.mxu0 0.0
  %4517 = vmatprep.subr.mxu0 0.0
  %4518 = vmatpush1.msra.mxu0 0.0
  %4519 = vmatprep.subr.mxu0 0.0
  %4520 = vmatpush1.msra.mxu0 0.0
  %4521 = vmatprep.subr.mxu0 0.0
  %4522 = vmatpush1.msra.mxu0 0.0
  %4523 = vmatprep.subr.mxu0 0.0
  %4524 = vmatpush1.msra.mxu0 0.0
  %4525 = vmatprep.subr.mxu0 0.0
  %4526 = vmatpush1.msra.mxu0 0.0
  %4527 = vmatprep.subr.mxu0 0.0
  %4528 = vmatpush1.msra.mxu0 0.0
  %4529 = vmatprep.subr.mxu0 0.0
  %4530 = vmatpush1.msra.mxu0 0.0
  %4531 = vmatprep.subr.mxu0 0.0
  %4532 = vmatpush1.msra.mxu0 0.0
  %4533 = vmatprep.subr.mxu0 0.0
  %4534 = vmatpush1.msra.mxu0 0.0
  %4535 = vmatprep.mubr.f32.mxu0 0.0
  %4536 = vmatmul.mubr.f32.gmra.mrb[0].mxu0 %v4466
  %v4537 = vpop.f32.mrb[0].mxu0
  %v4538 = vadd.f32 %v45, %v4537
  %v4539 = vpop.f32.mrb[0].mxu0
  %4540 = vmatprep.mubr.f32.mxu0 0.0
  %4541 = vmatmul.mubr.f32.gmra.mrb[0].mxu0 %v4469
  %v4542 = vpop.f32.mrb[0].mxu0
  %v4543 = vadd.f32 %v45, %v4542
  %v4544 = vpop.f32.mrb[0].mxu0
  %4545 = vdwg.mxu0
  %v4546 = vmul.f32 %v4377, %v4538
  %v4547 = vmul.f32 %v4377, %v4543
  %v4548 = vadd.f32 %v4206, %v4546
  %v4549 = vadd.f32 %v4207, %v4547
  %v4551 = vsel %vm49, %v4548, 0
  %v4554 = vsel %vm49, %v4549, 0
  %4556 = vmatprep.subr.mxu0 0.0
  %4557 = vmatpush1.msra.mxu0 %v27
  %4558 = vmatprep.subr.mxu0 0.0
  %4559 = vmatpush1.msra.mxu0 %v28
  %4560 = vmatprep.subr.mxu0 0.0
  %4561 = vmatpush1.msra.mxu0 0.0
  %4562 = vmatprep.subr.mxu0 0.0
  %4563 = vmatpush1.msra.mxu0 0.0
  %4564 = vmatprep.subr.mxu0 0.0
  %4565 = vmatpush1.msra.mxu0 0.0
  %4566 = vmatprep.subr.mxu0 0.0
  %4567 = vmatpush1.msra.mxu0 0.0
  %4568 = vmatprep.subr.mxu0 0.0
  %4569 = vmatpush1.msra.mxu0 0.0
  %4570 = vmatprep.subr.mxu0 0.0
  %4571 = vmatpush1.msra.mxu0 0.0
  %4572 = vmatprep.subr.mxu0 0.0
  %4573 = vmatpush1.msra.mxu0 0.0
  %4574 = vmatprep.subr.mxu0 0.0
  %4575 = vmatpush1.msra.mxu0 0.0
  %4576 = vmatprep.subr.mxu0 0.0
  %4577 = vmatpush1.msra.mxu0 0.0
  %4578 = vmatprep.subr.mxu0 0.0
  %4579 = vmatpush1.msra.mxu0 0.0
  %4580 = vmatprep.subr.mxu0 0.0
  %4581 = vmatpush1.msra.mxu0 0.0
  %4582 = vmatprep.subr.mxu0 0.0
  %4583 = vmatpush1.msra.mxu0 0.0
  %4584 = vmatprep.subr.mxu0 0.0
  %4585 = vmatpush1.msra.mxu0 0.0
  %4586 = vmatprep.subr.mxu0 0.0
  %4587 = vmatpush1.msra.mxu0 0.0
  %4588 = vmatprep.subr.mxu0 0.0
  %4589 = vmatpush1.msra.mxu0 0.0
  %4590 = vmatprep.subr.mxu0 0.0
  %4591 = vmatpush1.msra.mxu0 0.0
  %4592 = vmatprep.subr.mxu0 0.0
  %4593 = vmatpush1.msra.mxu0 0.0
  %4594 = vmatprep.subr.mxu0 0.0
  %4595 = vmatpush1.msra.mxu0 0.0
  %4596 = vmatprep.subr.mxu0 0.0
  %4597 = vmatpush1.msra.mxu0 0.0
  %4598 = vmatprep.subr.mxu0 0.0
  %4599 = vmatpush1.msra.mxu0 0.0
  %4600 = vmatprep.subr.mxu0 0.0
  %4601 = vmatpush1.msra.mxu0 0.0
  %4602 = vmatprep.subr.mxu0 0.0
  %4603 = vmatpush1.msra.mxu0 0.0
  %4604 = vmatprep.subr.mxu0 0.0
  %4605 = vmatpush1.msra.mxu0 0.0
  %4606 = vmatprep.subr.mxu0 0.0
  %4607 = vmatpush1.msra.mxu0 0.0
  %4608 = vmatprep.subr.mxu0 0.0
  %4609 = vmatpush1.msra.mxu0 0.0
  %4610 = vmatprep.subr.mxu0 0.0
  %4611 = vmatpush1.msra.mxu0 0.0
  %4612 = vmatprep.subr.mxu0 0.0
  %4613 = vmatpush1.msra.mxu0 0.0
  %4614 = vmatprep.subr.mxu0 0.0
  %4615 = vmatpush1.msra.mxu0 0.0
  %4616 = vmatprep.subr.mxu0 0.0
  %4617 = vmatpush1.msra.mxu0 0.0
  %4618 = vmatprep.subr.mxu0 0.0
  %4619 = vmatpush1.msra.mxu0 0.0
  %4620 = vmatprep.mubr.f32.mxu0 0.0
  %4621 = vmatmul.mubr.f32.gmra.mrb[0].mxu0 %v4551
  %v4622 = vpop.f32.mrb[0].mxu0
  %v4623 = vadd.f32 %v38, %v4622
  %v4624 = vpop.f32.mrb[0].mxu0
  %4625 = vmatprep.mubr.f32.mxu0 0.0
  %4626 = vmatmul.mubr.f32.gmra.mrb[0].mxu0 %v4554
  %v4627 = vpop.f32.mrb[0].mxu0
  %v4628 = vadd.f32 %v38, %v4627
  %v4629 = vpop.f32.mrb[0].mxu0
  %4630 = vdwg.mxu0
  %v4631 = vtanh.pop %v4623
  %v4632 = vtanh.pop %v4628
  %v4634 = vsel %vm137, %v4631, 0
  %v4637 = vsel %vm137, %v4632, 0
  %4639 = vmatprep.subr.mxu0 0.0
  %4640 = vmatpush1.msra.mxu0 %v29
  %4641 = vmatprep.subr.mxu0 0.0
  %4642 = vmatpush1.msra.mxu0 %v30
  %4643 = vmatprep.subr.mxu0 0.0
  %4644 = vmatpush1.msra.mxu0 %v31
  %4645 = vmatprep.subr.mxu0 0.0
  %4646 = vmatpush1.msra.mxu0 %v32
  %4647 = vmatprep.subr.mxu0 0.0
  %4648 = vmatpush1.msra.mxu0 0.0
  %4649 = vmatprep.subr.mxu0 0.0
  %4650 = vmatpush1.msra.mxu0 0.0
  %4651 = vmatprep.subr.mxu0 0.0
  %4652 = vmatpush1.msra.mxu0 0.0
  %4653 = vmatprep.subr.mxu0 0.0
  %4654 = vmatpush1.msra.mxu0 0.0
  %4655 = vmatprep.subr.mxu0 0.0
  %4656 = vmatpush1.msra.mxu0 0.0
  %4657 = vmatprep.subr.mxu0 0.0
  %4658 = vmatpush1.msra.mxu0 0.0
  %4659 = vmatprep.subr.mxu0 0.0
  %4660 = vmatpush1.msra.mxu0 0.0
  %4661 = vmatprep.subr.mxu0 0.0
  %4662 = vmatpush1.msra.mxu0 0.0
  %4663 = vmatprep.subr.mxu0 0.0
  %4664 = vmatpush1.msra.mxu0 0.0
  %4665 = vmatprep.subr.mxu0 0.0
  %4666 = vmatpush1.msra.mxu0 0.0
  %4667 = vmatprep.subr.mxu0 0.0
  %4668 = vmatpush1.msra.mxu0 0.0
  %4669 = vmatprep.subr.mxu0 0.0
  %4670 = vmatpush1.msra.mxu0 0.0
  %4671 = vmatprep.subr.mxu0 0.0
  %4672 = vmatpush1.msra.mxu0 0.0
  %4673 = vmatprep.subr.mxu0 0.0
  %4674 = vmatpush1.msra.mxu0 0.0
  %4675 = vmatprep.subr.mxu0 0.0
  %4676 = vmatpush1.msra.mxu0 0.0
  %4677 = vmatprep.subr.mxu0 0.0
  %4678 = vmatpush1.msra.mxu0 0.0
  %4679 = vmatprep.subr.mxu0 0.0
  %4680 = vmatpush1.msra.mxu0 0.0
  %4681 = vmatprep.subr.mxu0 0.0
  %4682 = vmatpush1.msra.mxu0 0.0
  %4683 = vmatprep.subr.mxu0 0.0
  %4684 = vmatpush1.msra.mxu0 0.0
  %4685 = vmatprep.subr.mxu0 0.0
  %4686 = vmatpush1.msra.mxu0 0.0
  %4687 = vmatprep.subr.mxu0 0.0
  %4688 = vmatpush1.msra.mxu0 0.0
  %4689 = vmatprep.subr.mxu0 0.0
  %4690 = vmatpush1.msra.mxu0 0.0
  %4691 = vmatprep.subr.mxu0 0.0
  %4692 = vmatpush1.msra.mxu0 0.0
  %4693 = vmatprep.subr.mxu0 0.0
  %4694 = vmatpush1.msra.mxu0 0.0
  %4695 = vmatprep.subr.mxu0 0.0
  %4696 = vmatpush1.msra.mxu0 0.0
  %4697 = vmatprep.subr.mxu0 0.0
  %4698 = vmatpush1.msra.mxu0 0.0
  %4699 = vmatprep.subr.mxu0 0.0
  %4700 = vmatpush1.msra.mxu0 0.0
  %4701 = vmatprep.subr.mxu0 0.0
  %4702 = vmatpush1.msra.mxu0 0.0
  %4703 = vmatprep.mubr.f32.mxu0 0.0
  %4704 = vmatmul.mubr.f32.gmra.mrb[0].mxu0 %v4634
  %v4705 = vpop.f32.mrb[0].mxu0
  %v4706 = vadd.f32 %v45, %v4705
  %v4707 = vpop.f32.mrb[0].mxu0
  %4708 = vmatprep.mubr.f32.mxu0 0.0
  %4709 = vmatmul.mubr.f32.gmra.mrb[0].mxu0 %v4637
  %v4710 = vpop.f32.mrb[0].mxu0
  %v4711 = vadd.f32 %v45, %v4710
  %v4712 = vpop.f32.mrb[0].mxu0
  %4713 = vdwg.mxu0
  %v4714 = vstv %s4211
  %v4715 = vmul.f32 %v4714, %v4706
  %v4716 = vmul.f32 %v4714, %v4711
  %v4717 = vadd.f32 %v4206, %v4715
  %v4718 = vadd.f32 %v4207, %v4716
  %v4720 = vsel %vm49, %v4717, 0
  %v4723 = vsel %vm49, %v4718, 0
  %4725 = vmatprep.subr.mxu0 0.0
  %4726 = vmatpush1.msra.mxu0 %v27
  %4727 = vmatprep.subr.mxu0 0.0
  %4728 = vmatpush1.msra.mxu0 %v28
  %4729 = vmatprep.subr.mxu0 0.0
  %4730 = vmatpush1.msra.mxu0 0.0
  %4731 = vmatprep.subr.mxu0 0.0
  %4732 = vmatpush1.msra.mxu0 0.0
  %4733 = vmatprep.subr.mxu0 0.0
  %4734 = vmatpush1.msra.mxu0 0.0
  %4735 = vmatprep.subr.mxu0 0.0
  %4736 = vmatpush1.msra.mxu0 0.0
  %4737 = vmatprep.subr.mxu0 0.0
  %4738 = vmatpush1.msra.mxu0 0.0
  %4739 = vmatprep.subr.mxu0 0.0
  %4740 = vmatpush1.msra.mxu0 0.0
  %4741 = vmatprep.subr.mxu0 0.0
  %4742 = vmatpush1.msra.mxu0 0.0
  %4743 = vmatprep.subr.mxu0 0.0
  %4744 = vmatpush1.msra.mxu0 0.0
  %4745 = vmatprep.subr.mxu0 0.0
  %4746 = vmatpush1.msra.mxu0 0.0
  %4747 = vmatprep.subr.mxu0 0.0
  %4748 = vmatpush1.msra.mxu0 0.0
  %4749 = vmatprep.subr.mxu0 0.0
  %4750 = vmatpush1.msra.mxu0 0.0
  %4751 = vmatprep.subr.mxu0 0.0
  %4752 = vmatpush1.msra.mxu0 0.0
  %4753 = vmatprep.subr.mxu0 0.0
  %4754 = vmatpush1.msra.mxu0 0.0
  %4755 = vmatprep.subr.mxu0 0.0
  %4756 = vmatpush1.msra.mxu0 0.0
  %4757 = vmatprep.subr.mxu0 0.0
  %4758 = vmatpush1.msra.mxu0 0.0
  %4759 = vmatprep.subr.mxu0 0.0
  %4760 = vmatpush1.msra.mxu0 0.0
  %4761 = vmatprep.subr.mxu0 0.0
  %4762 = vmatpush1.msra.mxu0 0.0
  %4763 = vmatprep.subr.mxu0 0.0
  %4764 = vmatpush1.msra.mxu0 0.0
  %4765 = vmatprep.subr.mxu0 0.0
  %4766 = vmatpush1.msra.mxu0 0.0
  %4767 = vmatprep.subr.mxu0 0.0
  %4768 = vmatpush1.msra.mxu0 0.0
  %4769 = vmatprep.subr.mxu0 0.0
  %4770 = vmatpush1.msra.mxu0 0.0
  %4771 = vmatprep.subr.mxu0 0.0
  %4772 = vmatpush1.msra.mxu0 0.0
  %4773 = vmatprep.subr.mxu0 0.0
  %4774 = vmatpush1.msra.mxu0 0.0
  %4775 = vmatprep.subr.mxu0 0.0
  %4776 = vmatpush1.msra.mxu0 0.0
  %4777 = vmatprep.subr.mxu0 0.0
  %4778 = vmatpush1.msra.mxu0 0.0
  %4779 = vmatprep.subr.mxu0 0.0
  %4780 = vmatpush1.msra.mxu0 0.0
  %4781 = vmatprep.subr.mxu0 0.0
  %4782 = vmatpush1.msra.mxu0 0.0
  %4783 = vmatprep.subr.mxu0 0.0
  %4784 = vmatpush1.msra.mxu0 0.0
  %4785 = vmatprep.subr.mxu0 0.0
  %4786 = vmatpush1.msra.mxu0 0.0
  %4787 = vmatprep.subr.mxu0 0.0
  %4788 = vmatpush1.msra.mxu0 0.0
  %4789 = vmatprep.mubr.f32.mxu0 0.0
  %4790 = vmatmul.mubr.f32.gmra.mrb[0].mxu0 %v4720
  %v4791 = vpop.f32.mrb[0].mxu0
  %v4792 = vadd.f32 %v38, %v4791
  %v4793 = vpop.f32.mrb[0].mxu0
  %4794 = vmatprep.mubr.f32.mxu0 0.0
  %4795 = vmatmul.mubr.f32.gmra.mrb[0].mxu0 %v4723
  %v4796 = vpop.f32.mrb[0].mxu0
  %v4797 = vadd.f32 %v38, %v4796
  %v4798 = vpop.f32.mrb[0].mxu0
  %4799 = vdwg.mxu0
  %v4800 = vtanh.pop %v4792
  %v4801 = vtanh.pop %v4797
  %v4803 = vsel %vm137, %v4800, 0
  %v4806 = vsel %vm137, %v4801, 0
  %4808 = vmatprep.subr.mxu0 0.0
  %4809 = vmatpush1.msra.mxu0 %v29
  %4810 = vmatprep.subr.mxu0 0.0
  %4811 = vmatpush1.msra.mxu0 %v30
  %4812 = vmatprep.subr.mxu0 0.0
  %4813 = vmatpush1.msra.mxu0 %v31
  %4814 = vmatprep.subr.mxu0 0.0
  %4815 = vmatpush1.msra.mxu0 %v32
  %4816 = vmatprep.subr.mxu0 0.0
  %4817 = vmatpush1.msra.mxu0 0.0
  %4818 = vmatprep.subr.mxu0 0.0
  %4819 = vmatpush1.msra.mxu0 0.0
  %4820 = vmatprep.subr.mxu0 0.0
  %4821 = vmatpush1.msra.mxu0 0.0
  %4822 = vmatprep.subr.mxu0 0.0
  %4823 = vmatpush1.msra.mxu0 0.0
  %4824 = vmatprep.subr.mxu0 0.0
  %4825 = vmatpush1.msra.mxu0 0.0
  %4826 = vmatprep.subr.mxu0 0.0
  %4827 = vmatpush1.msra.mxu0 0.0
  %4828 = vmatprep.subr.mxu0 0.0
  %4829 = vmatpush1.msra.mxu0 0.0
  %4830 = vmatprep.subr.mxu0 0.0
  %4831 = vmatpush1.msra.mxu0 0.0
  %4832 = vmatprep.subr.mxu0 0.0
  %4833 = vmatpush1.msra.mxu0 0.0
  %4834 = vmatprep.subr.mxu0 0.0
  %4835 = vmatpush1.msra.mxu0 0.0
  %4836 = vmatprep.subr.mxu0 0.0
  %4837 = vmatpush1.msra.mxu0 0.0
  %4838 = vmatprep.subr.mxu0 0.0
  %4839 = vmatpush1.msra.mxu0 0.0
  %4840 = vmatprep.subr.mxu0 0.0
  %4841 = vmatpush1.msra.mxu0 0.0
  %4842 = vmatprep.subr.mxu0 0.0
  %4843 = vmatpush1.msra.mxu0 0.0
  %4844 = vmatprep.subr.mxu0 0.0
  %4845 = vmatpush1.msra.mxu0 0.0
  %4846 = vmatprep.subr.mxu0 0.0
  %4847 = vmatpush1.msra.mxu0 0.0
  %4848 = vmatprep.subr.mxu0 0.0
  %4849 = vmatpush1.msra.mxu0 0.0
  %4850 = vmatprep.subr.mxu0 0.0
  %4851 = vmatpush1.msra.mxu0 0.0
  %4852 = vmatprep.subr.mxu0 0.0
  %4853 = vmatpush1.msra.mxu0 0.0
  %4854 = vmatprep.subr.mxu0 0.0
  %4855 = vmatpush1.msra.mxu0 0.0
  %4856 = vmatprep.subr.mxu0 0.0
  %4857 = vmatpush1.msra.mxu0 0.0
  %4858 = vmatprep.subr.mxu0 0.0
  %4859 = vmatpush1.msra.mxu0 0.0
  %4860 = vmatprep.subr.mxu0 0.0
  %4861 = vmatpush1.msra.mxu0 0.0
  %4862 = vmatprep.subr.mxu0 0.0
  %4863 = vmatpush1.msra.mxu0 0.0
  %4864 = vmatprep.subr.mxu0 0.0
  %4865 = vmatpush1.msra.mxu0 0.0
  %4866 = vmatprep.subr.mxu0 0.0
  %4867 = vmatpush1.msra.mxu0 0.0
  %4868 = vmatprep.subr.mxu0 0.0
  %4869 = vmatpush1.msra.mxu0 0.0
  %4870 = vmatprep.subr.mxu0 0.0
  %4871 = vmatpush1.msra.mxu0 0.0
  %4872 = vmatprep.mubr.f32.mxu0 0.0
  %4873 = vmatmul.mubr.f32.gmra.mrb[0].mxu0 %v4803
  %v4874 = vpop.f32.mrb[0].mxu0
  %v4875 = vadd.f32 %v45, %v4874
  %v4876 = vpop.f32.mrb[0].mxu0
  %4877 = vmatprep.mubr.f32.mxu0 0.0
  %4878 = vmatmul.mubr.f32.gmra.mrb[0].mxu0 %v4806
  %v4879 = vpop.f32.mrb[0].mxu0
  %v4880 = vadd.f32 %v45, %v4879
  %v4881 = vpop.f32.mrb[0].mxu0
  %4882 = vdwg.mxu0
  %v4883 = vrcp.pop 6.0
  %s4884 = vtos %v4883
  %s4885 = smul.f32 %s4211, %s4884
  %v4886 = vmul.f32 %v4538, 2.0
  %v4887 = vmul.f32 %v4543, 2.0
  %v4888 = vadd.f32 %v4369, %v4886
  %v4889 = vadd.f32 %v4374, %v4887
  %v4890 = vmul.f32 %v4706, 2.0
  %v4891 = vmul.f32 %v4711, 2.0
  %v4892 = vadd.f32 %v4888, %v4890
  %v4893 = vadd.f32 %v4889, %v4891
  %v4894 = vadd.f32 %v4892, %v4875
  %v4895 = vadd.f32 %v4893, %v4880
  %v4896 = vstv %s4885
  %v4897 = vmul.f32 %v4896, %v4894
  %v4898 = vmul.f32 %v4896, %v4895
  %v4899 = vadd.f32 %v4206, %v4897
  %v4900 = vadd.f32 %v4207, %v4898
  %s4901 = scalar_lea.vmem %s6, 112
  %4902 = vst.msk [vmem:[%s4901] sm:$0xff] %vm49, %v4899
  %4903 = vst.msk [vmem:[%s4901 + $0x8] sm:$0xff] %vm49, %v4900
  // Predicated region
  $region22: #{diffeq_solver_forward.1} parent=0 // pred_check
    _
  $region23: #{diffeq_solver_forward.1} parent=0 // pred_check_branch
    %4905 = sbr.rel (0) target = $region25
  $region24: #{diffeq_solver_forward.1} parent=0 // pred_region
    _
  $region25: #{diffeq_solver_forward.1} parent=0 // pred_fallthru
    _
  // Predicated region
  $region26: #{diffeq_solver_forward.1} parent=0 // pred_check
    _
  $region27: #{diffeq_solver_forward.1} parent=0 // pred_check_branch
    %4907 = sbr.rel (0) target = $region29
  $region28: #{diffeq_solver_forward.1} parent=0 // pred_region
    _
  $region29: #{diffeq_solver_forward.1} parent=0 // pred_fallthru
    _

</llo_original>
